<compile_context>
chip_gen: v5e
topology: v5e:2x2
jax: 0.10.0
libtpu: 0.0.40
codegen_flags: <defaults>
</compile_context>

<pallas_src>
import functools

import jax
import jax.numpy as jnp
import numpy as np
from jax.experimental import pallas as pl
from jax.experimental.pallas import tpu as pltpu


def _bilinear_matrix(out_size: int, in_size: int) -> np.ndarray:
    """Separable row-interpolation matrix matching
    F.interpolate(mode='bilinear', align_corners=False): out_axis = W @ in_axis."""
    scale = in_size / out_size
    W = np.zeros((out_size, in_size), dtype=np.float32)
    for i in range(out_size):
        src = max((i + 0.5) * scale - 0.5, 0.0)
        i0 = min(int(np.floor(src)), in_size - 1)
        i1 = min(i0 + 1, in_size - 1)
        w1 = src - i0
        W[i, i0] += 1.0 - w1
        W[i, i1] += w1
    return W


def _pick_block_b(B: int, K: int, target_rows: int = 256) -> int:
    """Largest useful batch block: aim for Bblk*K >= target_rows (full MXU tile
    on v6e/v7x) while keeping >= 2 grid steps so both v7x TCs get work."""
    divisors = [d for d in range(1, B + 1) if B % d == 0]
    cands = [d for d in divisors if B // d >= 2] or divisors
    for d in cands:
        if d * K >= target_rows:
            return d
    return cands[-1]


def _pick_tile_n(HW: int, HoWo: int, itemsize: int = 2,
                 budget_bytes: int = 8 << 20) -> int:
    """Column-tile width for kron(Wh,Ww)^T so one slice stays <= budget."""
    if HW * HoWo * itemsize <= budget_bytes or HoWo % 128 != 0:
        return HoWo
    t = max(128, (budget_bytes // (HW * itemsize)) // 128 * 128)
    while HoWo % t:
        t -= 128
    return t


def _head_kernel(txt_ref, tdiff_ref, gamma_ref, x_ref, up_ref, out_ref, score_ref):
    """Blocks per grid step (b, j):
         txt   (1, K, C)        f32   shared text embeddings
         tdiff (Bblk, K, C)     bf16  per-batch context-decoder diff
         gamma (1, C)           f32   shared residual scale
         x     (Bblk, HW, C)    bf16  decoder features (flattened spatial)
         up    (HW, tileN)      bf16  column slice of kron(Wh, Ww)^T
         out   (Bblk, K, tileN) f32   lane-dense output slab
         score_ref: VMEM scratch (Bblk*K, HW) bf16, computed once per batch block."""
    Bblk, K, C = tdiff_ref.shape
    HW = x_ref.shape[1]
    eps2 = jnp.float32(1e-24)  # (1e-12)^2 == F.normalize eps clamp, in squared form

    # Normalizations + score depend only on the batch block -> compute once on the
    # first column tile (inner grid axis) and reuse from VMEM scratch afterwards.
    @pl.when(pl.program_id(1) == 0)
    def _():
        # text residual update + L2 normalize over last dim (rsqrt -> EUP slot).
        t = (txt_ref[0][None].astype(jnp.float32)
             + gamma_ref[0][None, None, :] * tdiff_ref[...].astype(jnp.float32))
        t = t * jax.lax.rsqrt(jnp.maximum(jnp.sum(t * t, -1, keepdims=True), eps2))
        # visual features, L2 normalize over channel dim (== dim=1 of bchw).
        xv = x_ref[...].astype(jnp.float32)
        xv = xv * jax.lax.rsqrt(jnp.maximum(jnp.sum(xv * xv, -1, keepdims=True), eps2))
        # einsum('bchw,bkc->bkhw'): contract the LAST dims of both operands,
        # batched over Bblk — no in-kernel transpose / relayout before the MXU.
        s = jax.lax.dot_general(
            t.astype(jnp.bfloat16), xv.astype(jnp.bfloat16),
            dimension_numbers=(((2,), (2,)), ((0,), (0,))),
            preferred_element_type=jnp.float32)                  # (Bblk, K, HW)
        score_ref[...] = s.reshape(Bblk * K, HW).astype(jnp.bfloat16)

    # Bilinear x4 upsample fused into ONE lane-dense MXU matmul across the whole
    # batch block: (Bblk*K, HW) @ (HW, tileN) with f32 accumulation.
    out = jnp.dot(score_ref[...], up_ref[...], preferred_element_type=jnp.float32)
    out_ref[...] = out.reshape(out_ref.shape)


@functools.partial(jax.jit, static_argnames=("H", "W", "scale"))
def base_head(text_emb, text_diff, gamma, x_dec, *, H, W, scale=4):
    """text_emb: (1,K,C); text_diff: (B,K,C); gamma: (C,); x_dec: (B,H*W,C)."""
    B, K, C = text_diff.shape
    HW = H * W
    Hout, Wout = H * scale, W * scale
    HoWo = Hout * Wout

    # --- tiling choices -----------------------------------------------------
    Bblk = _pick_block_b(B, K, target_rows=256)
    n_b = B // Bblk
    tile_n = _pick_tile_n(HW, HoWo, itemsize=2, budget_bytes=8 << 20)
    n_col = HoWo // tile_n

    # Precompute kron(Wh, Ww)^T (HW, Ho*Wo) once; bf16 halves VMEM/DMA bytes.
    # TODO(synk): at realistic DenseCLIP spatial sizes (H=W=128) the dense Kron
    # is ~98% zeros — switch to the separable Wh/Ww two-matmul path there.
    wh = _bilinear_matrix(Hout, H)
    ww = _bilinear_matrix(Wout, W)
    up_t = jnp.asarray(np.kron(wh, ww).T, dtype=jnp.bfloat16)   # (HW, Ho*Wo)

    gamma2 = gamma.reshape(1, C).astype(jnp.float32)
    # Big per-batch operands stay bf16 (halves HBM->VMEM DMA); the kernel upcasts
    # them to f32 for the normalization math.
    text_diff = text_diff.astype(jnp.bfloat16)
    x_dec = x_dec.astype(jnp.bfloat16)

    # Constant index_map -> double-buffering up_t only wastes VMEM; single-buffer
    # it when it is not column-tiled.
    up_kwargs = {"pipeline_mode": pl.Buffered(1)} if n_col == 1 else {}
    up_spec = pl.BlockSpec((HW, tile_n), lambda b, j: (0, j), **up_kwargs)

    out_flat = pl.pallas_call(
        _head_kernel,
        out_shape=jax.ShapeDtypeStruct((B, K, HoWo), jnp.float32),
        grid_spec=pltpu.PrefetchScalarGridSpec(
            num_scalar_prefetch=0,
            grid=(n_b, n_col),
            in_specs=[
                pl.BlockSpec((1, K, C), lambda b, j: (0, 0, 0)),      # text_embeddings (shared; no HBM broadcast)
                pl.BlockSpec((Bblk, K, C), lambda b, j: (b, 0, 0)),   # text_diff
                pl.BlockSpec((1, C), lambda b, j: (0, 0)),            # gamma (shared)
                pl.BlockSpec((Bblk, HW, C), lambda b, j: (b, 0, 0)),  # decoder features
                up_spec,                                              # kron(Wh,Ww)^T column slice
            ],
            out_specs=pl.BlockSpec((Bblk, K, tile_n), lambda b, j: (b, 0, j)),
            scratch_shapes=[pltpu.VMEM((Bblk * K, HW), jnp.bfloat16)],
        ),
        compiler_params=pltpu.CompilerParams(
            # batch blocks are independent -> both TCs on v7x; column tiles reuse
            # the per-batch score scratch -> "arbitrary".
            dimension_semantics=("parallel", "arbitrary"),
            vmem_limit_bytes=48 * 1024 * 1024,
        ),
    )(text_emb.astype(jnp.float32), text_diff, gamma2, x_dec, up_t)

    out = out_flat.reshape(B, K, Hout, Wout)   # free metadata reshape in HBM
    low_res_score = None                       # matches the PyTorch module
    return low_res_score, out


def _reference(text_emb, text_diff, gamma, x_dec, *, H, W, scale=4):
    """Pure-f32 JAX reference mirroring Base.forward's tail."""
    B, K, C = text_diff.shape
    text_emb = text_emb.astype(jnp.float32)
    text_diff = text_diff.astype(jnp.float32)
    x_dec = x_dec.astype(jnp.float32)
    gamma = gamma.astype(jnp.float32)
    t = jnp.broadcast_to(text_emb, (B, K, C)) + gamma * text_diff
    t = t / jnp.maximum(jnp.linalg.norm(t, axis=-1, keepdims=True), 1e-12)
    xn = x_dec / jnp.maximum(jnp.linalg.norm(x_dec, axis=-1, keepdims=True), 1e-12)
    score = jnp.einsum('bkc,bpc->bkp', t, xn).reshape(B, K, H, W)
    wh = jnp.asarray(_bilinear_matrix(H * scale, H))
    ww = jnp.asarray(_bilinear_matrix(W * scale, W))
    up = jnp.einsum('oh,bkhw->bkow', wh, score)
    up = jnp.einsum('pw,bkow->bkop', ww, up)
    return up


if __name__ == "__main__":
    # Small shapes consistent with the forward pass:
    #   B batch, K classes, C text_dim/decoder dim, HxW decoder spatial grid.
    B, K, C, H, W, SCALE = 4, 8, 32, 16, 16, 4

    key = jax.random.PRNGKey(0)
    k1, k2, k3 = jax.random.split(key, 3)

    # Synthetic stand-ins for the (undisclosed) sub-module outputs.  The large
    # activations are bf16, as they would come out of a bf16 decoder.
    text_emb = jax.random.normal(k1, (1, K, C), jnp.float32)                        # text_encoder(...)
    text_diff = jax.random.normal(k2, (B, K, C), jnp.float32).astype(jnp.bfloat16)  # context_decoder(...)
    x_dec = jax.random.normal(k3, (B, H * W, C), jnp.float32).astype(jnp.bfloat16)  # decoder(...)
    # gamma = nn.Parameter(torch.ones(text_dim) * 1e-4)
    gamma = jnp.ones((C,), jnp.float32) * 1e-4

    low_res, out = base_head(text_emb, text_diff, gamma, x_dec, H=H, W=W, scale=SCALE)
    out = jax.block_until_ready(out)
    assert low_res is None
    assert out.shape == (B, K, H * SCALE, W * SCALE), out.shape

    ref = _reference(text_emb, text_diff, gamma, x_dec, H=H, W=W, scale=SCALE)
    # bf16 MXU inputs (f32 accumulation) -> loosened tolerance vs the f32 reference.
    np.testing.assert_allclose(np.asarray(out), np.asarray(ref), rtol=2e-2, atol=2e-2)

    print("KERNEL_OK")
</pallas_src>

<mosaic_0001>
module attributes {stable_mosaic.version = 11 : i64} {
  func.func @_head_kernel(%arg0: i32, %arg1: i32, %arg2: memref<1x8x32xf32, #tpu.memory_space<vmem>>, %arg3: memref<2x8x32xbf16, #tpu.memory_space<vmem>>, %arg4: memref<1x32xf32, #tpu.memory_space<vmem>>, %arg5: memref<2x256x32xbf16, #tpu.memory_space<vmem>>, %arg6: memref<256x4096xbf16, #tpu.memory_space<vmem>>, %arg7: memref<2x8x4096xf32, #tpu.memory_space<vmem>>, %arg8: memref<16x256xbf16, #tpu.memory_space<vmem>>) attributes {dimension_semantics = [#tpu.dimension_semantics<parallel>, #tpu.dimension_semantics<arbitrary>], iteration_bounds = array<i64: 2, 1>, scalar_prefetch = 0 : i64, scratch_operands = 1 : i64, tpu.core_type = #tpu.core_type<tc>, window_params = [{pipeline_mode = #tpu.pipeline_mode<synchronous>, transform_indices = @transform_0, window_bounds = array<i64: 1, 8, 32>}, {transform_indices = @transform_1, window_bounds = array<i64: 2, 8, 32>}, {pipeline_mode = #tpu.pipeline_mode<synchronous>, transform_indices = @transform_2, window_bounds = array<i64: 1, 32>}, {transform_indices = @transform_3, window_bounds = array<i64: 2, 256, 32>}, {pipeline_mode = #tpu.pipeline_mode<synchronous>, transform_indices = @transform_4, window_bounds = array<i64: 256, 4096>}, {transform_indices = @transform_5, window_bounds = array<i64: 2, 8, 4096>}]} {
    %c0_i32 = arith.constant 0 : i32
    %0 = arith.cmpi eq, %arg1, %c0_i32 : i32
    %1 = arith.extui %0 : i1 to i32
    %cst = arith.constant 1.000000e-24 : f32
    %c0_i32_0 = arith.constant 0 : i32
    %2 = arith.cmpi ne, %1, %c0_i32_0 : i32
    scf.if %2 {
      %c0_8 = arith.constant 0 : index
      %c0_9 = arith.constant 0 : index
      %c0_10 = arith.constant 0 : index
      %8 = vector.load %arg2[%c0_8, %c0_9, %c0_10] : memref<1x8x32xf32, #tpu.memory_space<vmem>>, vector<1x8x32xf32>
      %9 = vector.shape_cast %8 : vector<1x8x32xf32> to vector<8x32xf32>
      %10 = vector.shape_cast %9 : vector<8x32xf32> to vector<1x8x32xf32>
      %c0_11 = arith.constant 0 : index
      %c0_12 = arith.constant 0 : index
      %11 = vector.load %arg4[%c0_11, %c0_12] : memref<1x32xf32, #tpu.memory_space<vmem>>, vector<1x32xf32>
      %12 = vector.shape_cast %11 : vector<1x32xf32> to vector<32xf32>
      %13 = vector.shape_cast %12 : vector<32xf32> to vector<1x1x32xf32>
      %c0_13 = arith.constant 0 : index
      %c0_14 = arith.constant 0 : index
      %c0_15 = arith.constant 0 : index
      %14 = vector.load %arg3[%c0_13, %c0_14, %c0_15] : memref<2x8x32xbf16, #tpu.memory_space<vmem>>, vector<2x8x32xbf16>
      %15 = arith.extf %14 : vector<2x8x32xbf16> to vector<2x8x32xf32>
      %16 = vector.broadcast %13 : vector<1x1x32xf32> to vector<2x8x32xf32>
      %17 = arith.mulf %16, %15 : vector<2x8x32xf32>
      %18 = vector.broadcast %10 : vector<1x8x32xf32> to vector<2x8x32xf32>
      %19 = arith.addf %18, %17 : vector<2x8x32xf32>
      %20 = arith.mulf %19, %19 : vector<2x8x32xf32>
      %cst_16 = arith.constant dense<0.000000e+00> : vector<2x8xf32>
      %21 = vector.multi_reduction <add>, %20, %cst_16 [2] : vector<2x8x32xf32> to vector<2x8xf32>
      %22 = vector.shape_cast %21 : vector<2x8xf32> to vector<2x8x1xf32>
      %23 = vector.broadcast %cst : f32 to vector<2x8x1xf32>
      %24 = arith.maximumf %22, %23 : vector<2x8x1xf32>
      %25 = math.rsqrt %24 : vector<2x8x1xf32>
      %26 = vector.broadcast %25 : vector<2x8x1xf32> to vector<2x8x32xf32>
      %27 = arith.mulf %19, %26 : vector<2x8x32xf32>
      %c0_17 = arith.constant 0 : index
      %c0_18 = arith.constant 0 : index
      %c0_19 = arith.constant 0 : index
      %28 = vector.load %arg5[%c0_17, %c0_18, %c0_19] : memref<2x256x32xbf16, #tpu.memory_space<vmem>>, vector<2x256x32xbf16>
      %29 = arith.extf %28 : vector<2x256x32xbf16> to vector<2x256x32xf32>
      %30 = arith.mulf %29, %29 : vector<2x256x32xf32>
      %cst_20 = arith.constant dense<0.000000e+00> : vector<2x256xf32>
      %31 = vector.multi_reduction <add>, %30, %cst_20 [2] : vector<2x256x32xf32> to vector<2x256xf32>
      %32 = vector.shape_cast %31 : vector<2x256xf32> to vector<2x256x1xf32>
      %33 = vector.broadcast %cst : f32 to vector<2x256x1xf32>
      %34 = arith.maximumf %32, %33 : vector<2x256x1xf32>
      %35 = math.rsqrt %34 : vector<2x256x1xf32>
      %36 = vector.broadcast %35 : vector<2x256x1xf32> to vector<2x256x32xf32>
      %37 = arith.mulf %29, %36 : vector<2x256x32xf32>
      %38 = arith.truncf %27 : vector<2x8x32xf32> to vector<2x8x32xbf16>
      %39 = arith.truncf %37 : vector<2x256x32xf32> to vector<2x256x32xbf16>
      %cst_21 = arith.constant dense<0.000000e+00> : vector<2x8x256xf32>
      %40 = tpu.matmul %38, %39, %cst_21 {dimension_numbers = #tpu.dot_dimension_numbers<[2], [2], [1], [1], [0, 0, 0, 1, 1, 1], [0], [0]>} : vector<2x8x32xbf16>, vector<2x256x32xbf16>, vector<2x8x256xf32> -> vector<2x8x256xf32>
      %41 = vector.shape_cast %40 : vector<2x8x256xf32> to vector<16x256xf32>
      %42 = arith.truncf %41 : vector<16x256xf32> to vector<16x256xbf16>
      %c0_22 = arith.constant 0 : index
      %c0_23 = arith.constant 0 : index
      %43 = vector.load %arg8[%c0_22, %c0_23] : memref<16x256xbf16, #tpu.memory_space<vmem>>, vector<16x256xbf16>
      tpu.vector_store %arg8[%c0_22, %c0_23], %42 {strides = array<i32>} : memref<16x256xbf16, #tpu.memory_space<vmem>>, vector<16x256xbf16>,
    } else {
    }
    %c0 = arith.constant 0 : index
    %c0_1 = arith.constant 0 : index
    %3 = vector.load %arg8[%c0, %c0_1] : memref<16x256xbf16, #tpu.memory_space<vmem>>, vector<16x256xbf16>
    %c0_2 = arith.constant 0 : index
    %c0_3 = arith.constant 0 : index
    %4 = vector.load %arg6[%c0_2, %c0_3] : memref<256x4096xbf16, #tpu.memory_space<vmem>>, vector<256x4096xbf16>
    %cst_4 = arith.constant dense<0.000000e+00> : vector<16x4096xf32>
    %5 = tpu.matmul %3, %4, %cst_4 {dimension_numbers = #tpu.dot_dimension_numbers<[1], [0], [0], [1], [0, 0, 1, 1], [], []>} : vector<16x256xbf16>, vector<256x4096xbf16>, vector<16x4096xf32> -> vector<16x4096xf32>
    %6 = vector.shape_cast %5 : vector<16x4096xf32> to vector<2x8x4096xf32>
    %c0_5 = arith.constant 0 : index
    %c0_6 = arith.constant 0 : index
    %c0_7 = arith.constant 0 : index
    %7 = vector.load %arg7[%c0_5, %c0_6, %c0_7] : memref<2x8x4096xf32, #tpu.memory_space<vmem>>, vector<2x8x4096xf32>
    tpu.vector_store %arg7[%c0_5, %c0_6, %c0_7], %6 {strides = array<i32>} : memref<2x8x4096xf32, #tpu.memory_space<vmem>>, vector<2x8x4096xf32>,
    return
  }
  func.func @transform_0(%arg0: i32, %arg1: i32) -> (i32, i32, i32) {
    %c0_i32 = arith.constant 0 : i32
    %c0_i32_0 = arith.constant 0 : i32
    %c0_i32_1 = arith.constant 0 : i32
    %c0_i32_2 = arith.constant 0 : i32
    return %c0_i32, %c0_i32_0, %c0_i32_1 : i32, i32, i32
  }
  func.func @transform_1(%arg0: i32, %arg1: i32) -> (i32, i32, i32) {
    %c0_i32 = arith.constant 0 : i32
    %c0_i32_0 = arith.constant 0 : i32
    %c0_i32_1 = arith.constant 0 : i32
    return %arg0, %c0_i32, %c0_i32_0 : i32, i32, i32
  }
  func.func @transform_2(%arg0: i32, %arg1: i32) -> (i32, i32) {
    %c0_i32 = arith.constant 0 : i32
    %c0_i32_0 = arith.constant 0 : i32
    %c0_i32_1 = arith.constant 0 : i32
    return %c0_i32, %c0_i32_0 : i32, i32
  }
  func.func @transform_3(%arg0: i32, %arg1: i32) -> (i32, i32, i32) {
    %c0_i32 = arith.constant 0 : i32
    %c0_i32_0 = arith.constant 0 : i32
    %c0_i32_1 = arith.constant 0 : i32
    return %arg0, %c0_i32, %c0_i32_0 : i32, i32, i32
  }
  func.func @transform_4(%arg0: i32, %arg1: i32) -> (i32, i32) {
    %c0_i32 = arith.constant 0 : i32
    %c0_i32_0 = arith.constant 0 : i32
    return %c0_i32, %arg1 : i32, i32
  }
  func.func @transform_5(%arg0: i32, %arg1: i32) -> (i32, i32, i32) {
    %c0_i32 = arith.constant 0 : i32
    %c0_i32_0 = arith.constant 0 : i32
    return %arg0, %c0_i32, %arg1 : i32, i32, i32
  }
}

</mosaic_0001>

<llo_original>
// kernel: base_head.1
$region0: #{base_head.1}
  #allocation0 [shape = 'u32[]', space=smem, size = 0x4, offset = 0x4, fixed_abs, tag = 'smem constant byte address 0x4 - core index']
  #allocation1 [shape = 'u32[72,128]{1,0:T(1,128)}', space=vmem, size = 0x9000, scoped, tag = 'internal scratch']
  #allocation2 [shape = 'bf16[16,256]{1,0:T(8,128)(2,1)}', space=vmem, size = 0x2000, scoped, tag = 'scratch operand']
  %s0 = inlined_call_operand.hbm [shape: f32[1,8,32], index: 0, kind: input, shape index: {}]
  %s1 = inlined_call_operand.hbm [shape: bf16[4,8,32], index: 1, kind: input, shape index: {}]
  %s2 = inlined_call_operand.hbm [shape: f32[1,32], index: 2, kind: input, shape index: {}]
  %s3 = inlined_call_operand.vmem [shape: bf16[4,256,32], index: 3, kind: input, shape index: {}]
  %s4 = inlined_call_operand.hbm [shape: bf16[256,4096], index: 4, kind: input, shape index: {}]
  %s5 = inlined_call_operand.vmem [shape: f32[4,8,4096], index: 5, kind: output, shape index: {}]
  %s6 = sld [smem:[#allocation0]]
  $region73: #{base_head.1} parent=0
    _
  %s8 = ssub.s32 1, %s6
  %s9 = scalar_select 0, %s8, %s6
  $region1: #{base_head.1} parent=0
    #allocation3 [shape = 'u8[4096]{0}', space=vmem, size = 0x1000, scoped, tag = 'input window, operand 0, single buffered']
    #allocation4 [shape = 's32[2]{0}', space=sflag, size = 0x8, scoped, tag = 'scoped memory for base_head.1']
    #allocation5 [shape = 'u8[8192]{0}', space=vmem, size = 0x2000, scoped, tag = 'input window, operand 1']
    #allocation6 [shape = 's32[2]{0}', space=sflag, size = 0x8, scoped, tag = 'scoped memory for base_head.1']
    #allocation7 [shape = 'u8[512]{0}', space=vmem, size = 0x400, scoped, tag = 'input window, operand 2, single buffered']
    #allocation8 [shape = 'u8[2097152]{0}', space=vmem, size = 0x200000, scoped, tag = 'input window, operand 4, single buffered']
    #allocation9 [shape = 's32[1]{0}', space=sflag, size = 0x4, scoped, tag = 'scoped memory for base_head.1']
    %10 = vsyncpa [#allocation4], 0
    %11 = vsyncpa [#allocation6], 0
    %s12 = scalar_lea.sflag [#allocation6], 1
    %13 = vsyncpa %s12, 0
    %14 = vsyncpa [#allocation9], 0
    loop: start=0, step=1, limit=4
    $region2: #{base_head.1} parent=1 // loop_pre_header
      _
    $region3: #{base_head.1} parent=1 // loop_header
      %s16 = sphi 0, %s20
      %p17 = scmp.ge.s32.totalorder %s16, 4
      %s23 = sphi 0, %s35
      %s24 = sphi 0, %s31
      %s25 = sphi 0, %s23
      %s26 = sphi 0, %s24
      %s27 = sphi 0, %s25
      %s28 = sphi 0, %s26
      %s36 = sphi 0, %s36
      %s38 = sphi 0, %s36
      %s39 = sphi 0, %s38
      %s53 = sphi 0, %s39
      %s59 = sphi 0, %s61
      %s62 = sphi 0, %s59
      %s63 = sphi 0, %s62
      %s79 = sphi 0, %s63
      %s83 = sphi 0, %s83
      %s85 = sphi 0, %s83
      %s86 = sphi 0, %s85
      %s100 = sphi 0, %s86
      %s106 = sphi 0, %s108
      %s109 = sphi 0, %s106
      %s110 = sphi 0, %s109
      %s126 = sphi 0, %s110
      %s132 = sphi 0, %s134
      %s135 = sphi 0, %s132
      %s136 = sphi 0, %s135
      %s152 = sphi 0, %s136
      %s160 = sphi 0, %s162
      %s163 = sphi 0, %s160
      %s164 = sphi 0, %s163
      %s180 = sphi 0, %s164
    $region4: #{base_head.1} parent=1 // loop_header_branch
      %19 = sbr.rel (%p17) target = $region8
    $region5: #{base_head.1} parent=1 // loop_body
      %s21 = ssub.s32 %s16, 1
      %s22 = ssub.s32 %s16, 2
      %s29 = sadd.s32 1, %s24
      %p30 = scmp.ge.s32.totalorder %s29, 1
      %s31 = scalar_select %p30, 0, %s29
      %s32 = sadd.s32 1, %s23
      %s33 = scalar_select %p30, %s32, %s23
      %p34 = scmp.ge.s32.totalorder %s33, 2
      %s35 = scalar_select %p34, 0, %s33
      %s37 = sadd.s32 %s36, 1
      %p40 = scmp.eq.s32.totalorder %s16, 1
      %p41 = scmp.ne.s32.totalorder %s36, %s38
      %p42 = scmp.eq.s32.totalorder %s16, 0
      %p43 = por %p41, %p42
      %p44 = scmp.ne.s32.totalorder %s36, %s38
      %p45 = scmp.eq.s32.totalorder %s21, 1
      %p46 = por %p44, %p45
      %p47 = scmp.ne.s32.totalorder %s38, %s39
      %p48 = scmp.eq.s32.totalorder %s21, 0
      %p49 = por %p47, %p48
      %p50 = scmp.ne.s32.totalorder %s38, %s39
      %p51 = scmp.eq.s32.totalorder %s22, 1
      %p52 = por %p50, %p51
      %p54 = scmp.ne.s32.totalorder %s39, %s53
      %p55 = scmp.eq.s32.totalorder %s22, 0
      %p56 = por %p54, %p55
      %s57 = ssub.s32 %s23, %s35
      %p58 = scmp.eq.s32.totalorder %s57, 0
      %s60 = sadd.s32 %s59, 1
      %s61 = scalar_select %p58, %s59, %s60
      %p64 = pneg %p58
      %p65 = scmp.eq.s32.totalorder %s16, 1
      %p66 = por %p64, %p65
      %p67 = scmp.ne.s32.totalorder %s59, %s62
      %p68 = scmp.eq.s32.totalorder %s16, 0
      %p69 = por %p67, %p68
      %p70 = scmp.ne.s32.totalorder %s59, %s62
      %p71 = scmp.eq.s32.totalorder %s21, 1
      %p72 = por %p70, %p71
      %p73 = scmp.ne.s32.totalorder %s62, %s63
      %p74 = scmp.eq.s32.totalorder %s21, 0
      %p75 = por %p73, %p74
      %p76 = scmp.ne.s32.totalorder %s62, %s63
      %p77 = scmp.eq.s32.totalorder %s22, 1
      %p78 = por %p76, %p77
      %p80 = scmp.ne.s32.totalorder %s63, %s79
      %p81 = scmp.eq.s32.totalorder %s22, 0
      %p82 = por %p80, %p81
      %s84 = sadd.s32 %s83, 1
      %p87 = scmp.eq.s32.totalorder %s16, 1
      %p88 = scmp.ne.s32.totalorder %s83, %s85
      %p89 = scmp.eq.s32.totalorder %s16, 0
      %p90 = por %p88, %p89
      %p91 = scmp.ne.s32.totalorder %s83, %s85
      %p92 = scmp.eq.s32.totalorder %s21, 1
      %p93 = por %p91, %p92
      %p94 = scmp.ne.s32.totalorder %s85, %s86
      %p95 = scmp.eq.s32.totalorder %s21, 0
      %p96 = por %p94, %p95
      %p97 = scmp.ne.s32.totalorder %s85, %s86
      %p98 = scmp.eq.s32.totalorder %s22, 1
      %p99 = por %p97, %p98
      %p101 = scmp.ne.s32.totalorder %s86, %s100
      %p102 = scmp.eq.s32.totalorder %s22, 0
      %p103 = por %p101, %p102
      %s104 = ssub.s32 %s23, %s35
      %p105 = scmp.eq.s32.totalorder %s104, 0
      %s107 = sadd.s32 %s106, 1
      %s108 = scalar_select %p105, %s106, %s107
      %p111 = pneg %p105
      %p112 = scmp.eq.s32.totalorder %s16, 1
      %p113 = por %p111, %p112
      %p114 = scmp.ne.s32.totalorder %s106, %s109
      %p115 = scmp.eq.s32.totalorder %s16, 0
      %p116 = por %p114, %p115
      %p117 = scmp.ne.s32.totalorder %s106, %s109
      %p118 = scmp.eq.s32.totalorder %s21, 1
      %p119 = por %p117, %p118
      %p120 = scmp.ne.s32.totalorder %s109, %s110
      %p121 = scmp.eq.s32.totalorder %s21, 0
      %p122 = por %p120, %p121
      %p123 = scmp.ne.s32.totalorder %s109, %s110
      %p124 = scmp.eq.s32.totalorder %s22, 1
      %p125 = por %p123, %p124
      %p127 = scmp.ne.s32.totalorder %s110, %s126
      %p128 = scmp.eq.s32.totalorder %s22, 0
      %p129 = por %p127, %p128
      %s130 = ssub.s32 %s24, %s31
      %p131 = scmp.eq.s32.totalorder %s130, 0
      %s133 = sadd.s32 %s132, 1
      %s134 = scalar_select %p131, %s132, %s133
      %p137 = pneg %p131
      %p138 = scmp.eq.s32.totalorder %s16, 1
      %p139 = por %p137, %p138
      %p140 = scmp.ne.s32.totalorder %s132, %s135
      %p141 = scmp.eq.s32.totalorder %s16, 0
      %p142 = por %p140, %p141
      %p143 = scmp.ne.s32.totalorder %s132, %s135
      %p144 = scmp.eq.s32.totalorder %s21, 1
      %p145 = por %p143, %p144
      %p146 = scmp.ne.s32.totalorder %s135, %s136
      %p147 = scmp.eq.s32.totalorder %s21, 0
      %p148 = por %p146, %p147
      %p149 = scmp.ne.s32.totalorder %s135, %s136
      %p150 = scmp.eq.s32.totalorder %s22, 1
      %p151 = por %p149, %p150
      %p153 = scmp.ne.s32.totalorder %s136, %s152
      %p154 = scmp.eq.s32.totalorder %s22, 0
      %p155 = por %p153, %p154
      %s156 = ssub.s32 %s23, %s35
      %s157 = ssub.s32 %s24, %s31
      %s158 = sor.u32 %s156, %s157
      %p159 = scmp.eq.s32.totalorder %s158, 0
      %s161 = sadd.s32 %s160, 1
      %s162 = scalar_select %p159, %s160, %s161
      %p165 = pneg %p159
      %p166 = scmp.eq.s32.totalorder %s16, 1
      %p167 = por %p165, %p166
      %p168 = scmp.ne.s32.totalorder %s160, %s163
      %p169 = scmp.eq.s32.totalorder %s16, 0
      %p170 = por %p168, %p169
      %p171 = scmp.ne.s32.totalorder %s160, %s163
      %p172 = scmp.eq.s32.totalorder %s21, 1
      %p173 = por %p171, %p172
      %p174 = scmp.ne.s32.totalorder %s163, %s164
      %p175 = scmp.eq.s32.totalorder %s21, 0
      %p176 = por %p174, %p175
      %p177 = scmp.ne.s32.totalorder %s163, %s164
      %p178 = scmp.eq.s32.totalorder %s22, 1
      %p179 = por %p177, %p178
      %p181 = scmp.ne.s32.totalorder %s164, %s180
      %p182 = scmp.eq.s32.totalorder %s22, 0
      %p183 = por %p181, %p182
      %p184 = scmp.le.s32.totalorder 1, %s16
      %p185 = scmp.lt.s32.totalorder %s16, 3
      %p186 = pnand %p184, %p185
      %p187 = pneg %p186
      // Predicated region
      $region9: #{base_head.1} parent=5 // pred_check
        _
      $region10: #{base_head.1} parent=5 // pred_check_branch
        %189 = sbr.rel (%p186) target = $region12
      $region11: #{base_head.1} parent=5 // pred_region
        %s190 = ssub.s32 %s16, 1
        // Predicated region
        $region13: #{base_head.1} parent=11 // pred_check
          %p191 = pneg %p49
        $region14: #{base_head.1} parent=11 // pred_check_branch
          %193 = sbr.rel (%p191) target = $region16
        $region15: #{base_head.1} parent=11 // pred_region
          %195 = vsyncadd [#allocation4], 0
          %s197 = sshll.u32 %s0, 4
          %s198 = int_to_ptr.hbm [resolvable:$true] %s197
          %s199 = sshll.u32 [#allocation3], 4
          %s200 = int_to_ptr.vmem [resolvable:$true] %s199
          %202 = dma.hbm_to_vmem [thread:$0]  %s198, 128, %s200, [#allocation4]
        $region16: #{base_head.1} parent=11 // pred_fallthru
          _
        // Predicated region
        $region17: #{base_head.1} parent=11 // pred_check
          %p203 = pneg %p96
        $region18: #{base_head.1} parent=11 // pred_check_branch
          %205 = sbr.rel (%p203) target = $region20
        $region19: #{base_head.1} parent=11 // pred_region
          %207 = vsyncadd [#allocation6], 0
          %s209 = sshll.u32 %s2, 4
          %s210 = int_to_ptr.hbm [resolvable:$true] %s209
          %s211 = sshll.u32 [#allocation7], 4
          %s212 = int_to_ptr.vmem [resolvable:$true] %s211
          %214 = dma.hbm_to_vmem [thread:$0]  %s210, 16, %s212, [#allocation6]
        $region20: #{base_head.1} parent=11 // pred_fallthru
          _
        // Predicated region
        $region21: #{base_head.1} parent=11 // pred_check
          %p215 = pneg %p148
        $region22: #{base_head.1} parent=11 // pred_check_branch
          %217 = sbr.rel (%p215) target = $region24
        $region23: #{base_head.1} parent=11 // pred_region
          %s218 = smul.u32 32, %s26
          %220 = vsyncadd [#allocation9], 0
          %s221 = smul.addr %s218, 4
          %s222 = scalar_lea.hbm %s4, %s221
          %s223 = sshll.u32 %s222, 4
          %s224 = int_to_ptr.hbm [resolvable:$true] %s223
          %s225 = sshll.u32 [#allocation8], 4
          %s226 = int_to_ptr.vmem [resolvable:$true] %s225
          %231 = dma.hbm_to_vmem [thread:$0]  %s224, 65536, %s226, [#allocation9], 2048, 2048, 128
        $region24: #{base_head.1} parent=11 // pred_fallthru
          _
      $region12: #{base_head.1} parent=5 // pred_fallthru
        _
      %p232 = scmp.lt.s32.totalorder %s16, 2
      // Predicated region
      $region25: #{base_head.1} parent=5 // pred_check
        %p233 = pneg %p232
      $region26: #{base_head.1} parent=5 // pred_check_branch
        %235 = sbr.rel (%p233) target = $region28
      $region27: #{base_head.1} parent=5 // pred_region
        // Predicated region
        $region29: #{base_head.1} parent=27 // pred_check
          %p236 = pneg %p69
        $region30: #{base_head.1} parent=27 // pred_check_branch
          %238 = sbr.rel (%p236) target = $region32
        $region31: #{base_head.1} parent=27 // pred_region
          %s239 = sand.u32 %s16, 1
          %s240 = scalar_lea.sflag [#allocation6], %s239
          %s241 = sand.u32 %s59, 1
          %s242 = smul.addr %s241, 8
          %s243 = scalar_lea.vmem [#allocation5], %s242
          %s244 = smul.u32 2, %s23
          %246 = vsyncadd %s240, 0
          %s247 = smul.addr %s244, 4
          %s248 = scalar_lea.hbm %s1, %s247
          %s249 = sshll.u32 %s248, 4
          %s250 = int_to_ptr.hbm [resolvable:$true] %s249
          %s251 = sshll.u32 %s243, 4
          %s252 = int_to_ptr.vmem [resolvable:$true] %s251
          %257 = dma.hbm_to_vmem [thread:$0]  %s250, 128, %s252, %s240, 64, 64, 4
        $region32: #{base_head.1} parent=27 // pred_fallthru
          _
        // Predicated region
        $region33: #{base_head.1} parent=27 // pred_check
          %p258 = pneg %p116
        $region34: #{base_head.1} parent=27 // pred_check_branch
          %260 = sbr.rel (%p258) target = $region36
        $region35: #{base_head.1} parent=27 // pred_region
          %s261 = smul.u32 2, %s23
          %p262 = scmp.lt.s32.totalorder %s261, 3
          %s263 = scalar_select %p262, %s261, 3
          %s264 = smul.addr %s263, 32
          %s265 = smul.addr %s264, 4
          %s266 = scalar_lea.vmem %s3, %s265
          %s267 = smul.u32 2, %s23
        $region36: #{base_head.1} parent=27 // pred_fallthru
          _
      $region28: #{base_head.1} parent=5 // pred_fallthru
        _
      %p268 = scmp.le.s32.totalorder 1, %s16
      %p269 = scmp.lt.s32.totalorder %s16, 3
      %p270 = pnand %p268, %p269
      %p271 = pneg %p270
      // Predicated region
      $region37: #{base_head.1} parent=5 // pred_check
        _
      $region38: #{base_head.1} parent=5 // pred_check_branch
        %273 = sbr.rel (%p270) target = $region40
      $region39: #{base_head.1} parent=5 // pred_region
        %s274 = ssub.s32 %s16, 1
        // Predicated region
        $region41: #{base_head.1} parent=39 // pred_check
          %p275 = pneg %p49
        $region42: #{base_head.1} parent=39 // pred_check_branch
          %277 = sbr.rel (%p275) target = $region44
        $region43: #{base_head.1} parent=39 // pred_region
          %279 = dma.done [#allocation4], 128
        $region44: #{base_head.1} parent=39 // pred_fallthru
          _
        %s280 = sand.u32 %s21, 1
        %s281 = scalar_lea.sflag [#allocation6], %s280
        %s282 = sand.u32 %s62, 1
        %s283 = smul.addr %s282, 8
        %s284 = scalar_lea.vmem [#allocation5], %s283
        // Predicated region
        $region45: #{base_head.1} parent=39 // pred_check
          %p285 = pneg %p75
        $region46: #{base_head.1} parent=39 // pred_check_branch
          %287 = sbr.rel (%p285) target = $region48
        $region47: #{base_head.1} parent=39 // pred_region
          %289 = dma.done %s281, 128
        $region48: #{base_head.1} parent=39 // pred_fallthru
          _
        // Predicated region
        $region49: #{base_head.1} parent=39 // pred_check
          %p290 = pneg %p96
        $region50: #{base_head.1} parent=39 // pred_check_branch
          %292 = sbr.rel (%p290) target = $region52
        $region51: #{base_head.1} parent=39 // pred_region
          %294 = dma.done [#allocation6], 16
        $region52: #{base_head.1} parent=39 // pred_fallthru
          _
        // Predicated region
        $region53: #{base_head.1} parent=39 // pred_check
          %p295 = pneg %p148
        $region54: #{base_head.1} parent=39 // pred_check_branch
          %297 = sbr.rel (%p295) target = $region56
        $region55: #{base_head.1} parent=39 // pred_region
          %299 = dma.done [#allocation9], 65536
        $region56: #{base_head.1} parent=39 // pred_fallthru
          _
        %p300 = pneg %p49
        %p301 = pneg %p46
        %s302 = sand.u32 %s21, 1
        %s303 = scalar_lea.sflag [#allocation6], %s302
        %s304 = sand.u32 %s62, 1
        %s305 = smul.addr %s304, 8
        %s306 = scalar_lea.vmem [#allocation5], %s305
        %p307 = pneg %p75
        %p308 = pneg %p72
        %p309 = pneg %p96
        %p310 = pneg %p93
        %s311 = smul.u32 2, %s25
        %p312 = scmp.lt.s32.totalorder %s311, 3
        %s313 = scalar_select %p312, %s311, 3
        %s314 = smul.addr %s313, 32
        %s315 = smul.addr %s314, 4
        %s316 = scalar_lea.vmem %s3, %s315
        %p317 = pneg %p122
        %p318 = pneg %p119
        %p319 = pneg %p148
        %p320 = pneg %p145
        %p321 = pneg %p176
        %p322 = pneg %p173
        %s323 = smul.u32 2, %s25
        %s324 = smul.u32 32, %s26
        %p325 = scmp.lt.s32.totalorder %s323, 3
        %s326 = scalar_select %p325, %s323, 3
        %p327 = scmp.lt.s32.totalorder %s324, 31
        %s328 = scalar_select %p327, %s324, 31
        %s329 = smul.addr %s326, 32
        %s330 = sadd.s32 %s328, %s329
        %s331 = smul.addr %s330, 8
        %s332 = scalar_lea.vmem %s5, %s331
        %s333 = smul.u32 2, %s25
        %s334 = smul.u32 2, %s25
        %p335 = scmp.lt.s32.totalorder %s334, 3
        %s336 = scalar_select %p335, %s334, 3
        %s337 = smul.addr %s336, 32
        %s338 = smul.addr %s337, 4
        %s339 = scalar_lea.vmem %s3, %s338
        %s340 = smul.u32 2, %s25
        %s341 = smul.u32 32, %s26
        %s342 = smul.u32 2, %s25
        %s343 = smul.u32 32, %s26
        %p344 = scmp.lt.s32.totalorder %s342, 3
        %s345 = scalar_select %p344, %s342, 3
        %p346 = scmp.lt.s32.totalorder %s343, 31
        %s347 = scalar_select %p346, %s343, 31
        %s348 = smul.addr %s345, 32
        %s349 = sadd.s32 %s347, %s348
        %s350 = smul.addr %s349, 8
        %s351 = scalar_lea.vmem %s5, %s350
        %s352 = smul.u32 2, %s25
        %s353 = smul.u32 32, %s26
        %p354 = scmp.eq.s32.totalorder %s26, 0
        // Predicated region
        $region57: #{base_head.1} parent=39 // pred_check
          %p355 = pneg %p354
        $region58: #{base_head.1} parent=39 // pred_check_branch
          %357 = sbr.rel (%p355) target = $region60
        $region59: #{base_head.1} parent=39 // pred_region
          %v358 = vld [vmem:[#allocation3] sm:$0xff]
          %v359 = vld [vmem:[#allocation7] sm:$0x1]
          %v360 = vld [vmem:[%s284] sm:$0xf]
          %v361 = vld [vmem:[%s284 + $0x4] sm:$0xf]
          %v362 = vunpack.c.l.bf16 %v360
          %v363 = vunpack.c.l.bf16 %v361
          %v365 = vperm.slane %v359, 0
          %v367 = vmul.f32 %v365, %v362
          %v368 = vmul.f32 %v365, %v363
          %v369 = vadd.f32 %v358, %v367
          %v370 = vadd.f32 %v358, %v368
          %v371 = vmul.f32 %v369, %v369
          %v372 = vmul.f32 %v370, %v370
          %vm373 = vcmask 261120
          %v374 = vsel %vm373, %v371, 0.0
          %375 = vadd.xlane.f32.xlu0 %v374
          %v376 = vpop.xlane.xlu0 %375
          %v377 = vsel %vm373, %v372, 0.0
          %378 = vadd.xlane.f32.xlu0 %v377
          %v379 = vpop.xlane.xlu0 %378
          %v380 = vmax.f32 %v376, 1e-24
          %v381 = vmax.f32 %v379, 1e-24
          %v382 = vrsqrt.pop %v380
          %v383 = vmul.f32 %v382, %v380
          %v384 = vmul.f32 %v383, %v382
          %v385 = vmul.f32 0.5, %v384
          %v386 = vsub.f32 1.5, %v385
          %v387 = vmul.f32 %v382, %v386
          %vm388 = vweird.f32 %v380
          %vm389 = vweird.f32 %v382
          %vm390 = vmor %vm388, %vm389
          %v391 = vsel %vm390, %v382, %v387
          %v392 = vrsqrt.pop %v381
          %v393 = vmul.f32 %v392, %v381
          %v394 = vmul.f32 %v393, %v392
          %v395 = vmul.f32 0.5, %v394
          %v396 = vsub.f32 1.5, %v395
          %v397 = vmul.f32 %v392, %v396
          %vm398 = vweird.f32 %v381
          %vm399 = vweird.f32 %v392
          %vm400 = vmor %vm398, %vm399
          %v401 = vsel %vm400, %v392, %v397
          %v402 = vmul.f32 %v369, %v391
          %v403 = vmul.f32 %v370, %v401
          %v404 = vld [vmem:[%s339] sm:$0xf]
          %v405 = vld [vmem:[%s339 + $0x4] sm:$0xf]
          %v406 = vld [vmem:[%s339 + $0x8] sm:$0xf]
          %v407 = vld [vmem:[%s339 + $0xc] sm:$0xf]
          %v408 = vld [vmem:[%s339 + $0x10] sm:$0xf]
          %v409 = vld [vmem:[%s339 + $0x14] sm:$0xf]
          %v410 = vld [vmem:[%s339 + $0x18] sm:$0xf]
          %v411 = vld [vmem:[%s339 + $0x1c] sm:$0xf]
          %v412 = vld [vmem:[%s339 + $0x20] sm:$0xf]
          %v413 = vld [vmem:[%s339 + $0x24] sm:$0xf]
          %v414 = vld [vmem:[%s339 + $0x28] sm:$0xf]
          %v415 = vld [vmem:[%s339 + $0x2c] sm:$0xf]
          %v416 = vld [vmem:[%s339 + $0x30] sm:$0xf]
          %v417 = vld [vmem:[%s339 + $0x34] sm:$0xf]
          %v418 = vld [vmem:[%s339 + $0x38] sm:$0xf]
          %v419 = vld [vmem:[%s339 + $0x3c] sm:$0xf]
          %v420 = vld [vmem:[%s339 + $0x40] sm:$0xf]
          %v421 = vld [vmem:[%s339 + $0x44] sm:$0xf]
          %v422 = vld [vmem:[%s339 + $0x48] sm:$0xf]
          %v423 = vld [vmem:[%s339 + $0x4c] sm:$0xf]
          %v424 = vld [vmem:[%s339 + $0x50] sm:$0xf]
          %v425 = vld [vmem:[%s339 + $0x54] sm:$0xf]
          %v426 = vld [vmem:[%s339 + $0x58] sm:$0xf]
          %v427 = vld [vmem:[%s339 + $0x5c] sm:$0xf]
          %v428 = vld [vmem:[%s339 + $0x60] sm:$0xf]
          %v429 = vld [vmem:[%s339 + $0x64] sm:$0xf]
          %v430 = vld [vmem:[%s339 + $0x68] sm:$0xf]
          %v431 = vld [vmem:[%s339 + $0x6c] sm:$0xf]
          %v432 = vld [vmem:[%s339 + $0x70] sm:$0xf]
          %v433 = vld [vmem:[%s339 + $0x74] sm:$0xf]
          %v434 = vld [vmem:[%s339 + $0x78] sm:$0xf]
          %v435 = vld [vmem:[%s339 + $0x7c] sm:$0xf]
          %v436 = vld [vmem:[%s339 + $0x80] sm:$0xf]
          %v437 = vld [vmem:[%s339 + $0x84] sm:$0xf]
          %v438 = vld [vmem:[%s339 + $0x88] sm:$0xf]
          %v439 = vld [vmem:[%s339 + $0x8c] sm:$0xf]
          %v440 = vld [vmem:[%s339 + $0x90] sm:$0xf]
          %v441 = vld [vmem:[%s339 + $0x94] sm:$0xf]
          %v442 = vld [vmem:[%s339 + $0x98] sm:$0xf]
          %v443 = vld [vmem:[%s339 + $0x9c] sm:$0xf]
          %v444 = vld [vmem:[%s339 + $0xa0] sm:$0xf]
          %v445 = vld [vmem:[%s339 + $0xa4] sm:$0xf]
          %v446 = vld [vmem:[%s339 + $0xa8] sm:$0xf]
          %v447 = vld [vmem:[%s339 + $0xac] sm:$0xf]
          %v448 = vld [vmem:[%s339 + $0xb0] sm:$0xf]
          %v449 = vld [vmem:[%s339 + $0xb4] sm:$0xf]
          %v450 = vld [vmem:[%s339 + $0xb8] sm:$0xf]
          %v451 = vld [vmem:[%s339 + $0xbc] sm:$0xf]
          %v452 = vld [vmem:[%s339 + $0xc0] sm:$0xf]
          %v453 = vld [vmem:[%s339 + $0xc4] sm:$0xf]
          %v454 = vld [vmem:[%s339 + $0xc8] sm:$0xf]
          %v455 = vld [vmem:[%s339 + $0xcc] sm:$0xf]
          %v456 = vld [vmem:[%s339 + $0xd0] sm:$0xf]
          %v457 = vld [vmem:[%s339 + $0xd4] sm:$0xf]
          %v458 = vld [vmem:[%s339 + $0xd8] sm:$0xf]
          %v459 = vld [vmem:[%s339 + $0xdc] sm:$0xf]
          %v460 = vld [vmem:[%s339 + $0xe0] sm:$0xf]
          %v461 = vld [vmem:[%s339 + $0xe4] sm:$0xf]
          %v462 = vld [vmem:[%s339 + $0xe8] sm:$0xf]
          %v463 = vld [vmem:[%s339 + $0xec] sm:$0xf]
          %v464 = vld [vmem:[%s339 + $0xf0] sm:$0xf]
          %v465 = vld [vmem:[%s339 + $0xf4] sm:$0xf]
          %v466 = vld [vmem:[%s339 + $0xf8] sm:$0xf]
          %v467 = vld [vmem:[%s339 + $0xfc] sm:$0xf]
          %v468 = vunpack.c.l.bf16 %v404
          %v469 = vunpack.c.l.bf16 %v405
          %v470 = vunpack.c.l.bf16 %v406
          %v471 = vunpack.c.l.bf16 %v407
          %v472 = vunpack.c.l.bf16 %v408
          %v473 = vunpack.c.l.bf16 %v409
          %v474 = vunpack.c.l.bf16 %v410
          %v475 = vunpack.c.l.bf16 %v411
          %v476 = vunpack.c.l.bf16 %v412
          %v477 = vunpack.c.l.bf16 %v413
          %v478 = vunpack.c.l.bf16 %v414
          %v479 = vunpack.c.l.bf16 %v415
          %v480 = vunpack.c.l.bf16 %v416
          %v481 = vunpack.c.l.bf16 %v417
          %v482 = vunpack.c.l.bf16 %v418
          %v483 = vunpack.c.l.bf16 %v419
          %v484 = vunpack.c.l.bf16 %v420
          %v485 = vunpack.c.l.bf16 %v421
          %v486 = vunpack.c.l.bf16 %v422
          %v487 = vunpack.c.l.bf16 %v423
          %v488 = vunpack.c.l.bf16 %v424
          %v489 = vunpack.c.l.bf16 %v425
          %v490 = vunpack.c.l.bf16 %v426
          %v491 = vunpack.c.l.bf16 %v427
          %v492 = vunpack.c.l.bf16 %v428
          %v493 = vunpack.c.l.bf16 %v429
          %v494 = vunpack.c.l.bf16 %v430
          %v495 = vunpack.c.l.bf16 %v431
          %v496 = vunpack.c.l.bf16 %v432
          %v497 = vunpack.c.l.bf16 %v433
          %v498 = vunpack.c.l.bf16 %v434
          %v499 = vunpack.c.l.bf16 %v435
          %v500 = vunpack.c.l.bf16 %v436
          %v501 = vunpack.c.l.bf16 %v437
          %v502 = vunpack.c.l.bf16 %v438
          %v503 = vunpack.c.l.bf16 %v439
          %v504 = vunpack.c.l.bf16 %v440
          %v505 = vunpack.c.l.bf16 %v441
          %v506 = vunpack.c.l.bf16 %v442
          %v507 = vunpack.c.l.bf16 %v443
          %v508 = vunpack.c.l.bf16 %v444
          %v509 = vunpack.c.l.bf16 %v445
          %v510 = vunpack.c.l.bf16 %v446
          %v511 = vunpack.c.l.bf16 %v447
          %v512 = vunpack.c.l.bf16 %v448
          %v513 = vunpack.c.l.bf16 %v449
          %v514 = vunpack.c.l.bf16 %v450
          %v515 = vunpack.c.l.bf16 %v451
          %v516 = vunpack.c.l.bf16 %v452
          %v517 = vunpack.c.l.bf16 %v453
          %v518 = vunpack.c.l.bf16 %v454
          %v519 = vunpack.c.l.bf16 %v455
          %v520 = vunpack.c.l.bf16 %v456
          %v521 = vunpack.c.l.bf16 %v457
          %v522 = vunpack.c.l.bf16 %v458
          %v523 = vunpack.c.l.bf16 %v459
          %v524 = vunpack.c.l.bf16 %v460
          %v525 = vunpack.c.l.bf16 %v461
          %v526 = vunpack.c.l.bf16 %v462
          %v527 = vunpack.c.l.bf16 %v463
          %v528 = vunpack.c.l.bf16 %v464
          %v529 = vunpack.c.l.bf16 %v465
          %v530 = vunpack.c.l.bf16 %v466
          %v531 = vunpack.c.l.bf16 %v467
          %v532 = vmul.f32 %v468, %v468
          %v533 = vmul.f32 %v469, %v469
          %v534 = vmul.f32 %v470, %v470
          %v535 = vmul.f32 %v471, %v471
          %v536 = vmul.f32 %v472, %v472
          %v537 = vmul.f32 %v473, %v473
          %v538 = vmul.f32 %v474, %v474
          %v539 = vmul.f32 %v475, %v475
          %v540 = vmul.f32 %v476, %v476
          %v541 = vmul.f32 %v477, %v477
          %v542 = vmul.f32 %v478, %v478
          %v543 = vmul.f32 %v479, %v479
          %v544 = vmul.f32 %v480, %v480
          %v545 = vmul.f32 %v481, %v481
          %v546 = vmul.f32 %v482, %v482
          %v547 = vmul.f32 %v483, %v483
          %v548 = vmul.f32 %v484, %v484
          %v549 = vmul.f32 %v485, %v485
          %v550 = vmul.f32 %v486, %v486
          %v551 = vmul.f32 %v487, %v487
          %v552 = vmul.f32 %v488, %v488
          %v553 = vmul.f32 %v489, %v489
          %v554 = vmul.f32 %v490, %v490
          %v555 = vmul.f32 %v491, %v491
          %v556 = vmul.f32 %v492, %v492
          %v557 = vmul.f32 %v493, %v493
          %v558 = vmul.f32 %v494, %v494
          %v559 = vmul.f32 %v495, %v495
          %v560 = vmul.f32 %v496, %v496
          %v561 = vmul.f32 %v497, %v497
          %v562 = vmul.f32 %v498, %v498
          %v563 = vmul.f32 %v499, %v499
          %v564 = vmul.f32 %v500, %v500
          %v565 = vmul.f32 %v501, %v501
          %v566 = vmul.f32 %v502, %v502
          %v567 = vmul.f32 %v503, %v503
          %v568 = vmul.f32 %v504, %v504
          %v569 = vmul.f32 %v505, %v505
          %v570 = vmul.f32 %v506, %v506
          %v571 = vmul.f32 %v507, %v507
          %v572 = vmul.f32 %v508, %v508
          %v573 = vmul.f32 %v509, %v509
          %v574 = vmul.f32 %v510, %v510
          %v575 = vmul.f32 %v511, %v511
          %v576 = vmul.f32 %v512, %v512
          %v577 = vmul.f32 %v513, %v513
          %v578 = vmul.f32 %v514, %v514
          %v579 = vmul.f32 %v515, %v515
          %v580 = vmul.f32 %v516, %v516
          %v581 = vmul.f32 %v517, %v517
          %v582 = vmul.f32 %v518, %v518
          %v583 = vmul.f32 %v519, %v519
          %v584 = vmul.f32 %v520, %v520
          %v585 = vmul.f32 %v521, %v521
          %v586 = vmul.f32 %v522, %v522
          %v587 = vmul.f32 %v523, %v523
          %v588 = vmul.f32 %v524, %v524
          %v589 = vmul.f32 %v525, %v525
          %v590 = vmul.f32 %v526, %v526
          %v591 = vmul.f32 %v527, %v527
          %v592 = vmul.f32 %v528, %v528
          %v593 = vmul.f32 %v529, %v529
          %v594 = vmul.f32 %v530, %v530
          %v595 = vmul.f32 %v531, %v531
          %v596 = vsel %vm373, %v532, 0.0
          %597 = vadd.xlane.f32.xlu0 %v596
          %v598 = vpop.xlane.xlu0 %597
          %v599 = vsel %vm373, %v533, 0.0
          %600 = vadd.xlane.f32.xlu0 %v599
          %v601 = vpop.xlane.xlu0 %600
          %v602 = vsel %vm373, %v534, 0.0
          %603 = vadd.xlane.f32.xlu0 %v602
          %v604 = vpop.xlane.xlu0 %603
          %v605 = vsel %vm373, %v535, 0.0
          %606 = vadd.xlane.f32.xlu0 %v605
          %v607 = vpop.xlane.xlu0 %606
          %v608 = vsel %vm373, %v536, 0.0
          %609 = vadd.xlane.f32.xlu0 %v608
          %v610 = vpop.xlane.xlu0 %609
          %v611 = vsel %vm373, %v537, 0.0
          %612 = vadd.xlane.f32.xlu0 %v611
          %v613 = vpop.xlane.xlu0 %612
          %v614 = vsel %vm373, %v538, 0.0
          %615 = vadd.xlane.f32.xlu0 %v614
          %v616 = vpop.xlane.xlu0 %615
          %v617 = vsel %vm373, %v539, 0.0
          %618 = vadd.xlane.f32.xlu0 %v617
          %v619 = vpop.xlane.xlu0 %618
          %v620 = vsel %vm373, %v540, 0.0
          %621 = vadd.xlane.f32.xlu0 %v620
          %v622 = vpop.xlane.xlu0 %621
          %v623 = vsel %vm373, %v541, 0.0
          %624 = vadd.xlane.f32.xlu0 %v623
          %v625 = vpop.xlane.xlu0 %624
          %v626 = vsel %vm373, %v542, 0.0
          %627 = vadd.xlane.f32.xlu0 %v626
          %v628 = vpop.xlane.xlu0 %627
          %v629 = vsel %vm373, %v543, 0.0
          %630 = vadd.xlane.f32.xlu0 %v629
          %v631 = vpop.xlane.xlu0 %630
          %v632 = vsel %vm373, %v544, 0.0
          %633 = vadd.xlane.f32.xlu0 %v632
          %v634 = vpop.xlane.xlu0 %633
          %v635 = vsel %vm373, %v545, 0.0
          %636 = vadd.xlane.f32.xlu0 %v635
          %v637 = vpop.xlane.xlu0 %636
          %v638 = vsel %vm373, %v546, 0.0
          %639 = vadd.xlane.f32.xlu0 %v638
          %v640 = vpop.xlane.xlu0 %639
          %v641 = vsel %vm373, %v547, 0.0
          %642 = vadd.xlane.f32.xlu0 %v641
          %v643 = vpop.xlane.xlu0 %642
          %v644 = vsel %vm373, %v548, 0.0
          %645 = vadd.xlane.f32.xlu0 %v644
          %v646 = vpop.xlane.xlu0 %645
          %v647 = vsel %vm373, %v549, 0.0
          %648 = vadd.xlane.f32.xlu0 %v647
          %v649 = vpop.xlane.xlu0 %648
          %v650 = vsel %vm373, %v550, 0.0
          %651 = vadd.xlane.f32.xlu0 %v650
          %v652 = vpop.xlane.xlu0 %651
          %v653 = vsel %vm373, %v551, 0.0
          %654 = vadd.xlane.f32.xlu0 %v653
          %v655 = vpop.xlane.xlu0 %654
          %v656 = vsel %vm373, %v552, 0.0
          %657 = vadd.xlane.f32.xlu0 %v656
          %v658 = vpop.xlane.xlu0 %657
          %v659 = vsel %vm373, %v553, 0.0
          %660 = vadd.xlane.f32.xlu0 %v659
          %v661 = vpop.xlane.xlu0 %660
          %v662 = vsel %vm373, %v554, 0.0
          %663 = vadd.xlane.f32.xlu0 %v662
          %v664 = vpop.xlane.xlu0 %663
          %v665 = vsel %vm373, %v555, 0.0
          %666 = vadd.xlane.f32.xlu0 %v665
          %v667 = vpop.xlane.xlu0 %666
          %v668 = vsel %vm373, %v556, 0.0
          %669 = vadd.xlane.f32.xlu0 %v668
          %v670 = vpop.xlane.xlu0 %669
          %v671 = vsel %vm373, %v557, 0.0
          %672 = vadd.xlane.f32.xlu0 %v671
          %v673 = vpop.xlane.xlu0 %672
          %v674 = vsel %vm373, %v558, 0.0
          %675 = vadd.xlane.f32.xlu0 %v674
          %v676 = vpop.xlane.xlu0 %675
          %v677 = vsel %vm373, %v559, 0.0
          %678 = vadd.xlane.f32.xlu0 %v677
          %v679 = vpop.xlane.xlu0 %678
          %v680 = vsel %vm373, %v560, 0.0
          %681 = vadd.xlane.f32.xlu0 %v680
          %v682 = vpop.xlane.xlu0 %681
          %v683 = vsel %vm373, %v561, 0.0
          %684 = vadd.xlane.f32.xlu0 %v683
          %v685 = vpop.xlane.xlu0 %684
          %v686 = vsel %vm373, %v562, 0.0
          %687 = vadd.xlane.f32.xlu0 %v686
          %v688 = vpop.xlane.xlu0 %687
          %v689 = vsel %vm373, %v563, 0.0
          %690 = vadd.xlane.f32.xlu0 %v689
          %v691 = vpop.xlane.xlu0 %690
          %v692 = vsel %vm373, %v564, 0.0
          %693 = vadd.xlane.f32.xlu0 %v692
          %v694 = vpop.xlane.xlu0 %693
          %v695 = vsel %vm373, %v565, 0.0
          %696 = vadd.xlane.f32.xlu0 %v695
          %v697 = vpop.xlane.xlu0 %696
          %v698 = vsel %vm373, %v566, 0.0
          %699 = vadd.xlane.f32.xlu0 %v698
          %v700 = vpop.xlane.xlu0 %699
          %v701 = vsel %vm373, %v567, 0.0
          %702 = vadd.xlane.f32.xlu0 %v701
          %v703 = vpop.xlane.xlu0 %702
          %v704 = vsel %vm373, %v568, 0.0
          %705 = vadd.xlane.f32.xlu0 %v704
          %v706 = vpop.xlane.xlu0 %705
          %v707 = vsel %vm373, %v569, 0.0
          %708 = vadd.xlane.f32.xlu0 %v707
          %v709 = vpop.xlane.xlu0 %708
          %v710 = vsel %vm373, %v570, 0.0
          %711 = vadd.xlane.f32.xlu0 %v710
          %v712 = vpop.xlane.xlu0 %711
          %v713 = vsel %vm373, %v571, 0.0
          %714 = vadd.xlane.f32.xlu0 %v713
          %v715 = vpop.xlane.xlu0 %714
          %v716 = vsel %vm373, %v572, 0.0
          %717 = vadd.xlane.f32.xlu0 %v716
          %v718 = vpop.xlane.xlu0 %717
          %v719 = vsel %vm373, %v573, 0.0
          %720 = vadd.xlane.f32.xlu0 %v719
          %v721 = vpop.xlane.xlu0 %720
          %v722 = vsel %vm373, %v574, 0.0
          %723 = vadd.xlane.f32.xlu0 %v722
          %v724 = vpop.xlane.xlu0 %723
          %v725 = vsel %vm373, %v575, 0.0
          %726 = vadd.xlane.f32.xlu0 %v725
          %v727 = vpop.xlane.xlu0 %726
          %v728 = vsel %vm373, %v576, 0.0
          %729 = vadd.xlane.f32.xlu0 %v728
          %v730 = vpop.xlane.xlu0 %729
          %v731 = vsel %vm373, %v577, 0.0
          %732 = vadd.xlane.f32.xlu0 %v731
          %v733 = vpop.xlane.xlu0 %732
          %v734 = vsel %vm373, %v578, 0.0
          %735 = vadd.xlane.f32.xlu0 %v734
          %v736 = vpop.xlane.xlu0 %735
          %v737 = vsel %vm373, %v579, 0.0
          %738 = vadd.xlane.f32.xlu0 %v737
          %v739 = vpop.xlane.xlu0 %738
          %v740 = vsel %vm373, %v580, 0.0
          %741 = vadd.xlane.f32.xlu0 %v740
          %v742 = vpop.xlane.xlu0 %741
          %v743 = vsel %vm373, %v581, 0.0
          %744 = vadd.xlane.f32.xlu0 %v743
          %v745 = vpop.xlane.xlu0 %744
          %v746 = vsel %vm373, %v582, 0.0
          %747 = vadd.xlane.f32.xlu0 %v746
          %v748 = vpop.xlane.xlu0 %747
          %v749 = vsel %vm373, %v583, 0.0
          %750 = vadd.xlane.f32.xlu0 %v749
          %v751 = vpop.xlane.xlu0 %750
          %v752 = vsel %vm373, %v584, 0.0
          %753 = vadd.xlane.f32.xlu0 %v752
          %v754 = vpop.xlane.xlu0 %753
          %v755 = vsel %vm373, %v585, 0.0
          %756 = vadd.xlane.f32.xlu0 %v755
          %v757 = vpop.xlane.xlu0 %756
          %v758 = vsel %vm373, %v586, 0.0
          %759 = vadd.xlane.f32.xlu0 %v758
          %v760 = vpop.xlane.xlu0 %759
          %v761 = vsel %vm373, %v587, 0.0
          %762 = vadd.xlane.f32.xlu0 %v761
          %v763 = vpop.xlane.xlu0 %762
          %v764 = vsel %vm373, %v588, 0.0
          %765 = vadd.xlane.f32.xlu0 %v764
          %v766 = vpop.xlane.xlu0 %765
          %v767 = vsel %vm373, %v589, 0.0
          %768 = vadd.xlane.f32.xlu0 %v767
          %v769 = vpop.xlane.xlu0 %768
          %v770 = vsel %vm373, %v590, 0.0
          %771 = vadd.xlane.f32.xlu0 %v770
          %v772 = vpop.xlane.xlu0 %771
          %v773 = vsel %vm373, %v591, 0.0
          %774 = vadd.xlane.f32.xlu0 %v773
          %v775 = vpop.xlane.xlu0 %774
          %v776 = vsel %vm373, %v592, 0.0
          %777 = vadd.xlane.f32.xlu0 %v776
          %v778 = vpop.xlane.xlu0 %777
          %v779 = vsel %vm373, %v593, 0.0
          %780 = vadd.xlane.f32.xlu0 %v779
          %v781 = vpop.xlane.xlu0 %780
          %v782 = vsel %vm373, %v594, 0.0
          %783 = vadd.xlane.f32.xlu0 %v782
          %v784 = vpop.xlane.xlu0 %783
          %v785 = vsel %vm373, %v595, 0.0
          %786 = vadd.xlane.f32.xlu0 %v785
          %v787 = vpop.xlane.xlu0 %786
          %v788 = vmax.f32 %v598, 1e-24
          %v789 = vmax.f32 %v601, 1e-24
          %v790 = vmax.f32 %v604, 1e-24
          %v791 = vmax.f32 %v607, 1e-24
          %v792 = vmax.f32 %v610, 1e-24
          %v793 = vmax.f32 %v613, 1e-24
          %v794 = vmax.f32 %v616, 1e-24
          %v795 = vmax.f32 %v619, 1e-24
          %v796 = vmax.f32 %v622, 1e-24
          %v797 = vmax.f32 %v625, 1e-24
          %v798 = vmax.f32 %v628, 1e-24
          %v799 = vmax.f32 %v631, 1e-24
          %v800 = vmax.f32 %v634, 1e-24
          %v801 = vmax.f32 %v637, 1e-24
          %v802 = vmax.f32 %v640, 1e-24
          %v803 = vmax.f32 %v643, 1e-24
          %v804 = vmax.f32 %v646, 1e-24
          %v805 = vmax.f32 %v649, 1e-24
          %v806 = vmax.f32 %v652, 1e-24
          %v807 = vmax.f32 %v655, 1e-24
          %v808 = vmax.f32 %v658, 1e-24
          %v809 = vmax.f32 %v661, 1e-24
          %v810 = vmax.f32 %v664, 1e-24
          %v811 = vmax.f32 %v667, 1e-24
          %v812 = vmax.f32 %v670, 1e-24
          %v813 = vmax.f32 %v673, 1e-24
          %v814 = vmax.f32 %v676, 1e-24
          %v815 = vmax.f32 %v679, 1e-24
          %v816 = vmax.f32 %v682, 1e-24
          %v817 = vmax.f32 %v685, 1e-24
          %v818 = vmax.f32 %v688, 1e-24
          %v819 = vmax.f32 %v691, 1e-24
          %v820 = vmax.f32 %v694, 1e-24
          %v821 = vmax.f32 %v697, 1e-24
          %v822 = vmax.f32 %v700, 1e-24
          %v823 = vmax.f32 %v703, 1e-24
          %v824 = vmax.f32 %v706, 1e-24
          %v825 = vmax.f32 %v709, 1e-24
          %v826 = vmax.f32 %v712, 1e-24
          %v827 = vmax.f32 %v715, 1e-24
          %v828 = vmax.f32 %v718, 1e-24
          %v829 = vmax.f32 %v721, 1e-24
          %v830 = vmax.f32 %v724, 1e-24
          %v831 = vmax.f32 %v727, 1e-24
          %v832 = vmax.f32 %v730, 1e-24
          %v833 = vmax.f32 %v733, 1e-24
          %v834 = vmax.f32 %v736, 1e-24
          %v835 = vmax.f32 %v739, 1e-24
          %v836 = vmax.f32 %v742, 1e-24
          %v837 = vmax.f32 %v745, 1e-24
          %v838 = vmax.f32 %v748, 1e-24
          %v839 = vmax.f32 %v751, 1e-24
          %v840 = vmax.f32 %v754, 1e-24
          %v841 = vmax.f32 %v757, 1e-24
          %v842 = vmax.f32 %v760, 1e-24
          %v843 = vmax.f32 %v763, 1e-24
          %v844 = vmax.f32 %v766, 1e-24
          %v845 = vmax.f32 %v769, 1e-24
          %v846 = vmax.f32 %v772, 1e-24
          %v847 = vmax.f32 %v775, 1e-24
          %v848 = vmax.f32 %v778, 1e-24
          %v849 = vmax.f32 %v781, 1e-24
          %v850 = vmax.f32 %v784, 1e-24
          %v851 = vmax.f32 %v787, 1e-24
          %v852 = vrsqrt.pop %v788
          %v853 = vmul.f32 %v852, %v788
          %v854 = vmul.f32 %v853, %v852
          %v855 = vmul.f32 0.5, %v854
          %v856 = vsub.f32 1.5, %v855
          %v857 = vmul.f32 %v852, %v856
          %vm858 = vweird.f32 %v788
          %vm859 = vweird.f32 %v852
          %vm860 = vmor %vm858, %vm859
          %v861 = vsel %vm860, %v852, %v857
          %v862 = vrsqrt.pop %v789
          %v863 = vmul.f32 %v862, %v789
          %v864 = vmul.f32 %v863, %v862
          %v865 = vmul.f32 0.5, %v864
          %v866 = vsub.f32 1.5, %v865
          %v867 = vmul.f32 %v862, %v866
          %vm868 = vweird.f32 %v789
          %vm869 = vweird.f32 %v862
          %vm870 = vmor %vm868, %vm869
          %v871 = vsel %vm870, %v862, %v867
          %v872 = vrsqrt.pop %v790
          %v873 = vmul.f32 %v872, %v790
          %v874 = vmul.f32 %v873, %v872
          %v875 = vmul.f32 0.5, %v874
          %v876 = vsub.f32 1.5, %v875
          %v877 = vmul.f32 %v872, %v876
          %vm878 = vweird.f32 %v790
          %vm879 = vweird.f32 %v872
          %vm880 = vmor %vm878, %vm879
          %v881 = vsel %vm880, %v872, %v877
          %v882 = vrsqrt.pop %v791
          %v883 = vmul.f32 %v882, %v791
          %v884 = vmul.f32 %v883, %v882
          %v885 = vmul.f32 0.5, %v884
          %v886 = vsub.f32 1.5, %v885
          %v887 = vmul.f32 %v882, %v886
          %vm888 = vweird.f32 %v791
          %vm889 = vweird.f32 %v882
          %vm890 = vmor %vm888, %vm889
          %v891 = vsel %vm890, %v882, %v887
          %v892 = vrsqrt.pop %v792
          %v893 = vmul.f32 %v892, %v792
          %v894 = vmul.f32 %v893, %v892
          %v895 = vmul.f32 0.5, %v894
          %v896 = vsub.f32 1.5, %v895
          %v897 = vmul.f32 %v892, %v896
          %vm898 = vweird.f32 %v792
          %vm899 = vweird.f32 %v892
          %vm900 = vmor %vm898, %vm899
          %v901 = vsel %vm900, %v892, %v897
          %v902 = vrsqrt.pop %v793
          %v903 = vmul.f32 %v902, %v793
          %v904 = vmul.f32 %v903, %v902
          %v905 = vmul.f32 0.5, %v904
          %v906 = vsub.f32 1.5, %v905
          %v907 = vmul.f32 %v902, %v906
          %vm908 = vweird.f32 %v793
          %vm909 = vweird.f32 %v902
          %vm910 = vmor %vm908, %vm909
          %v911 = vsel %vm910, %v902, %v907
          %v912 = vrsqrt.pop %v794
          %v913 = vmul.f32 %v912, %v794
          %v914 = vmul.f32 %v913, %v912
          %v915 = vmul.f32 0.5, %v914
          %v916 = vsub.f32 1.5, %v915
          %v917 = vmul.f32 %v912, %v916
          %vm918 = vweird.f32 %v794
          %vm919 = vweird.f32 %v912
          %vm920 = vmor %vm918, %vm919
          %v921 = vsel %vm920, %v912, %v917
          %v922 = vrsqrt.pop %v795
          %v923 = vmul.f32 %v922, %v795
          %v924 = vmul.f32 %v923, %v922
          %v925 = vmul.f32 0.5, %v924
          %v926 = vsub.f32 1.5, %v925
          %v927 = vmul.f32 %v922, %v926
          %vm928 = vweird.f32 %v795
          %vm929 = vweird.f32 %v922
          %vm930 = vmor %vm928, %vm929
          %v931 = vsel %vm930, %v922, %v927
          %v932 = vrsqrt.pop %v796
          %v933 = vmul.f32 %v932, %v796
          %v934 = vmul.f32 %v933, %v932
          %v935 = vmul.f32 0.5, %v934
          %v936 = vsub.f32 1.5, %v935
          %v937 = vmul.f32 %v932, %v936
          %vm938 = vweird.f32 %v796
          %vm939 = vweird.f32 %v932
          %vm940 = vmor %vm938, %vm939
          %v941 = vsel %vm940, %v932, %v937
          %v942 = vrsqrt.pop %v797
          %v943 = vmul.f32 %v942, %v797
          %v944 = vmul.f32 %v943, %v942
          %v945 = vmul.f32 0.5, %v944
          %v946 = vsub.f32 1.5, %v945
          %v947 = vmul.f32 %v942, %v946
          %vm948 = vweird.f32 %v797
          %vm949 = vweird.f32 %v942
          %vm950 = vmor %vm948, %vm949
          %v951 = vsel %vm950, %v942, %v947
          %v952 = vrsqrt.pop %v798
          %v953 = vmul.f32 %v952, %v798
          %v954 = vmul.f32 %v953, %v952
          %v955 = vmul.f32 0.5, %v954
          %v956 = vsub.f32 1.5, %v955
          %v957 = vmul.f32 %v952, %v956
          %vm958 = vweird.f32 %v798
          %vm959 = vweird.f32 %v952
          %vm960 = vmor %vm958, %vm959
          %v961 = vsel %vm960, %v952, %v957
          %v962 = vrsqrt.pop %v799
          %v963 = vmul.f32 %v962, %v799
          %v964 = vmul.f32 %v963, %v962
          %v965 = vmul.f32 0.5, %v964
          %v966 = vsub.f32 1.5, %v965
          %v967 = vmul.f32 %v962, %v966
          %vm968 = vweird.f32 %v799
          %vm969 = vweird.f32 %v962
          %vm970 = vmor %vm968, %vm969
          %v971 = vsel %vm970, %v962, %v967
          %v972 = vrsqrt.pop %v800
          %v973 = vmul.f32 %v972, %v800
          %v974 = vmul.f32 %v973, %v972
          %v975 = vmul.f32 0.5, %v974
          %v976 = vsub.f32 1.5, %v975
          %v977 = vmul.f32 %v972, %v976
          %vm978 = vweird.f32 %v800
          %vm979 = vweird.f32 %v972
          %vm980 = vmor %vm978, %vm979
          %v981 = vsel %vm980, %v972, %v977
          %v982 = vrsqrt.pop %v801
          %v983 = vmul.f32 %v982, %v801
          %v984 = vmul.f32 %v983, %v982
          %v985 = vmul.f32 0.5, %v984
          %v986 = vsub.f32 1.5, %v985
          %v987 = vmul.f32 %v982, %v986
          %vm988 = vweird.f32 %v801
          %vm989 = vweird.f32 %v982
          %vm990 = vmor %vm988, %vm989
          %v991 = vsel %vm990, %v982, %v987
          %v992 = vrsqrt.pop %v802
          %v993 = vmul.f32 %v992, %v802
          %v994 = vmul.f32 %v993, %v992
          %v995 = vmul.f32 0.5, %v994
          %v996 = vsub.f32 1.5, %v995
          %v997 = vmul.f32 %v992, %v996
          %vm998 = vweird.f32 %v802
          %vm999 = vweird.f32 %v992
          %vm1000 = vmor %vm998, %vm999
          %v1001 = vsel %vm1000, %v992, %v997
          %v1002 = vrsqrt.pop %v803
          %v1003 = vmul.f32 %v1002, %v803
          %v1004 = vmul.f32 %v1003, %v1002
          %v1005 = vmul.f32 0.5, %v1004
          %v1006 = vsub.f32 1.5, %v1005
          %v1007 = vmul.f32 %v1002, %v1006
          %vm1008 = vweird.f32 %v803
          %vm1009 = vweird.f32 %v1002
          %vm1010 = vmor %vm1008, %vm1009
          %v1011 = vsel %vm1010, %v1002, %v1007
          %v1012 = vrsqrt.pop %v804
          %v1013 = vmul.f32 %v1012, %v804
          %v1014 = vmul.f32 %v1013, %v1012
          %v1015 = vmul.f32 0.5, %v1014
          %v1016 = vsub.f32 1.5, %v1015
          %v1017 = vmul.f32 %v1012, %v1016
          %vm1018 = vweird.f32 %v804
          %vm1019 = vweird.f32 %v1012
          %vm1020 = vmor %vm1018, %vm1019
          %v1021 = vsel %vm1020, %v1012, %v1017
          %v1022 = vrsqrt.pop %v805
          %v1023 = vmul.f32 %v1022, %v805
          %v1024 = vmul.f32 %v1023, %v1022
          %v1025 = vmul.f32 0.5, %v1024
          %v1026 = vsub.f32 1.5, %v1025
          %v1027 = vmul.f32 %v1022, %v1026
          %vm1028 = vweird.f32 %v805
          %vm1029 = vweird.f32 %v1022
          %vm1030 = vmor %vm1028, %vm1029
          %v1031 = vsel %vm1030, %v1022, %v1027
          %v1032 = vrsqrt.pop %v806
          %v1033 = vmul.f32 %v1032, %v806
          %v1034 = vmul.f32 %v1033, %v1032
          %v1035 = vmul.f32 0.5, %v1034
          %v1036 = vsub.f32 1.5, %v1035
          %v1037 = vmul.f32 %v1032, %v1036
          %vm1038 = vweird.f32 %v806
          %vm1039 = vweird.f32 %v1032
          %vm1040 = vmor %vm1038, %vm1039
          %v1041 = vsel %vm1040, %v1032, %v1037
          %v1042 = vrsqrt.pop %v807
          %v1043 = vmul.f32 %v1042, %v807
          %v1044 = vmul.f32 %v1043, %v1042
          %v1045 = vmul.f32 0.5, %v1044
          %v1046 = vsub.f32 1.5, %v1045
          %v1047 = vmul.f32 %v1042, %v1046
          %vm1048 = vweird.f32 %v807
          %vm1049 = vweird.f32 %v1042
          %vm1050 = vmor %vm1048, %vm1049
          %v1051 = vsel %vm1050, %v1042, %v1047
          %v1052 = vrsqrt.pop %v808
          %v1053 = vmul.f32 %v1052, %v808
          %v1054 = vmul.f32 %v1053, %v1052
          %v1055 = vmul.f32 0.5, %v1054
          %v1056 = vsub.f32 1.5, %v1055
          %v1057 = vmul.f32 %v1052, %v1056
          %vm1058 = vweird.f32 %v808
          %vm1059 = vweird.f32 %v1052
          %vm1060 = vmor %vm1058, %vm1059
          %v1061 = vsel %vm1060, %v1052, %v1057
          %v1062 = vrsqrt.pop %v809
          %v1063 = vmul.f32 %v1062, %v809
          %v1064 = vmul.f32 %v1063, %v1062
          %v1065 = vmul.f32 0.5, %v1064
          %v1066 = vsub.f32 1.5, %v1065
          %v1067 = vmul.f32 %v1062, %v1066
          %vm1068 = vweird.f32 %v809
          %vm1069 = vweird.f32 %v1062
          %vm1070 = vmor %vm1068, %vm1069
          %v1071 = vsel %vm1070, %v1062, %v1067
          %v1072 = vrsqrt.pop %v810
          %v1073 = vmul.f32 %v1072, %v810
          %v1074 = vmul.f32 %v1073, %v1072
          %v1075 = vmul.f32 0.5, %v1074
          %v1076 = vsub.f32 1.5, %v1075
          %v1077 = vmul.f32 %v1072, %v1076
          %vm1078 = vweird.f32 %v810
          %vm1079 = vweird.f32 %v1072
          %vm1080 = vmor %vm1078, %vm1079
          %v1081 = vsel %vm1080, %v1072, %v1077
          %v1082 = vrsqrt.pop %v811
          %v1083 = vmul.f32 %v1082, %v811
          %v1084 = vmul.f32 %v1083, %v1082
          %v1085 = vmul.f32 0.5, %v1084
          %v1086 = vsub.f32 1.5, %v1085
          %v1087 = vmul.f32 %v1082, %v1086
          %vm1088 = vweird.f32 %v811
          %vm1089 = vweird.f32 %v1082
          %vm1090 = vmor %vm1088, %vm1089
          %v1091 = vsel %vm1090, %v1082, %v1087
          %v1092 = vrsqrt.pop %v812
          %v1093 = vmul.f32 %v1092, %v812
          %v1094 = vmul.f32 %v1093, %v1092
          %v1095 = vmul.f32 0.5, %v1094
          %v1096 = vsub.f32 1.5, %v1095
          %v1097 = vmul.f32 %v1092, %v1096
          %vm1098 = vweird.f32 %v812
          %vm1099 = vweird.f32 %v1092
          %vm1100 = vmor %vm1098, %vm1099
          %v1101 = vsel %vm1100, %v1092, %v1097
          %v1102 = vrsqrt.pop %v813
          %v1103 = vmul.f32 %v1102, %v813
          %v1104 = vmul.f32 %v1103, %v1102
          %v1105 = vmul.f32 0.5, %v1104
          %v1106 = vsub.f32 1.5, %v1105
          %v1107 = vmul.f32 %v1102, %v1106
          %vm1108 = vweird.f32 %v813
          %vm1109 = vweird.f32 %v1102
          %vm1110 = vmor %vm1108, %vm1109
          %v1111 = vsel %vm1110, %v1102, %v1107
          %v1112 = vrsqrt.pop %v814
          %v1113 = vmul.f32 %v1112, %v814
          %v1114 = vmul.f32 %v1113, %v1112
          %v1115 = vmul.f32 0.5, %v1114
          %v1116 = vsub.f32 1.5, %v1115
          %v1117 = vmul.f32 %v1112, %v1116
          %vm1118 = vweird.f32 %v814
          %vm1119 = vweird.f32 %v1112
          %vm1120 = vmor %vm1118, %vm1119
          %v1121 = vsel %vm1120, %v1112, %v1117
          %v1122 = vrsqrt.pop %v815
          %v1123 = vmul.f32 %v1122, %v815
          %v1124 = vmul.f32 %v1123, %v1122
          %v1125 = vmul.f32 0.5, %v1124
          %v1126 = vsub.f32 1.5, %v1125
          %v1127 = vmul.f32 %v1122, %v1126
          %vm1128 = vweird.f32 %v815
          %vm1129 = vweird.f32 %v1122
          %vm1130 = vmor %vm1128, %vm1129
          %v1131 = vsel %vm1130, %v1122, %v1127
          %v1132 = vrsqrt.pop %v816
          %v1133 = vmul.f32 %v1132, %v816
          %v1134 = vmul.f32 %v1133, %v1132
          %v1135 = vmul.f32 0.5, %v1134
          %v1136 = vsub.f32 1.5, %v1135
          %v1137 = vmul.f32 %v1132, %v1136
          %vm1138 = vweird.f32 %v816
          %vm1139 = vweird.f32 %v1132
          %vm1140 = vmor %vm1138, %vm1139
          %v1141 = vsel %vm1140, %v1132, %v1137
          %v1142 = vrsqrt.pop %v817
          %v1143 = vmul.f32 %v1142, %v817
          %v1144 = vmul.f32 %v1143, %v1142
          %v1145 = vmul.f32 0.5, %v1144
          %v1146 = vsub.f32 1.5, %v1145
          %v1147 = vmul.f32 %v1142, %v1146
          %vm1148 = vweird.f32 %v817
          %vm1149 = vweird.f32 %v1142
          %vm1150 = vmor %vm1148, %vm1149
          %v1151 = vsel %vm1150, %v1142, %v1147
          %v1152 = vrsqrt.pop %v818
          %v1153 = vmul.f32 %v1152, %v818
          %v1154 = vmul.f32 %v1153, %v1152
          %v1155 = vmul.f32 0.5, %v1154
          %v1156 = vsub.f32 1.5, %v1155
          %v1157 = vmul.f32 %v1152, %v1156
          %vm1158 = vweird.f32 %v818
          %vm1159 = vweird.f32 %v1152
          %vm1160 = vmor %vm1158, %vm1159
          %v1161 = vsel %vm1160, %v1152, %v1157
          %v1162 = vrsqrt.pop %v819
          %v1163 = vmul.f32 %v1162, %v819
          %v1164 = vmul.f32 %v1163, %v1162
          %v1165 = vmul.f32 0.5, %v1164
          %v1166 = vsub.f32 1.5, %v1165
          %v1167 = vmul.f32 %v1162, %v1166
          %vm1168 = vweird.f32 %v819
          %vm1169 = vweird.f32 %v1162
          %vm1170 = vmor %vm1168, %vm1169
          %v1171 = vsel %vm1170, %v1162, %v1167
          %v1172 = vrsqrt.pop %v820
          %v1173 = vmul.f32 %v1172, %v820
          %v1174 = vmul.f32 %v1173, %v1172
          %v1175 = vmul.f32 0.5, %v1174
          %v1176 = vsub.f32 1.5, %v1175
          %v1177 = vmul.f32 %v1172, %v1176
          %vm1178 = vweird.f32 %v820
          %vm1179 = vweird.f32 %v1172
          %vm1180 = vmor %vm1178, %vm1179
          %v1181 = vsel %vm1180, %v1172, %v1177
          %v1182 = vrsqrt.pop %v821
          %v1183 = vmul.f32 %v1182, %v821
          %v1184 = vmul.f32 %v1183, %v1182
          %v1185 = vmul.f32 0.5, %v1184
          %v1186 = vsub.f32 1.5, %v1185
          %v1187 = vmul.f32 %v1182, %v1186
          %vm1188 = vweird.f32 %v821
          %vm1189 = vweird.f32 %v1182
          %vm1190 = vmor %vm1188, %vm1189
          %v1191 = vsel %vm1190, %v1182, %v1187
          %v1192 = vrsqrt.pop %v822
          %v1193 = vmul.f32 %v1192, %v822
          %v1194 = vmul.f32 %v1193, %v1192
          %v1195 = vmul.f32 0.5, %v1194
          %v1196 = vsub.f32 1.5, %v1195
          %v1197 = vmul.f32 %v1192, %v1196
          %vm1198 = vweird.f32 %v822
          %vm1199 = vweird.f32 %v1192
          %vm1200 = vmor %vm1198, %vm1199
          %v1201 = vsel %vm1200, %v1192, %v1197
          %v1202 = vrsqrt.pop %v823
          %v1203 = vmul.f32 %v1202, %v823
          %v1204 = vmul.f32 %v1203, %v1202
          %v1205 = vmul.f32 0.5, %v1204
          %v1206 = vsub.f32 1.5, %v1205
          %v1207 = vmul.f32 %v1202, %v1206
          %vm1208 = vweird.f32 %v823
          %vm1209 = vweird.f32 %v1202
          %vm1210 = vmor %vm1208, %vm1209
          %v1211 = vsel %vm1210, %v1202, %v1207
          %v1212 = vrsqrt.pop %v824
          %v1213 = vmul.f32 %v1212, %v824
          %v1214 = vmul.f32 %v1213, %v1212
          %v1215 = vmul.f32 0.5, %v1214
          %v1216 = vsub.f32 1.5, %v1215
          %v1217 = vmul.f32 %v1212, %v1216
          %vm1218 = vweird.f32 %v824
          %vm1219 = vweird.f32 %v1212
          %vm1220 = vmor %vm1218, %vm1219
          %v1221 = vsel %vm1220, %v1212, %v1217
          %v1222 = vrsqrt.pop %v825
          %v1223 = vmul.f32 %v1222, %v825
          %v1224 = vmul.f32 %v1223, %v1222
          %v1225 = vmul.f32 0.5, %v1224
          %v1226 = vsub.f32 1.5, %v1225
          %v1227 = vmul.f32 %v1222, %v1226
          %vm1228 = vweird.f32 %v825
          %vm1229 = vweird.f32 %v1222
          %vm1230 = vmor %vm1228, %vm1229
          %v1231 = vsel %vm1230, %v1222, %v1227
          %v1232 = vrsqrt.pop %v826
          %v1233 = vmul.f32 %v1232, %v826
          %v1234 = vmul.f32 %v1233, %v1232
          %v1235 = vmul.f32 0.5, %v1234
          %v1236 = vsub.f32 1.5, %v1235
          %v1237 = vmul.f32 %v1232, %v1236
          %vm1238 = vweird.f32 %v826
          %vm1239 = vweird.f32 %v1232
          %vm1240 = vmor %vm1238, %vm1239
          %v1241 = vsel %vm1240, %v1232, %v1237
          %v1242 = vrsqrt.pop %v827
          %v1243 = vmul.f32 %v1242, %v827
          %v1244 = vmul.f32 %v1243, %v1242
          %v1245 = vmul.f32 0.5, %v1244
          %v1246 = vsub.f32 1.5, %v1245
          %v1247 = vmul.f32 %v1242, %v1246
          %vm1248 = vweird.f32 %v827
          %vm1249 = vweird.f32 %v1242
          %vm1250 = vmor %vm1248, %vm1249
          %v1251 = vsel %vm1250, %v1242, %v1247
          %v1252 = vrsqrt.pop %v828
          %v1253 = vmul.f32 %v1252, %v828
          %v1254 = vmul.f32 %v1253, %v1252
          %v1255 = vmul.f32 0.5, %v1254
          %v1256 = vsub.f32 1.5, %v1255
          %v1257 = vmul.f32 %v1252, %v1256
          %vm1258 = vweird.f32 %v828
          %vm1259 = vweird.f32 %v1252
          %vm1260 = vmor %vm1258, %vm1259
          %v1261 = vsel %vm1260, %v1252, %v1257
          %v1262 = vrsqrt.pop %v829
          %v1263 = vmul.f32 %v1262, %v829
          %v1264 = vmul.f32 %v1263, %v1262
          %v1265 = vmul.f32 0.5, %v1264
          %v1266 = vsub.f32 1.5, %v1265
          %v1267 = vmul.f32 %v1262, %v1266
          %vm1268 = vweird.f32 %v829
          %vm1269 = vweird.f32 %v1262
          %vm1270 = vmor %vm1268, %vm1269
          %v1271 = vsel %vm1270, %v1262, %v1267
          %v1272 = vrsqrt.pop %v830
          %v1273 = vmul.f32 %v1272, %v830
          %v1274 = vmul.f32 %v1273, %v1272
          %v1275 = vmul.f32 0.5, %v1274
          %v1276 = vsub.f32 1.5, %v1275
          %v1277 = vmul.f32 %v1272, %v1276
          %vm1278 = vweird.f32 %v830
          %vm1279 = vweird.f32 %v1272
          %vm1280 = vmor %vm1278, %vm1279
          %v1281 = vsel %vm1280, %v1272, %v1277
          %v1282 = vrsqrt.pop %v831
          %v1283 = vmul.f32 %v1282, %v831
          %v1284 = vmul.f32 %v1283, %v1282
          %v1285 = vmul.f32 0.5, %v1284
          %v1286 = vsub.f32 1.5, %v1285
          %v1287 = vmul.f32 %v1282, %v1286
          %vm1288 = vweird.f32 %v831
          %vm1289 = vweird.f32 %v1282
          %vm1290 = vmor %vm1288, %vm1289
          %v1291 = vsel %vm1290, %v1282, %v1287
          %v1292 = vrsqrt.pop %v832
          %v1293 = vmul.f32 %v1292, %v832
          %v1294 = vmul.f32 %v1293, %v1292
          %v1295 = vmul.f32 0.5, %v1294
          %v1296 = vsub.f32 1.5, %v1295
          %v1297 = vmul.f32 %v1292, %v1296
          %vm1298 = vweird.f32 %v832
          %vm1299 = vweird.f32 %v1292
          %vm1300 = vmor %vm1298, %vm1299
          %v1301 = vsel %vm1300, %v1292, %v1297
          %v1302 = vrsqrt.pop %v833
          %v1303 = vmul.f32 %v1302, %v833
          %v1304 = vmul.f32 %v1303, %v1302
          %v1305 = vmul.f32 0.5, %v1304
          %v1306 = vsub.f32 1.5, %v1305
          %v1307 = vmul.f32 %v1302, %v1306
          %vm1308 = vweird.f32 %v833
          %vm1309 = vweird.f32 %v1302
          %vm1310 = vmor %vm1308, %vm1309
          %v1311 = vsel %vm1310, %v1302, %v1307
          %v1312 = vrsqrt.pop %v834
          %v1313 = vmul.f32 %v1312, %v834
          %v1314 = vmul.f32 %v1313, %v1312
          %v1315 = vmul.f32 0.5, %v1314
          %v1316 = vsub.f32 1.5, %v1315
          %v1317 = vmul.f32 %v1312, %v1316
          %vm1318 = vweird.f32 %v834
          %vm1319 = vweird.f32 %v1312
          %vm1320 = vmor %vm1318, %vm1319
          %v1321 = vsel %vm1320, %v1312, %v1317
          %v1322 = vrsqrt.pop %v835
          %v1323 = vmul.f32 %v1322, %v835
          %v1324 = vmul.f32 %v1323, %v1322
          %v1325 = vmul.f32 0.5, %v1324
          %v1326 = vsub.f32 1.5, %v1325
          %v1327 = vmul.f32 %v1322, %v1326
          %vm1328 = vweird.f32 %v835
          %vm1329 = vweird.f32 %v1322
          %vm1330 = vmor %vm1328, %vm1329
          %v1331 = vsel %vm1330, %v1322, %v1327
          %v1332 = vrsqrt.pop %v836
          %v1333 = vmul.f32 %v1332, %v836
          %v1334 = vmul.f32 %v1333, %v1332
          %v1335 = vmul.f32 0.5, %v1334
          %v1336 = vsub.f32 1.5, %v1335
          %v1337 = vmul.f32 %v1332, %v1336
          %vm1338 = vweird.f32 %v836
          %vm1339 = vweird.f32 %v1332
          %vm1340 = vmor %vm1338, %vm1339
          %v1341 = vsel %vm1340, %v1332, %v1337
          %v1342 = vrsqrt.pop %v837
          %v1343 = vmul.f32 %v1342, %v837
          %v1344 = vmul.f32 %v1343, %v1342
          %v1345 = vmul.f32 0.5, %v1344
          %v1346 = vsub.f32 1.5, %v1345
          %v1347 = vmul.f32 %v1342, %v1346
          %vm1348 = vweird.f32 %v837
          %vm1349 = vweird.f32 %v1342
          %vm1350 = vmor %vm1348, %vm1349
          %v1351 = vsel %vm1350, %v1342, %v1347
          %v1352 = vrsqrt.pop %v838
          %v1353 = vmul.f32 %v1352, %v838
          %v1354 = vmul.f32 %v1353, %v1352
          %v1355 = vmul.f32 0.5, %v1354
          %v1356 = vsub.f32 1.5, %v1355
          %v1357 = vmul.f32 %v1352, %v1356
          %vm1358 = vweird.f32 %v838
          %vm1359 = vweird.f32 %v1352
          %vm1360 = vmor %vm1358, %vm1359
          %v1361 = vsel %vm1360, %v1352, %v1357
          %v1362 = vrsqrt.pop %v839
          %v1363 = vmul.f32 %v1362, %v839
          %v1364 = vmul.f32 %v1363, %v1362
          %v1365 = vmul.f32 0.5, %v1364
          %v1366 = vsub.f32 1.5, %v1365
          %v1367 = vmul.f32 %v1362, %v1366
          %vm1368 = vweird.f32 %v839
          %vm1369 = vweird.f32 %v1362
          %vm1370 = vmor %vm1368, %vm1369
          %v1371 = vsel %vm1370, %v1362, %v1367
          %v1372 = vrsqrt.pop %v840
          %v1373 = vmul.f32 %v1372, %v840
          %v1374 = vmul.f32 %v1373, %v1372
          %v1375 = vmul.f32 0.5, %v1374
          %v1376 = vsub.f32 1.5, %v1375
          %v1377 = vmul.f32 %v1372, %v1376
          %vm1378 = vweird.f32 %v840
          %vm1379 = vweird.f32 %v1372
          %vm1380 = vmor %vm1378, %vm1379
          %v1381 = vsel %vm1380, %v1372, %v1377
          %v1382 = vrsqrt.pop %v841
          %v1383 = vmul.f32 %v1382, %v841
          %v1384 = vmul.f32 %v1383, %v1382
          %v1385 = vmul.f32 0.5, %v1384
          %v1386 = vsub.f32 1.5, %v1385
          %v1387 = vmul.f32 %v1382, %v1386
          %vm1388 = vweird.f32 %v841
          %vm1389 = vweird.f32 %v1382
          %vm1390 = vmor %vm1388, %vm1389
          %v1391 = vsel %vm1390, %v1382, %v1387
          %v1392 = vrsqrt.pop %v842
          %v1393 = vmul.f32 %v1392, %v842
          %v1394 = vmul.f32 %v1393, %v1392
          %v1395 = vmul.f32 0.5, %v1394
          %v1396 = vsub.f32 1.5, %v1395
          %v1397 = vmul.f32 %v1392, %v1396
          %vm1398 = vweird.f32 %v842
          %vm1399 = vweird.f32 %v1392
          %vm1400 = vmor %vm1398, %vm1399
          %v1401 = vsel %vm1400, %v1392, %v1397
          %v1402 = vrsqrt.pop %v843
          %v1403 = vmul.f32 %v1402, %v843
          %v1404 = vmul.f32 %v1403, %v1402
          %v1405 = vmul.f32 0.5, %v1404
          %v1406 = vsub.f32 1.5, %v1405
          %v1407 = vmul.f32 %v1402, %v1406
          %vm1408 = vweird.f32 %v843
          %vm1409 = vweird.f32 %v1402
          %vm1410 = vmor %vm1408, %vm1409
          %v1411 = vsel %vm1410, %v1402, %v1407
          %v1412 = vrsqrt.pop %v844
          %v1413 = vmul.f32 %v1412, %v844
          %v1414 = vmul.f32 %v1413, %v1412
          %v1415 = vmul.f32 0.5, %v1414
          %v1416 = vsub.f32 1.5, %v1415
          %v1417 = vmul.f32 %v1412, %v1416
          %vm1418 = vweird.f32 %v844
          %vm1419 = vweird.f32 %v1412
          %vm1420 = vmor %vm1418, %vm1419
          %v1421 = vsel %vm1420, %v1412, %v1417
          %v1422 = vrsqrt.pop %v845
          %v1423 = vmul.f32 %v1422, %v845
          %v1424 = vmul.f32 %v1423, %v1422
          %v1425 = vmul.f32 0.5, %v1424
          %v1426 = vsub.f32 1.5, %v1425
          %v1427 = vmul.f32 %v1422, %v1426
          %vm1428 = vweird.f32 %v845
          %vm1429 = vweird.f32 %v1422
          %vm1430 = vmor %vm1428, %vm1429
          %v1431 = vsel %vm1430, %v1422, %v1427
          %v1432 = vrsqrt.pop %v846
          %v1433 = vmul.f32 %v1432, %v846
          %v1434 = vmul.f32 %v1433, %v1432
          %v1435 = vmul.f32 0.5, %v1434
          %v1436 = vsub.f32 1.5, %v1435
          %v1437 = vmul.f32 %v1432, %v1436
          %vm1438 = vweird.f32 %v846
          %vm1439 = vweird.f32 %v1432
          %vm1440 = vmor %vm1438, %vm1439
          %v1441 = vsel %vm1440, %v1432, %v1437
          %v1442 = vrsqrt.pop %v847
          %v1443 = vmul.f32 %v1442, %v847
          %v1444 = vmul.f32 %v1443, %v1442
          %v1445 = vmul.f32 0.5, %v1444
          %v1446 = vsub.f32 1.5, %v1445
          %v1447 = vmul.f32 %v1442, %v1446
          %vm1448 = vweird.f32 %v847
          %vm1449 = vweird.f32 %v1442
          %vm1450 = vmor %vm1448, %vm1449
          %v1451 = vsel %vm1450, %v1442, %v1447
          %v1452 = vrsqrt.pop %v848
          %v1453 = vmul.f32 %v1452, %v848
          %v1454 = vmul.f32 %v1453, %v1452
          %v1455 = vmul.f32 0.5, %v1454
          %v1456 = vsub.f32 1.5, %v1455
          %v1457 = vmul.f32 %v1452, %v1456
          %vm1458 = vweird.f32 %v848
          %vm1459 = vweird.f32 %v1452
          %vm1460 = vmor %vm1458, %vm1459
          %v1461 = vsel %vm1460, %v1452, %v1457
          %v1462 = vrsqrt.pop %v849
          %v1463 = vmul.f32 %v1462, %v849
          %v1464 = vmul.f32 %v1463, %v1462
          %v1465 = vmul.f32 0.5, %v1464
          %v1466 = vsub.f32 1.5, %v1465
          %v1467 = vmul.f32 %v1462, %v1466
          %vm1468 = vweird.f32 %v849
          %vm1469 = vweird.f32 %v1462
          %vm1470 = vmor %vm1468, %vm1469
          %v1471 = vsel %vm1470, %v1462, %v1467
          %v1472 = vrsqrt.pop %v850
          %v1473 = vmul.f32 %v1472, %v850
          %v1474 = vmul.f32 %v1473, %v1472
          %v1475 = vmul.f32 0.5, %v1474
          %v1476 = vsub.f32 1.5, %v1475
          %v1477 = vmul.f32 %v1472, %v1476
          %vm1478 = vweird.f32 %v850
          %vm1479 = vweird.f32 %v1472
          %vm1480 = vmor %vm1478, %vm1479
          %v1481 = vsel %vm1480, %v1472, %v1477
          %v1482 = vrsqrt.pop %v851
          %v1483 = vmul.f32 %v1482, %v851
          %v1484 = vmul.f32 %v1483, %v1482
          %v1485 = vmul.f32 0.5, %v1484
          %v1486 = vsub.f32 1.5, %v1485
          %v1487 = vmul.f32 %v1482, %v1486
          %vm1488 = vweird.f32 %v851
          %vm1489 = vweird.f32 %v1482
          %vm1490 = vmor %vm1488, %vm1489
          %v1491 = vsel %vm1490, %v1482, %v1487
          %v1492 = vmul.f32 %v468, %v861
          %v1493 = vmul.f32 %v469, %v871
          %v1494 = vmul.f32 %v470, %v881
          %v1495 = vmul.f32 %v471, %v891
          %v1496 = vmul.f32 %v472, %v901
          %v1497 = vmul.f32 %v473, %v911
          %v1498 = vmul.f32 %v474, %v921
          %v1499 = vmul.f32 %v475, %v931
          %v1500 = vmul.f32 %v476, %v941
          %v1501 = vmul.f32 %v477, %v951
          %v1502 = vmul.f32 %v478, %v961
          %v1503 = vmul.f32 %v479, %v971
          %v1504 = vmul.f32 %v480, %v981
          %v1505 = vmul.f32 %v481, %v991
          %v1506 = vmul.f32 %v482, %v1001
          %v1507 = vmul.f32 %v483, %v1011
          %v1508 = vmul.f32 %v484, %v1021
          %v1509 = vmul.f32 %v485, %v1031
          %v1510 = vmul.f32 %v486, %v1041
          %v1511 = vmul.f32 %v487, %v1051
          %v1512 = vmul.f32 %v488, %v1061
          %v1513 = vmul.f32 %v489, %v1071
          %v1514 = vmul.f32 %v490, %v1081
          %v1515 = vmul.f32 %v491, %v1091
          %v1516 = vmul.f32 %v492, %v1101
          %v1517 = vmul.f32 %v493, %v1111
          %v1518 = vmul.f32 %v494, %v1121
          %v1519 = vmul.f32 %v495, %v1131
          %v1520 = vmul.f32 %v496, %v1141
          %v1521 = vmul.f32 %v497, %v1151
          %v1522 = vmul.f32 %v498, %v1161
          %v1523 = vmul.f32 %v499, %v1171
          %v1524 = vmul.f32 %v500, %v1181
          %v1525 = vmul.f32 %v501, %v1191
          %v1526 = vmul.f32 %v502, %v1201
          %v1527 = vmul.f32 %v503, %v1211
          %v1528 = vmul.f32 %v504, %v1221
          %v1529 = vmul.f32 %v505, %v1231
          %v1530 = vmul.f32 %v506, %v1241
          %v1531 = vmul.f32 %v507, %v1251
          %v1532 = vmul.f32 %v508, %v1261
          %v1533 = vmul.f32 %v509, %v1271
          %v1534 = vmul.f32 %v510, %v1281
          %v1535 = vmul.f32 %v511, %v1291
          %v1536 = vmul.f32 %v512, %v1301
          %v1537 = vmul.f32 %v513, %v1311
          %v1538 = vmul.f32 %v514, %v1321
          %v1539 = vmul.f32 %v515, %v1331
          %v1540 = vmul.f32 %v516, %v1341
          %v1541 = vmul.f32 %v517, %v1351
          %v1542 = vmul.f32 %v518, %v1361
          %v1543 = vmul.f32 %v519, %v1371
          %v1544 = vmul.f32 %v520, %v1381
          %v1545 = vmul.f32 %v521, %v1391
          %v1546 = vmul.f32 %v522, %v1401
          %v1547 = vmul.f32 %v523, %v1411
          %v1548 = vmul.f32 %v524, %v1421
          %v1549 = vmul.f32 %v525, %v1431
          %v1550 = vmul.f32 %v526, %v1441
          %v1551 = vmul.f32 %v527, %v1451
          %v1552 = vmul.f32 %v528, %v1461
          %v1553 = vmul.f32 %v529, %v1471
          %v1554 = vmul.f32 %v530, %v1481
          %v1555 = vmul.f32 %v531, %v1491
          %v1556 = vpack.c.bf16 %v402, %v402
          %v1557 = vpack.c.bf16 %v403, %v403
          %v1558 = vpack.c.bf16 %v1492, %v1492
          %v1559 = vpack.c.bf16 %v1493, %v1493
          %v1560 = vpack.c.bf16 %v1494, %v1494
          %v1561 = vpack.c.bf16 %v1495, %v1495
          %v1562 = vpack.c.bf16 %v1496, %v1496
          %v1563 = vpack.c.bf16 %v1497, %v1497
          %v1564 = vpack.c.bf16 %v1498, %v1498
          %v1565 = vpack.c.bf16 %v1499, %v1499
          %v1566 = vpack.c.bf16 %v1500, %v1500
          %v1567 = vpack.c.bf16 %v1501, %v1501
          %v1568 = vpack.c.bf16 %v1502, %v1502
          %v1569 = vpack.c.bf16 %v1503, %v1503
          %v1570 = vpack.c.bf16 %v1504, %v1504
          %v1571 = vpack.c.bf16 %v1505, %v1505
          %v1572 = vpack.c.bf16 %v1506, %v1506
          %v1573 = vpack.c.bf16 %v1507, %v1507
          %v1574 = vpack.c.bf16 %v1508, %v1508
          %v1575 = vpack.c.bf16 %v1509, %v1509
          %v1576 = vpack.c.bf16 %v1510, %v1510
          %v1577 = vpack.c.bf16 %v1511, %v1511
          %v1578 = vpack.c.bf16 %v1512, %v1512
          %v1579 = vpack.c.bf16 %v1513, %v1513
          %v1580 = vpack.c.bf16 %v1514, %v1514
          %v1581 = vpack.c.bf16 %v1515, %v1515
          %v1582 = vpack.c.bf16 %v1516, %v1516
          %v1583 = vpack.c.bf16 %v1517, %v1517
          %v1584 = vpack.c.bf16 %v1518, %v1518
          %v1585 = vpack.c.bf16 %v1519, %v1519
          %v1586 = vpack.c.bf16 %v1520, %v1520
          %v1587 = vpack.c.bf16 %v1521, %v1521
          %v1588 = vpack.c.bf16 %v1522, %v1522
          %v1589 = vpack.c.bf16 %v1523, %v1523
          %v1590 = vpack.c.bf16 %v1524, %v1524
          %v1591 = vpack.c.bf16 %v1525, %v1525
          %v1592 = vpack.c.bf16 %v1526, %v1526
          %v1593 = vpack.c.bf16 %v1527, %v1527
          %v1594 = vpack.c.bf16 %v1528, %v1528
          %v1595 = vpack.c.bf16 %v1529, %v1529
          %v1596 = vpack.c.bf16 %v1530, %v1530
          %v1597 = vpack.c.bf16 %v1531, %v1531
          %v1598 = vpack.c.bf16 %v1532, %v1532
          %v1599 = vpack.c.bf16 %v1533, %v1533
          %v1600 = vpack.c.bf16 %v1534, %v1534
          %v1601 = vpack.c.bf16 %v1535, %v1535
          %v1602 = vpack.c.bf16 %v1536, %v1536
          %v1603 = vpack.c.bf16 %v1537, %v1537
          %v1604 = vpack.c.bf16 %v1538, %v1538
          %v1605 = vpack.c.bf16 %v1539, %v1539
          %v1606 = vpack.c.bf16 %v1540, %v1540
          %v1607 = vpack.c.bf16 %v1541, %v1541
          %v1608 = vpack.c.bf16 %v1542, %v1542
          %v1609 = vpack.c.bf16 %v1543, %v1543
          %v1610 = vpack.c.bf16 %v1544, %v1544
          %v1611 = vpack.c.bf16 %v1545, %v1545
          %v1612 = vpack.c.bf16 %v1546, %v1546
          %v1613 = vpack.c.bf16 %v1547, %v1547
          %v1614 = vpack.c.bf16 %v1548, %v1548
          %v1615 = vpack.c.bf16 %v1549, %v1549
          %v1616 = vpack.c.bf16 %v1550, %v1550
          %v1617 = vpack.c.bf16 %v1551, %v1551
          %v1618 = vpack.c.bf16 %v1552, %v1552
          %v1619 = vpack.c.bf16 %v1553, %v1553
          %v1620 = vpack.c.bf16 %v1554, %v1554
          %v1621 = vpack.c.bf16 %v1555, %v1555
          %v1654 = vunpack.c.l.b16 %v1558
          %v1655 = vunpack.c.l.b16 %v1559
          %v1656 = vunpack.c.l.b16 %v1560
          %v1657 = vunpack.c.l.b16 %v1561
          %v1658 = vunpack.c.l.b16 %v1562
          %v1659 = vunpack.c.l.b16 %v1563
          %v1660 = vunpack.c.l.b16 %v1564
          %v1661 = vunpack.c.l.b16 %v1565
          %v1662 = vunpack.c.l.b16 %v1566
          %v1663 = vunpack.c.l.b16 %v1567
          %v1664 = vunpack.c.l.b16 %v1568
          %v1665 = vunpack.c.l.b16 %v1569
          %v1666 = vunpack.c.l.b16 %v1570
          %v1667 = vunpack.c.l.b16 %v1571
          %v1668 = vunpack.c.l.b16 %v1572
          %v1669 = vunpack.c.l.b16 %v1573
          %v1670 = vunpack.c.l.b16 %v1574
          %v1671 = vunpack.c.l.b16 %v1575
          %v1672 = vunpack.c.l.b16 %v1576
          %v1673 = vunpack.c.l.b16 %v1577
          %v1674 = vunpack.c.l.b16 %v1578
          %v1675 = vunpack.c.l.b16 %v1579
          %v1676 = vunpack.c.l.b16 %v1580
          %v1677 = vunpack.c.l.b16 %v1581
          %v1678 = vunpack.c.l.b16 %v1582
          %v1679 = vunpack.c.l.b16 %v1583
          %v1680 = vunpack.c.l.b16 %v1584
          %v1681 = vunpack.c.l.b16 %v1585
          %v1682 = vunpack.c.l.b16 %v1586
          %v1683 = vunpack.c.l.b16 %v1587
          %v1684 = vunpack.c.l.b16 %v1588
          %v1685 = vunpack.c.l.b16 %v1589
          %v1686 = vpack.c.b16 %v1655, %v1654
          %v1687 = vpack.c.b16 %v1657, %v1656
          %v1688 = vpack.c.b16 %v1659, %v1658
          %v1689 = vpack.c.b16 %v1661, %v1660
          %v1690 = vpack.c.b16 %v1663, %v1662
          %v1691 = vpack.c.b16 %v1665, %v1664
          %v1692 = vpack.c.b16 %v1667, %v1666
          %v1693 = vpack.c.b16 %v1669, %v1668
          %v1694 = vpack.c.b16 %v1671, %v1670
          %v1695 = vpack.c.b16 %v1673, %v1672
          %v1696 = vpack.c.b16 %v1675, %v1674
          %v1697 = vpack.c.b16 %v1677, %v1676
          %v1698 = vpack.c.b16 %v1679, %v1678
          %v1699 = vpack.c.b16 %v1681, %v1680
          %v1700 = vpack.c.b16 %v1683, %v1682
          %v1701 = vpack.c.b16 %v1685, %v1684
          %v1703 = vsel %vm373, %v1556, 0
          %v1706 = vsel %vm373, %v1686, 0
          %v1709 = vsel %vm373, %v1687, 0
          %v1712 = vsel %vm373, %v1688, 0
          %v1715 = vsel %vm373, %v1689, 0
          %v1718 = vsel %vm373, %v1690, 0
          %v1721 = vsel %vm373, %v1691, 0
          %v1724 = vsel %vm373, %v1692, 0
          %v1727 = vsel %vm373, %v1693, 0
          %v1730 = vsel %vm373, %v1694, 0
          %v1733 = vsel %vm373, %v1695, 0
          %v1736 = vsel %vm373, %v1696, 0
          %v1739 = vsel %vm373, %v1697, 0
          %v1742 = vsel %vm373, %v1698, 0
          %v1745 = vsel %vm373, %v1699, 0
          %v1748 = vsel %vm373, %v1700, 0
          %v1751 = vsel %vm373, %v1701, 0
          %1753 = vmatpush.bf16.xpose.msra.mxu0 %v1727
          %1754 = vmatpush.bf16.xpose.msra.mxu0 %v1724
          %1755 = vmatpush.bf16.xpose.msra.mxu0 %v1721
          %1756 = vmatpush.bf16.xpose.msra.mxu0 %v1718
          %1757 = vmatpush.bf16.xpose.msra.mxu0 %v1715
          %1758 = vmatpush.bf16.xpose.msra.mxu0 %v1712
          %1759 = vmatpush.bf16.xpose.msra.mxu0 %v1709
          %1760 = vmatpush.bf16.xpose.msra.mxu0 %v1706
          %1761 = vmatmul.bf16.gmra.mxu0 %v1703
          %v1762 = vpop.f32.mrf.mxu0
          %v1763 = vadd.f32 0.0, %v1762
          %v1764 = vpop.f32.mrf.mxu0
          %1765 = vdwg.mxu0
          %1766 = vmatpush.bf16.xpose.msra.mxu0 %v1751
          %1767 = vmatpush.bf16.xpose.msra.mxu0 %v1748
          %1768 = vmatpush.bf16.xpose.msra.mxu0 %v1745
          %1769 = vmatpush.bf16.xpose.msra.mxu0 %v1742
          %1770 = vmatpush.bf16.xpose.msra.mxu0 %v1739
          %1771 = vmatpush.bf16.xpose.msra.mxu0 %v1736
          %1772 = vmatpush.bf16.xpose.msra.mxu0 %v1733
          %1773 = vmatpush.bf16.xpose.msra.mxu0 %v1730
          %1774 = vmatmul.bf16.gmra.mxu0 %v1703
          %v1775 = vpop.f32.mrf.mxu0
          %v1776 = vadd.f32 0.0, %v1775
          %v1777 = vpop.f32.mrf.mxu0
          %1778 = vdwg.mxu0
          %v1811 = vunpack.c.l.b16 %v1590
          %v1812 = vunpack.c.l.b16 %v1591
          %v1813 = vunpack.c.l.b16 %v1592
          %v1814 = vunpack.c.l.b16 %v1593
          %v1815 = vunpack.c.l.b16 %v1594
          %v1816 = vunpack.c.l.b16 %v1595
          %v1817 = vunpack.c.l.b16 %v1596
          %v1818 = vunpack.c.l.b16 %v1597
          %v1819 = vunpack.c.l.b16 %v1598
          %v1820 = vunpack.c.l.b16 %v1599
          %v1821 = vunpack.c.l.b16 %v1600
          %v1822 = vunpack.c.l.b16 %v1601
          %v1823 = vunpack.c.l.b16 %v1602
          %v1824 = vunpack.c.l.b16 %v1603
          %v1825 = vunpack.c.l.b16 %v1604
          %v1826 = vunpack.c.l.b16 %v1605
          %v1827 = vunpack.c.l.b16 %v1606
          %v1828 = vunpack.c.l.b16 %v1607
          %v1829 = vunpack.c.l.b16 %v1608
          %v1830 = vunpack.c.l.b16 %v1609
          %v1831 = vunpack.c.l.b16 %v1610
          %v1832 = vunpack.c.l.b16 %v1611
          %v1833 = vunpack.c.l.b16 %v1612
          %v1834 = vunpack.c.l.b16 %v1613
          %v1835 = vunpack.c.l.b16 %v1614
          %v1836 = vunpack.c.l.b16 %v1615
          %v1837 = vunpack.c.l.b16 %v1616
          %v1838 = vunpack.c.l.b16 %v1617
          %v1839 = vunpack.c.l.b16 %v1618
          %v1840 = vunpack.c.l.b16 %v1619
          %v1841 = vunpack.c.l.b16 %v1620
          %v1842 = vunpack.c.l.b16 %v1621
          %v1843 = vpack.c.b16 %v1812, %v1811
          %v1844 = vpack.c.b16 %v1814, %v1813
          %v1845 = vpack.c.b16 %v1816, %v1815
          %v1846 = vpack.c.b16 %v1818, %v1817
          %v1847 = vpack.c.b16 %v1820, %v1819
          %v1848 = vpack.c.b16 %v1822, %v1821
          %v1849 = vpack.c.b16 %v1824, %v1823
          %v1850 = vpack.c.b16 %v1826, %v1825
          %v1851 = vpack.c.b16 %v1828, %v1827
          %v1852 = vpack.c.b16 %v1830, %v1829
          %v1853 = vpack.c.b16 %v1832, %v1831
          %v1854 = vpack.c.b16 %v1834, %v1833
          %v1855 = vpack.c.b16 %v1836, %v1835
          %v1856 = vpack.c.b16 %v1838, %v1837
          %v1857 = vpack.c.b16 %v1840, %v1839
          %v1858 = vpack.c.b16 %v1842, %v1841
          %v1860 = vsel %vm373, %v1557, 0
          %v1863 = vsel %vm373, %v1843, 0
          %v1866 = vsel %vm373, %v1844, 0
          %v1869 = vsel %vm373, %v1845, 0
          %v1872 = vsel %vm373, %v1846, 0
          %v1875 = vsel %vm373, %v1847, 0
          %v1878 = vsel %vm373, %v1848, 0
          %v1881 = vsel %vm373, %v1849, 0
          %v1884 = vsel %vm373, %v1850, 0
          %v1887 = vsel %vm373, %v1851, 0
          %v1890 = vsel %vm373, %v1852, 0
          %v1893 = vsel %vm373, %v1853, 0
          %v1896 = vsel %vm373, %v1854, 0
          %v1899 = vsel %vm373, %v1855, 0
          %v1902 = vsel %vm373, %v1856, 0
          %v1905 = vsel %vm373, %v1857, 0
          %v1908 = vsel %vm373, %v1858, 0
          %1910 = vmatpush.bf16.xpose.msra.mxu0 %v1884
          %1911 = vmatpush.bf16.xpose.msra.mxu0 %v1881
          %1912 = vmatpush.bf16.xpose.msra.mxu0 %v1878
          %1913 = vmatpush.bf16.xpose.msra.mxu0 %v1875
          %1914 = vmatpush.bf16.xpose.msra.mxu0 %v1872
          %1915 = vmatpush.bf16.xpose.msra.mxu0 %v1869
          %1916 = vmatpush.bf16.xpose.msra.mxu0 %v1866
          %1917 = vmatpush.bf16.xpose.msra.mxu0 %v1863
          %1918 = vmatmul.bf16.gmra.mxu0 %v1860
          %v1919 = vpop.f32.mrf.mxu0
          %v1920 = vadd.f32 0.0, %v1919
          %v1921 = vpop.f32.mrf.mxu0
          %1922 = vdwg.mxu0
          %1923 = vmatpush.bf16.xpose.msra.mxu0 %v1908
          %1924 = vmatpush.bf16.xpose.msra.mxu0 %v1905
          %1925 = vmatpush.bf16.xpose.msra.mxu0 %v1902
          %1926 = vmatpush.bf16.xpose.msra.mxu0 %v1899
          %1927 = vmatpush.bf16.xpose.msra.mxu0 %v1896
          %1928 = vmatpush.bf16.xpose.msra.mxu0 %v1893
          %1929 = vmatpush.bf16.xpose.msra.mxu0 %v1890
          %1930 = vmatpush.bf16.xpose.msra.mxu0 %v1887
          %1931 = vmatmul.bf16.gmra.mxu0 %v1860
          %v1932 = vpop.f32.mrf.mxu0
          %v1933 = vadd.f32 0.0, %v1932
          %v1934 = vpop.f32.mrf.mxu0
          %1935 = vdwg.mxu0
          %v1936 = vpack.c.bf16 %v1776, %v1763
          %v1937 = vpack.c.bf16 %v1933, %v1920
          %1938 = vst [vmem:[#allocation2] sm:$0xff] %v1936
          %1939 = vst [vmem:[#allocation2 + $0x8] sm:$0xff] %v1937
        $region60: #{base_head.1} parent=39 // pred_fallthru
          _
        %v1940 = vld [vmem:[#allocation2] sm:$0xff]
        %v1941 = vld [vmem:[#allocation2 + $0x8] sm:$0xff]
        %v1942 = vld [vmem:[#allocation8] sm:$0xff]
        %v1943 = vld [vmem:[#allocation8 + $0x8] sm:$0xff]
        %v1944 = vld [vmem:[#allocation8 + $0x10] sm:$0xff]
        %v1945 = vld [vmem:[#allocation8 + $0x18] sm:$0xff]
        %v1946 = vld [vmem:[#allocation8 + $0x20] sm:$0xff]
        %v1947 = vld [vmem:[#allocation8 + $0x28] sm:$0xff]
        %v1948 = vld [vmem:[#allocation8 + $0x30] sm:$0xff]
        %v1949 = vld [vmem:[#allocation8 + $0x38] sm:$0xff]
        %v1950 = vld [vmem:[#allocation8 + $0x40] sm:$0xff]
        %v1951 = vld [vmem:[#allocation8 + $0x48] sm:$0xff]
        %v1952 = vld [vmem:[#allocation8 + $0x50] sm:$0xff]
        %v1953 = vld [vmem:[#allocation8 + $0x58] sm:$0xff]
        %v1954 = vld [vmem:[#allocation8 + $0x60] sm:$0xff]
        %v1955 = vld [vmem:[#allocation8 + $0x68] sm:$0xff]
        %v1956 = vld [vmem:[#allocation8 + $0x70] sm:$0xff]
        %v1957 = vld [vmem:[#allocation8 + $0x78] sm:$0xff]
        %v1958 = vld [vmem:[#allocation8 + $0x80] sm:$0xff]
        %v1959 = vld [vmem:[#allocation8 + $0x88] sm:$0xff]
        %v1960 = vld [vmem:[#allocation8 + $0x90] sm:$0xff]
        %v1961 = vld [vmem:[#allocation8 + $0x98] sm:$0xff]
        %v1962 = vld [vmem:[#allocation8 + $0xa0] sm:$0xff]
        %v1963 = vld [vmem:[#allocation8 + $0xa8] sm:$0xff]
        %v1964 = vld [vmem:[#allocation8 + $0xb0] sm:$0xff]
        %v1965 = vld [vmem:[#allocation8 + $0xb8] sm:$0xff]
        %v1966 = vld [vmem:[#allocation8 + $0xc0] sm:$0xff]
        %v1967 = vld [vmem:[#allocation8 + $0xc8] sm:$0xff]
        %v1968 = vld [vmem:[#allocation8 + $0xd0] sm:$0xff]
        %v1969 = vld [vmem:[#allocation8 + $0xd8] sm:$0xff]
        %v1970 = vld [vmem:[#allocation8 + $0xe0] sm:$0xff]
        %v1971 = vld [vmem:[#allocation8 + $0xe8] sm:$0xff]
        %v1972 = vld [vmem:[#allocation8 + $0xf0] sm:$0xff]
        %v1973 = vld [vmem:[#allocation8 + $0xf8] sm:$0xff]
        %v1974 = vld [vmem:[#allocation8 + $0x100] sm:$0xff]
        %v1975 = vld [vmem:[#allocation8 + $0x108] sm:$0xff]
        %v1976 = vld [vmem:[#allocation8 + $0x110] sm:$0xff]
        %v1977 = vld [vmem:[#allocation8 + $0x118] sm:$0xff]
        %v1978 = vld [vmem:[#allocation8 + $0x120] sm:$0xff]
        %v1979 = vld [vmem:[#allocation8 + $0x128] sm:$0xff]
        %v1980 = vld [vmem:[#allocation8 + $0x130] sm:$0xff]
        %v1981 = vld [vmem:[#allocation8 + $0x138] sm:$0xff]
        %v1982 = vld [vmem:[#allocation8 + $0x140] sm:$0xff]
        %v1983 = vld [vmem:[#allocation8 + $0x148] sm:$0xff]
        %v1984 = vld [vmem:[#allocation8 + $0x150] sm:$0xff]
        %v1985 = vld [vmem:[#allocation8 + $0x158] sm:$0xff]
        %v1986 = vld [vmem:[#allocation8 + $0x160] sm:$0xff]
        %v1987 = vld [vmem:[#allocation8 + $0x168] sm:$0xff]
        %v1988 = vld [vmem:[#allocation8 + $0x170] sm:$0xff]
        %v1989 = vld [vmem:[#allocation8 + $0x178] sm:$0xff]
        %v1990 = vld [vmem:[#allocation8 + $0x180] sm:$0xff]
        %v1991 = vld [vmem:[#allocation8 + $0x188] sm:$0xff]
        %v1992 = vld [vmem:[#allocation8 + $0x190] sm:$0xff]
        %v1993 = vld [vmem:[#allocation8 + $0x198] sm:$0xff]
        %v1994 = vld [vmem:[#allocation8 + $0x1a0] sm:$0xff]
        %v1995 = vld [vmem:[#allocation8 + $0x1a8] sm:$0xff]
        %v1996 = vld [vmem:[#allocation8 + $0x1b0] sm:$0xff]
        %v1997 = vld [vmem:[#allocation8 + $0x1b8] sm:$0xff]
        %v1998 = vld [vmem:[#allocation8 + $0x1c0] sm:$0xff]
        %v1999 = vld [vmem:[#allocation8 + $0x1c8] sm:$0xff]
        %v2000 = vld [vmem:[#allocation8 + $0x1d0] sm:$0xff]
        %v2001 = vld [vmem:[#allocation8 + $0x1d8] sm:$0xff]
        %v2002 = vld [vmem:[#allocation8 + $0x1e0] sm:$0xff]
        %v2003 = vld [vmem:[#allocation8 + $0x1e8] sm:$0xff]
        %v2004 = vld [vmem:[#allocation8 + $0x1f0] sm:$0xff]
        %v2005 = vld [vmem:[#allocation8 + $0x1f8] sm:$0xff]
        %v2006 = vld [vmem:[#allocation8 + $0x200] sm:$0xff]
        %v2007 = vld [vmem:[#allocation8 + $0x208] sm:$0xff]
        %v2008 = vld [vmem:[#allocation8 + $0x210] sm:$0xff]
        %v2009 = vld [vmem:[#allocation8 + $0x218] sm:$0xff]
        %v2010 = vld [vmem:[#allocation8 + $0x220] sm:$0xff]
        %v2011 = vld [vmem:[#allocation8 + $0x228] sm:$0xff]
        %v2012 = vld [vmem:[#allocation8 + $0x230] sm:$0xff]
        %v2013 = vld [vmem:[#allocation8 + $0x238] sm:$0xff]
        %v2014 = vld [vmem:[#allocation8 + $0x240] sm:$0xff]
        %v2015 = vld [vmem:[#allocation8 + $0x248] sm:$0xff]
        %v2016 = vld [vmem:[#allocation8 + $0x250] sm:$0xff]
        %v2017 = vld [vmem:[#allocation8 + $0x258] sm:$0xff]
        %v2018 = vld [vmem:[#allocation8 + $0x260] sm:$0xff]
        %v2019 = vld [vmem:[#allocation8 + $0x268] sm:$0xff]
        %v2020 = vld [vmem:[#allocation8 + $0x270] sm:$0xff]
        %v2021 = vld [vmem:[#allocation8 + $0x278] sm:$0xff]
        %v2022 = vld [vmem:[#allocation8 + $0x280] sm:$0xff]
        %v2023 = vld [vmem:[#allocation8 + $0x288] sm:$0xff]
        %v2024 = vld [vmem:[#allocation8 + $0x290] sm:$0xff]
        %v2025 = vld [vmem:[#allocation8 + $0x298] sm:$0xff]
        %v2026 = vld [vmem:[#allocation8 + $0x2a0] sm:$0xff]
        %v2027 = vld [vmem:[#allocation8 + $0x2a8] sm:$0xff]
        %v2028 = vld [vmem:[#allocation8 + $0x2b0] sm:$0xff]
        %v2029 = vld [vmem:[#allocation8 + $0x2b8] sm:$0xff]
        %v2030 = vld [vmem:[#allocation8 + $0x2c0] sm:$0xff]
        %v2031 = vld [vmem:[#allocation8 + $0x2c8] sm:$0xff]
        %v2032 = vld [vmem:[#allocation8 + $0x2d0] sm:$0xff]
        %v2033 = vld [vmem:[#allocation8 + $0x2d8] sm:$0xff]
        %v2034 = vld [vmem:[#allocation8 + $0x2e0] sm:$0xff]
        %v2035 = vld [vmem:[#allocation8 + $0x2e8] sm:$0xff]
        %v2036 = vld [vmem:[#allocation8 + $0x2f0] sm:$0xff]
        %v2037 = vld [vmem:[#allocation8 + $0x2f8] sm:$0xff]
        %v2038 = vld [vmem:[#allocation8 + $0x300] sm:$0xff]
        %v2039 = vld [vmem:[#allocation8 + $0x308] sm:$0xff]
        %v2040 = vld [vmem:[#allocation8 + $0x310] sm:$0xff]
        %v2041 = vld [vmem:[#allocation8 + $0x318] sm:$0xff]
        %v2042 = vld [vmem:[#allocation8 + $0x320] sm:$0xff]
        %v2043 = vld [vmem:[#allocation8 + $0x328] sm:$0xff]
        %v2044 = vld [vmem:[#allocation8 + $0x330] sm:$0xff]
        %v2045 = vld [vmem:[#allocation8 + $0x338] sm:$0xff]
        %v2046 = vld [vmem:[#allocation8 + $0x340] sm:$0xff]
        %v2047 = vld [vmem:[#allocation8 + $0x348] sm:$0xff]
        %v2048 = vld [vmem:[#allocation8 + $0x350] sm:$0xff]
        %v2049 = vld [vmem:[#allocation8 + $0x358] sm:$0xff]
        %v2050 = vld [vmem:[#allocation8 + $0x360] sm:$0xff]
        %v2051 = vld [vmem:[#allocation8 + $0x368] sm:$0xff]
        %v2052 = vld [vmem:[#allocation8 + $0x370] sm:$0xff]
        %v2053 = vld [vmem:[#allocation8 + $0x378] sm:$0xff]
        %v2054 = vld [vmem:[#allocation8 + $0x380] sm:$0xff]
        %v2055 = vld [vmem:[#allocation8 + $0x388] sm:$0xff]
        %v2056 = vld [vmem:[#allocation8 + $0x390] sm:$0xff]
        %v2057 = vld [vmem:[#allocation8 + $0x398] sm:$0xff]
        %v2058 = vld [vmem:[#allocation8 + $0x3a0] sm:$0xff]
        %v2059 = vld [vmem:[#allocation8 + $0x3a8] sm:$0xff]
        %v2060 = vld [vmem:[#allocation8 + $0x3b0] sm:$0xff]
        %v2061 = vld [vmem:[#allocation8 + $0x3b8] sm:$0xff]
        %v2062 = vld [vmem:[#allocation8 + $0x3c0] sm:$0xff]
        %v2063 = vld [vmem:[#allocation8 + $0x3c8] sm:$0xff]
        %v2064 = vld [vmem:[#allocation8 + $0x3d0] sm:$0xff]
        %v2065 = vld [vmem:[#allocation8 + $0x3d8] sm:$0xff]
        %v2066 = vld [vmem:[#allocation8 + $0x3e0] sm:$0xff]
        %v2067 = vld [vmem:[#allocation8 + $0x3e8] sm:$0xff]
        %v2068 = vld [vmem:[#allocation8 + $0x3f0] sm:$0xff]
        %v2069 = vld [vmem:[#allocation8 + $0x3f8] sm:$0xff]
        %v2070 = vld [vmem:[#allocation8 + $0x400] sm:$0xff]
        %v2071 = vld [vmem:[#allocation8 + $0x408] sm:$0xff]
        %v2072 = vld [vmem:[#allocation8 + $0x410] sm:$0xff]
        %v2073 = vld [vmem:[#allocation8 + $0x418] sm:$0xff]
        %v2074 = vld [vmem:[#allocation8 + $0x420] sm:$0xff]
        %v2075 = vld [vmem:[#allocation8 + $0x428] sm:$0xff]
        %v2076 = vld [vmem:[#allocation8 + $0x430] sm:$0xff]
        %v2077 = vld [vmem:[#allocation8 + $0x438] sm:$0xff]
        %v2078 = vld [vmem:[#allocation8 + $0x440] sm:$0xff]
        %v2079 = vld [vmem:[#allocation8 + $0x448] sm:$0xff]
        %v2080 = vld [vmem:[#allocation8 + $0x450] sm:$0xff]
        %v2081 = vld [vmem:[#allocation8 + $0x458] sm:$0xff]
        %v2082 = vld [vmem:[#allocation8 + $0x460] sm:$0xff]
        %v2083 = vld [vmem:[#allocation8 + $0x468] sm:$0xff]
        %v2084 = vld [vmem:[#allocation8 + $0x470] sm:$0xff]
        %v2085 = vld [vmem:[#allocation8 + $0x478] sm:$0xff]
        %v2086 = vld [vmem:[#allocation8 + $0x480] sm:$0xff]
        %v2087 = vld [vmem:[#allocation8 + $0x488] sm:$0xff]
        %v2088 = vld [vmem:[#allocation8 + $0x490] sm:$0xff]
        %v2089 = vld [vmem:[#allocation8 + $0x498] sm:$0xff]
        %v2090 = vld [vmem:[#allocation8 + $0x4a0] sm:$0xff]
        %v2091 = vld [vmem:[#allocation8 + $0x4a8] sm:$0xff]
        %v2092 = vld [vmem:[#allocation8 + $0x4b0] sm:$0xff]
        %v2093 = vld [vmem:[#allocation8 + $0x4b8] sm:$0xff]
        %v2094 = vld [vmem:[#allocation8 + $0x4c0] sm:$0xff]
        %v2095 = vld [vmem:[#allocation8 + $0x4c8] sm:$0xff]
        %v2096 = vld [vmem:[#allocation8 + $0x4d0] sm:$0xff]
        %v2097 = vld [vmem:[#allocation8 + $0x4d8] sm:$0xff]
        %v2098 = vld [vmem:[#allocation8 + $0x4e0] sm:$0xff]
        %v2099 = vld [vmem:[#allocation8 + $0x4e8] sm:$0xff]
        %v2100 = vld [vmem:[#allocation8 + $0x4f0] sm:$0xff]
        %v2101 = vld [vmem:[#allocation8 + $0x4f8] sm:$0xff]
        %v2102 = vld [vmem:[#allocation8 + $0x500] sm:$0xff]
        %v2103 = vld [vmem:[#allocation8 + $0x508] sm:$0xff]
        %v2104 = vld [vmem:[#allocation8 + $0x510] sm:$0xff]
        %v2105 = vld [vmem:[#allocation8 + $0x518] sm:$0xff]
        %v2106 = vld [vmem:[#allocation8 + $0x520] sm:$0xff]
        %v2107 = vld [vmem:[#allocation8 + $0x528] sm:$0xff]
        %v2108 = vld [vmem:[#allocation8 + $0x530] sm:$0xff]
        %v2109 = vld [vmem:[#allocation8 + $0x538] sm:$0xff]
        %v2110 = vld [vmem:[#allocation8 + $0x540] sm:$0xff]
        %v2111 = vld [vmem:[#allocation8 + $0x548] sm:$0xff]
        %v2112 = vld [vmem:[#allocation8 + $0x550] sm:$0xff]
        %v2113 = vld [vmem:[#allocation8 + $0x558] sm:$0xff]
        %v2114 = vld [vmem:[#allocation8 + $0x560] sm:$0xff]
        %v2115 = vld [vmem:[#allocation8 + $0x568] sm:$0xff]
        %v2116 = vld [vmem:[#allocation8 + $0x570] sm:$0xff]
        %v2117 = vld [vmem:[#allocation8 + $0x578] sm:$0xff]
        %v2118 = vld [vmem:[#allocation8 + $0x580] sm:$0xff]
        %v2119 = vld [vmem:[#allocation8 + $0x588] sm:$0xff]
        %v2120 = vld [vmem:[#allocation8 + $0x590] sm:$0xff]
        %v2121 = vld [vmem:[#allocation8 + $0x598] sm:$0xff]
        %v2122 = vld [vmem:[#allocation8 + $0x5a0] sm:$0xff]
        %v2123 = vld [vmem:[#allocation8 + $0x5a8] sm:$0xff]
        %v2124 = vld [vmem:[#allocation8 + $0x5b0] sm:$0xff]
        %v2125 = vld [vmem:[#allocation8 + $0x5b8] sm:$0xff]
        %v2126 = vld [vmem:[#allocation8 + $0x5c0] sm:$0xff]
        %v2127 = vld [vmem:[#allocation8 + $0x5c8] sm:$0xff]
        %v2128 = vld [vmem:[#allocation8 + $0x5d0] sm:$0xff]
        %v2129 = vld [vmem:[#allocation8 + $0x5d8] sm:$0xff]
        %v2130 = vld [vmem:[#allocation8 + $0x5e0] sm:$0xff]
        %v2131 = vld [vmem:[#allocation8 + $0x5e8] sm:$0xff]
        %v2132 = vld [vmem:[#allocation8 + $0x5f0] sm:$0xff]
        %v2133 = vld [vmem:[#allocation8 + $0x5f8] sm:$0xff]
        %v2134 = vld [vmem:[#allocation8 + $0x600] sm:$0xff]
        %v2135 = vld [vmem:[#allocation8 + $0x608] sm:$0xff]
        %v2136 = vld [vmem:[#allocation8 + $0x610] sm:$0xff]
        %v2137 = vld [vmem:[#allocation8 + $0x618] sm:$0xff]
        %v2138 = vld [vmem:[#allocation8 + $0x620] sm:$0xff]
        %v2139 = vld [vmem:[#allocation8 + $0x628] sm:$0xff]
        %v2140 = vld [vmem:[#allocation8 + $0x630] sm:$0xff]
        %v2141 = vld [vmem:[#allocation8 + $0x638] sm:$0xff]
        %v2142 = vld [vmem:[#allocation8 + $0x640] sm:$0xff]
        %v2143 = vld [vmem:[#allocation8 + $0x648] sm:$0xff]
        %v2144 = vld [vmem:[#allocation8 + $0x650] sm:$0xff]
        %v2145 = vld [vmem:[#allocation8 + $0x658] sm:$0xff]
        %v2146 = vld [vmem:[#allocation8 + $0x660] sm:$0xff]
        %v2147 = vld [vmem:[#allocation8 + $0x668] sm:$0xff]
        %v2148 = vld [vmem:[#allocation8 + $0x670] sm:$0xff]
        %v2149 = vld [vmem:[#allocation8 + $0x678] sm:$0xff]
        %v2150 = vld [vmem:[#allocation8 + $0x680] sm:$0xff]
        %v2151 = vld [vmem:[#allocation8 + $0x688] sm:$0xff]
        %v2152 = vld [vmem:[#allocation8 + $0x690] sm:$0xff]
        %v2153 = vld [vmem:[#allocation8 + $0x698] sm:$0xff]
        %v2154 = vld [vmem:[#allocation8 + $0x6a0] sm:$0xff]
        %v2155 = vld [vmem:[#allocation8 + $0x6a8] sm:$0xff]
        %v2156 = vld [vmem:[#allocation8 + $0x6b0] sm:$0xff]
        %v2157 = vld [vmem:[#allocation8 + $0x6b8] sm:$0xff]
        %v2158 = vld [vmem:[#allocation8 + $0x6c0] sm:$0xff]
        %v2159 = vld [vmem:[#allocation8 + $0x6c8] sm:$0xff]
        %v2160 = vld [vmem:[#allocation8 + $0x6d0] sm:$0xff]
        %v2161 = vld [vmem:[#allocation8 + $0x6d8] sm:$0xff]
        %v2162 = vld [vmem:[#allocation8 + $0x6e0] sm:$0xff]
        %v2163 = vld [vmem:[#allocation8 + $0x6e8] sm:$0xff]
        %v2164 = vld [vmem:[#allocation8 + $0x6f0] sm:$0xff]
        %v2165 = vld [vmem:[#allocation8 + $0x6f8] sm:$0xff]
        %v2166 = vld [vmem:[#allocation8 + $0x700] sm:$0xff]
        %v2167 = vld [vmem:[#allocation8 + $0x708] sm:$0xff]
        %v2168 = vld [vmem:[#allocation8 + $0x710] sm:$0xff]
        %v2169 = vld [vmem:[#allocation8 + $0x718] sm:$0xff]
        %v2170 = vld [vmem:[#allocation8 + $0x720] sm:$0xff]
        %v2171 = vld [vmem:[#allocation8 + $0x728] sm:$0xff]
        %v2172 = vld [vmem:[#allocation8 + $0x730] sm:$0xff]
        %v2173 = vld [vmem:[#allocation8 + $0x738] sm:$0xff]
        %v2174 = vld [vmem:[#allocation8 + $0x740] sm:$0xff]
        %v2175 = vld [vmem:[#allocation8 + $0x748] sm:$0xff]
        %v2176 = vld [vmem:[#allocation8 + $0x750] sm:$0xff]
        %v2177 = vld [vmem:[#allocation8 + $0x758] sm:$0xff]
        %v2178 = vld [vmem:[#allocation8 + $0x760] sm:$0xff]
        %v2179 = vld [vmem:[#allocation8 + $0x768] sm:$0xff]
        %v2180 = vld [vmem:[#allocation8 + $0x770] sm:$0xff]
        %v2181 = vld [vmem:[#allocation8 + $0x778] sm:$0xff]
        %v2182 = vld [vmem:[#allocation8 + $0x780] sm:$0xff]
        %v2183 = vld [vmem:[#allocation8 + $0x788] sm:$0xff]
        %v2184 = vld [vmem:[#allocation8 + $0x790] sm:$0xff]
        %v2185 = vld [vmem:[#allocation8 + $0x798] sm:$0xff]
        %v2186 = vld [vmem:[#allocation8 + $0x7a0] sm:$0xff]
        %v2187 = vld [vmem:[#allocation8 + $0x7a8] sm:$0xff]
        %v2188 = vld [vmem:[#allocation8 + $0x7b0] sm:$0xff]
        %v2189 = vld [vmem:[#allocation8 + $0x7b8] sm:$0xff]
        %v2190 = vld [vmem:[#allocation8 + $0x7c0] sm:$0xff]
        %v2191 = vld [vmem:[#allocation8 + $0x7c8] sm:$0xff]
        %v2192 = vld [vmem:[#allocation8 + $0x7d0] sm:$0xff]
        %v2193 = vld [vmem:[#allocation8 + $0x7d8] sm:$0xff]
        %v2194 = vld [vmem:[#allocation8 + $0x7e0] sm:$0xff]
        %v2195 = vld [vmem:[#allocation8 + $0x7e8] sm:$0xff]
        %v2196 = vld [vmem:[#allocation8 + $0x7f0] sm:$0xff]
        %v2197 = vld [vmem:[#allocation8 + $0x7f8] sm:$0xff]
        %v2198 = vld [vmem:[#allocation8 + $0x800] sm:$0xff]
        %v2199 = vld [vmem:[#allocation8 + $0x808] sm:$0xff]
        %v2200 = vld [vmem:[#allocation8 + $0x810] sm:$0xff]
        %v2201 = vld [vmem:[#allocation8 + $0x818] sm:$0xff]
        %v2202 = vld [vmem:[#allocation8 + $0x820] sm:$0xff]
        %v2203 = vld [vmem:[#allocation8 + $0x828] sm:$0xff]
        %v2204 = vld [vmem:[#allocation8 + $0x830] sm:$0xff]
        %v2205 = vld [vmem:[#allocation8 + $0x838] sm:$0xff]
        %v2206 = vld [vmem:[#allocation8 + $0x840] sm:$0xff]
        %v2207 = vld [vmem:[#allocation8 + $0x848] sm:$0xff]
        %v2208 = vld [vmem:[#allocation8 + $0x850] sm:$0xff]
        %v2209 = vld [vmem:[#allocation8 + $0x858] sm:$0xff]
        %v2210 = vld [vmem:[#allocation8 + $0x860] sm:$0xff]
        %v2211 = vld [vmem:[#allocation8 + $0x868] sm:$0xff]
        %v2212 = vld [vmem:[#allocation8 + $0x870] sm:$0xff]
        %v2213 = vld [vmem:[#allocation8 + $0x878] sm:$0xff]
        %v2214 = vld [vmem:[#allocation8 + $0x880] sm:$0xff]
        %v2215 = vld [vmem:[#allocation8 + $0x888] sm:$0xff]
        %v2216 = vld [vmem:[#allocation8 + $0x890] sm:$0xff]
        %v2217 = vld [vmem:[#allocation8 + $0x898] sm:$0xff]
        %v2218 = vld [vmem:[#allocation8 + $0x8a0] sm:$0xff]
        %v2219 = vld [vmem:[#allocation8 + $0x8a8] sm:$0xff]
        %v2220 = vld [vmem:[#allocation8 + $0x8b0] sm:$0xff]
        %v2221 = vld [vmem:[#allocation8 + $0x8b8] sm:$0xff]
        %v2222 = vld [vmem:[#allocation8 + $0x8c0] sm:$0xff]
        %v2223 = vld [vmem:[#allocation8 + $0x8c8] sm:$0xff]
        %v2224 = vld [vmem:[#allocation8 + $0x8d0] sm:$0xff]
        %v2225 = vld [vmem:[#allocation8 + $0x8d8] sm:$0xff]
        %v2226 = vld [vmem:[#allocation8 + $0x8e0] sm:$0xff]
        %v2227 = vld [vmem:[#allocation8 + $0x8e8] sm:$0xff]
        %v2228 = vld [vmem:[#allocation8 + $0x8f0] sm:$0xff]
        %v2229 = vld [vmem:[#allocation8 + $0x8f8] sm:$0xff]
        %v2230 = vld [vmem:[#allocation8 + $0x900] sm:$0xff]
        %v2231 = vld [vmem:[#allocation8 + $0x908] sm:$0xff]
        %v2232 = vld [vmem:[#allocation8 + $0x910] sm:$0xff]
        %v2233 = vld [vmem:[#allocation8 + $0x918] sm:$0xff]
        %v2234 = vld [vmem:[#allocation8 + $0x920] sm:$0xff]
        %v2235 = vld [vmem:[#allocation8 + $0x928] sm:$0xff]
        %v2236 = vld [vmem:[#allocation8 + $0x930] sm:$0xff]
        %v2237 = vld [vmem:[#allocation8 + $0x938] sm:$0xff]
        %v2238 = vld [vmem:[#allocation8 + $0x940] sm:$0xff]
        %v2239 = vld [vmem:[#allocation8 + $0x948] sm:$0xff]
        %v2240 = vld [vmem:[#allocation8 + $0x950] sm:$0xff]
        %v2241 = vld [vmem:[#allocation8 + $0x958] sm:$0xff]
        %v2242 = vld [vmem:[#allocation8 + $0x960] sm:$0xff]
        %v2243 = vld [vmem:[#allocation8 + $0x968] sm:$0xff]
        %v2244 = vld [vmem:[#allocation8 + $0x970] sm:$0xff]
        %v2245 = vld [vmem:[#allocation8 + $0x978] sm:$0xff]
        %v2246 = vld [vmem:[#allocation8 + $0x980] sm:$0xff]
        %v2247 = vld [vmem:[#allocation8 + $0x988] sm:$0xff]
        %v2248 = vld [vmem:[#allocation8 + $0x990] sm:$0xff]
        %v2249 = vld [vmem:[#allocation8 + $0x998] sm:$0xff]
        %v2250 = vld [vmem:[#allocation8 + $0x9a0] sm:$0xff]
        %v2251 = vld [vmem:[#allocation8 + $0x9a8] sm:$0xff]
        %v2252 = vld [vmem:[#allocation8 + $0x9b0] sm:$0xff]
        %v2253 = vld [vmem:[#allocation8 + $0x9b8] sm:$0xff]
        %v2254 = vld [vmem:[#allocation8 + $0x9c0] sm:$0xff]
        %v2255 = vld [vmem:[#allocation8 + $0x9c8] sm:$0xff]
        %v2256 = vld [vmem:[#allocation8 + $0x9d0] sm:$0xff]
        %v2257 = vld [vmem:[#allocation8 + $0x9d8] sm:$0xff]
        %v2258 = vld [vmem:[#allocation8 + $0x9e0] sm:$0xff]
        %v2259 = vld [vmem:[#allocation8 + $0x9e8] sm:$0xff]
        %v2260 = vld [vmem:[#allocation8 + $0x9f0] sm:$0xff]
        %v2261 = vld [vmem:[#allocation8 + $0x9f8] sm:$0xff]
        %v2262 = vld [vmem:[#allocation8 + $0xa00] sm:$0xff]
        %v2263 = vld [vmem:[#allocation8 + $0xa08] sm:$0xff]
        %v2264 = vld [vmem:[#allocation8 + $0xa10] sm:$0xff]
        %v2265 = vld [vmem:[#allocation8 + $0xa18] sm:$0xff]
        %v2266 = vld [vmem:[#allocation8 + $0xa20] sm:$0xff]
        %v2267 = vld [vmem:[#allocation8 + $0xa28] sm:$0xff]
        %v2268 = vld [vmem:[#allocation8 + $0xa30] sm:$0xff]
        %v2269 = vld [vmem:[#allocation8 + $0xa38] sm:$0xff]
        %v2270 = vld [vmem:[#allocation8 + $0xa40] sm:$0xff]
        %v2271 = vld [vmem:[#allocation8 + $0xa48] sm:$0xff]
        %v2272 = vld [vmem:[#allocation8 + $0xa50] sm:$0xff]
        %v2273 = vld [vmem:[#allocation8 + $0xa58] sm:$0xff]
        %v2274 = vld [vmem:[#allocation8 + $0xa60] sm:$0xff]
        %v2275 = vld [vmem:[#allocation8 + $0xa68] sm:$0xff]
        %v2276 = vld [vmem:[#allocation8 + $0xa70] sm:$0xff]
        %v2277 = vld [vmem:[#allocation8 + $0xa78] sm:$0xff]
        %v2278 = vld [vmem:[#allocation8 + $0xa80] sm:$0xff]
        %v2279 = vld [vmem:[#allocation8 + $0xa88] sm:$0xff]
        %v2280 = vld [vmem:[#allocation8 + $0xa90] sm:$0xff]
        %v2281 = vld [vmem:[#allocation8 + $0xa98] sm:$0xff]
        %v2282 = vld [vmem:[#allocation8 + $0xaa0] sm:$0xff]
        %v2283 = vld [vmem:[#allocation8 + $0xaa8] sm:$0xff]
        %v2284 = vld [vmem:[#allocation8 + $0xab0] sm:$0xff]
        %v2285 = vld [vmem:[#allocation8 + $0xab8] sm:$0xff]
        %v2286 = vld [vmem:[#allocation8 + $0xac0] sm:$0xff]
        %v2287 = vld [vmem:[#allocation8 + $0xac8] sm:$0xff]
        %v2288 = vld [vmem:[#allocation8 + $0xad0] sm:$0xff]
        %v2289 = vld [vmem:[#allocation8 + $0xad8] sm:$0xff]
        %v2290 = vld [vmem:[#allocation8 + $0xae0] sm:$0xff]
        %v2291 = vld [vmem:[#allocation8 + $0xae8] sm:$0xff]
        %v2292 = vld [vmem:[#allocation8 + $0xaf0] sm:$0xff]
        %v2293 = vld [vmem:[#allocation8 + $0xaf8] sm:$0xff]
        %v2294 = vld [vmem:[#allocation8 + $0xb00] sm:$0xff]
        %v2295 = vld [vmem:[#allocation8 + $0xb08] sm:$0xff]
        %v2296 = vld [vmem:[#allocation8 + $0xb10] sm:$0xff]
        %v2297 = vld [vmem:[#allocation8 + $0xb18] sm:$0xff]
        %v2298 = vld [vmem:[#allocation8 + $0xb20] sm:$0xff]
        %v2299 = vld [vmem:[#allocation8 + $0xb28] sm:$0xff]
        %v2300 = vld [vmem:[#allocation8 + $0xb30] sm:$0xff]
        %v2301 = vld [vmem:[#allocation8 + $0xb38] sm:$0xff]
        %v2302 = vld [vmem:[#allocation8 + $0xb40] sm:$0xff]
        %v2303 = vld [vmem:[#allocation8 + $0xb48] sm:$0xff]
        %v2304 = vld [vmem:[#allocation8 + $0xb50] sm:$0xff]
        %v2305 = vld [vmem:[#allocation8 + $0xb58] sm:$0xff]
        %v2306 = vld [vmem:[#allocation8 + $0xb60] sm:$0xff]
        %v2307 = vld [vmem:[#allocation8 + $0xb68] sm:$0xff]
        %v2308 = vld [vmem:[#allocation8 + $0xb70] sm:$0xff]
        %v2309 = vld [vmem:[#allocation8 + $0xb78] sm:$0xff]
        %v2310 = vld [vmem:[#allocation8 + $0xb80] sm:$0xff]
        %v2311 = vld [vmem:[#allocation8 + $0xb88] sm:$0xff]
        %v2312 = vld [vmem:[#allocation8 + $0xb90] sm:$0xff]
        %v2313 = vld [vmem:[#allocation8 + $0xb98] sm:$0xff]
        %v2314 = vld [vmem:[#allocation8 + $0xba0] sm:$0xff]
        %v2315 = vld [vmem:[#allocation8 + $0xba8] sm:$0xff]
        %v2316 = vld [vmem:[#allocation8 + $0xbb0] sm:$0xff]
        %v2317 = vld [vmem:[#allocation8 + $0xbb8] sm:$0xff]
        %v2318 = vld [vmem:[#allocation8 + $0xbc0] sm:$0xff]
        %v2319 = vld [vmem:[#allocation8 + $0xbc8] sm:$0xff]
        %v2320 = vld [vmem:[#allocation8 + $0xbd0] sm:$0xff]
        %v2321 = vld [vmem:[#allocation8 + $0xbd8] sm:$0xff]
        %v2322 = vld [vmem:[#allocation8 + $0xbe0] sm:$0xff]
        %v2323 = vld [vmem:[#allocation8 + $0xbe8] sm:$0xff]
        %v2324 = vld [vmem:[#allocation8 + $0xbf0] sm:$0xff]
        %v2325 = vld [vmem:[#allocation8 + $0xbf8] sm:$0xff]
        %v2326 = vld [vmem:[#allocation8 + $0xc00] sm:$0xff]
        %v2327 = vld [vmem:[#allocation8 + $0xc08] sm:$0xff]
        %v2328 = vld [vmem:[#allocation8 + $0xc10] sm:$0xff]
        %v2329 = vld [vmem:[#allocation8 + $0xc18] sm:$0xff]
        %v2330 = vld [vmem:[#allocation8 + $0xc20] sm:$0xff]
        %v2331 = vld [vmem:[#allocation8 + $0xc28] sm:$0xff]
        %v2332 = vld [vmem:[#allocation8 + $0xc30] sm:$0xff]
        %v2333 = vld [vmem:[#allocation8 + $0xc38] sm:$0xff]
        %v2334 = vld [vmem:[#allocation8 + $0xc40] sm:$0xff]
        %v2335 = vld [vmem:[#allocation8 + $0xc48] sm:$0xff]
        %v2336 = vld [vmem:[#allocation8 + $0xc50] sm:$0xff]
        %v2337 = vld [vmem:[#allocation8 + $0xc58] sm:$0xff]
        %v2338 = vld [vmem:[#allocation8 + $0xc60] sm:$0xff]
        %v2339 = vld [vmem:[#allocation8 + $0xc68] sm:$0xff]
        %v2340 = vld [vmem:[#allocation8 + $0xc70] sm:$0xff]
        %v2341 = vld [vmem:[#allocation8 + $0xc78] sm:$0xff]
        %v2342 = vld [vmem:[#allocation8 + $0xc80] sm:$0xff]
        %v2343 = vld [vmem:[#allocation8 + $0xc88] sm:$0xff]
        %v2344 = vld [vmem:[#allocation8 + $0xc90] sm:$0xff]
        %v2345 = vld [vmem:[#allocation8 + $0xc98] sm:$0xff]
        %v2346 = vld [vmem:[#allocation8 + $0xca0] sm:$0xff]
        %v2347 = vld [vmem:[#allocation8 + $0xca8] sm:$0xff]
        %v2348 = vld [vmem:[#allocation8 + $0xcb0] sm:$0xff]
        %v2349 = vld [vmem:[#allocation8 + $0xcb8] sm:$0xff]
        %v2350 = vld [vmem:[#allocation8 + $0xcc0] sm:$0xff]
        %v2351 = vld [vmem:[#allocation8 + $0xcc8] sm:$0xff]
        %v2352 = vld [vmem:[#allocation8 + $0xcd0] sm:$0xff]
        %v2353 = vld [vmem:[#allocation8 + $0xcd8] sm:$0xff]
        %v2354 = vld [vmem:[#allocation8 + $0xce0] sm:$0xff]
        %v2355 = vld [vmem:[#allocation8 + $0xce8] sm:$0xff]
        %v2356 = vld [vmem:[#allocation8 + $0xcf0] sm:$0xff]
        %v2357 = vld [vmem:[#allocation8 + $0xcf8] sm:$0xff]
        %v2358 = vld [vmem:[#allocation8 + $0xd00] sm:$0xff]
        %v2359 = vld [vmem:[#allocation8 + $0xd08] sm:$0xff]
        %v2360 = vld [vmem:[#allocation8 + $0xd10] sm:$0xff]
        %v2361 = vld [vmem:[#allocation8 + $0xd18] sm:$0xff]
        %v2362 = vld [vmem:[#allocation8 + $0xd20] sm:$0xff]
        %v2363 = vld [vmem:[#allocation8 + $0xd28] sm:$0xff]
        %v2364 = vld [vmem:[#allocation8 + $0xd30] sm:$0xff]
        %v2365 = vld [vmem:[#allocation8 + $0xd38] sm:$0xff]
        %v2366 = vld [vmem:[#allocation8 + $0xd40] sm:$0xff]
        %v2367 = vld [vmem:[#allocation8 + $0xd48] sm:$0xff]
        %v2368 = vld [vmem:[#allocation8 + $0xd50] sm:$0xff]
        %v2369 = vld [vmem:[#allocation8 + $0xd58] sm:$0xff]
        %v2370 = vld [vmem:[#allocation8 + $0xd60] sm:$0xff]
        %v2371 = vld [vmem:[#allocation8 + $0xd68] sm:$0xff]
        %v2372 = vld [vmem:[#allocation8 + $0xd70] sm:$0xff]
        %v2373 = vld [vmem:[#allocation8 + $0xd78] sm:$0xff]
        %v2374 = vld [vmem:[#allocation8 + $0xd80] sm:$0xff]
        %v2375 = vld [vmem:[#allocation8 + $0xd88] sm:$0xff]
        %v2376 = vld [vmem:[#allocation8 + $0xd90] sm:$0xff]
        %v2377 = vld [vmem:[#allocation8 + $0xd98] sm:$0xff]
        %v2378 = vld [vmem:[#allocation8 + $0xda0] sm:$0xff]
        %v2379 = vld [vmem:[#allocation8 + $0xda8] sm:$0xff]
        %v2380 = vld [vmem:[#allocation8 + $0xdb0] sm:$0xff]
        %v2381 = vld [vmem:[#allocation8 + $0xdb8] sm:$0xff]
        %v2382 = vld [vmem:[#allocation8 + $0xdc0] sm:$0xff]
        %v2383 = vld [vmem:[#allocation8 + $0xdc8] sm:$0xff]
        %v2384 = vld [vmem:[#allocation8 + $0xdd0] sm:$0xff]
        %v2385 = vld [vmem:[#allocation8 + $0xdd8] sm:$0xff]
        %v2386 = vld [vmem:[#allocation8 + $0xde0] sm:$0xff]
        %v2387 = vld [vmem:[#allocation8 + $0xde8] sm:$0xff]
        %v2388 = vld [vmem:[#allocation8 + $0xdf0] sm:$0xff]
        %v2389 = vld [vmem:[#allocation8 + $0xdf8] sm:$0xff]
        %v2390 = vld [vmem:[#allocation8 + $0xe00] sm:$0xff]
        %v2391 = vld [vmem:[#allocation8 + $0xe08] sm:$0xff]
        %v2392 = vld [vmem:[#allocation8 + $0xe10] sm:$0xff]
        %v2393 = vld [vmem:[#allocation8 + $0xe18] sm:$0xff]
        %v2394 = vld [vmem:[#allocation8 + $0xe20] sm:$0xff]
        %v2395 = vld [vmem:[#allocation8 + $0xe28] sm:$0xff]
        %v2396 = vld [vmem:[#allocation8 + $0xe30] sm:$0xff]
        %v2397 = vld [vmem:[#allocation8 + $0xe38] sm:$0xff]
        %v2398 = vld [vmem:[#allocation8 + $0xe40] sm:$0xff]
        %v2399 = vld [vmem:[#allocation8 + $0xe48] sm:$0xff]
        %v2400 = vld [vmem:[#allocation8 + $0xe50] sm:$0xff]
        %v2401 = vld [vmem:[#allocation8 + $0xe58] sm:$0xff]
        %v2402 = vld [vmem:[#allocation8 + $0xe60] sm:$0xff]
        %v2403 = vld [vmem:[#allocation8 + $0xe68] sm:$0xff]
        %v2404 = vld [vmem:[#allocation8 + $0xe70] sm:$0xff]
        %v2405 = vld [vmem:[#allocation8 + $0xe78] sm:$0xff]
        %v2406 = vld [vmem:[#allocation8 + $0xe80] sm:$0xff]
        %v2407 = vld [vmem:[#allocation8 + $0xe88] sm:$0xff]
        %v2408 = vld [vmem:[#allocation8 + $0xe90] sm:$0xff]
        %v2409 = vld [vmem:[#allocation8 + $0xe98] sm:$0xff]
        %v2410 = vld [vmem:[#allocation8 + $0xea0] sm:$0xff]
        %v2411 = vld [vmem:[#allocation8 + $0xea8] sm:$0xff]
        %v2412 = vld [vmem:[#allocation8 + $0xeb0] sm:$0xff]
        %v2413 = vld [vmem:[#allocation8 + $0xeb8] sm:$0xff]
        %v2414 = vld [vmem:[#allocation8 + $0xec0] sm:$0xff]
        %v2415 = vld [vmem:[#allocation8 + $0xec8] sm:$0xff]
        %v2416 = vld [vmem:[#allocation8 + $0xed0] sm:$0xff]
        %v2417 = vld [vmem:[#allocation8 + $0xed8] sm:$0xff]
        %v2418 = vld [vmem:[#allocation8 + $0xee0] sm:$0xff]
        %v2419 = vld [vmem:[#allocation8 + $0xee8] sm:$0xff]
        %v2420 = vld [vmem:[#allocation8 + $0xef0] sm:$0xff]
        %v2421 = vld [vmem:[#allocation8 + $0xef8] sm:$0xff]
        %v2422 = vld [vmem:[#allocation8 + $0xf00] sm:$0xff]
        %v2423 = vld [vmem:[#allocation8 + $0xf08] sm:$0xff]
        %v2424 = vld [vmem:[#allocation8 + $0xf10] sm:$0xff]
        %v2425 = vld [vmem:[#allocation8 + $0xf18] sm:$0xff]
        %v2426 = vld [vmem:[#allocation8 + $0xf20] sm:$0xff]
        %v2427 = vld [vmem:[#allocation8 + $0xf28] sm:$0xff]
        %v2428 = vld [vmem:[#allocation8 + $0xf30] sm:$0xff]
        %v2429 = vld [vmem:[#allocation8 + $0xf38] sm:$0xff]
        %v2430 = vld [vmem:[#allocation8 + $0xf40] sm:$0xff]
        %v2431 = vld [vmem:[#allocation8 + $0xf48] sm:$0xff]
        %v2432 = vld [vmem:[#allocation8 + $0xf50] sm:$0xff]
        %v2433 = vld [vmem:[#allocation8 + $0xf58] sm:$0xff]
        %v2434 = vld [vmem:[#allocation8 + $0xf60] sm:$0xff]
        %v2435 = vld [vmem:[#allocation8 + $0xf68] sm:$0xff]
        %v2436 = vld [vmem:[#allocation8 + $0xf70] sm:$0xff]
        %v2437 = vld [vmem:[#allocation8 + $0xf78] sm:$0xff]
        %v2438 = vld [vmem:[#allocation8 + $0xf80] sm:$0xff]
        %v2439 = vld [vmem:[#allocation8 + $0xf88] sm:$0xff]
        %v2440 = vld [vmem:[#allocation8 + $0xf90] sm:$0xff]
        %v2441 = vld [vmem:[#allocation8 + $0xf98] sm:$0xff]
        %v2442 = vld [vmem:[#allocation8 + $0xfa0] sm:$0xff]
        %v2443 = vld [vmem:[#allocation8 + $0xfa8] sm:$0xff]
        %v2444 = vld [vmem:[#allocation8 + $0xfb0] sm:$0xff]
        %v2445 = vld [vmem:[#allocation8 + $0xfb8] sm:$0xff]
        %v2446 = vld [vmem:[#allocation8 + $0xfc0] sm:$0xff]
        %v2447 = vld [vmem:[#allocation8 + $0xfc8] sm:$0xff]
        %v2448 = vld [vmem:[#allocation8 + $0xfd0] sm:$0xff]
        %v2449 = vld [vmem:[#allocation8 + $0xfd8] sm:$0xff]
        %v2450 = vld [vmem:[#allocation8 + $0xfe0] sm:$0xff]
        %v2451 = vld [vmem:[#allocation8 + $0xfe8] sm:$0xff]
        %v2452 = vld [vmem:[#allocation8 + $0xff0] sm:$0xff]
        %v2453 = vld [vmem:[#allocation8 + $0xff8] sm:$0xff]
        %v2456 = vunpack.c.l.b16 %v1940
        %v2457 = vunpack.c.h.b16 %v1940
        %v2458 = vunpack.c.l.b16 %v1941
        %v2459 = vunpack.c.h.b16 %v1941
        %v2460 = vpack.c.b16 %v2458, %v2456
        %v2461 = vpack.c.b16 %v2459, %v2457
        %v2976 = vunpack.c.l.b16 %v1942
        %v2977 = vunpack.c.h.b16 %v1942
        %v2978 = vunpack.c.l.b16 %v1943
        %v2979 = vunpack.c.h.b16 %v1943
        %v2980 = vunpack.c.l.b16 %v1944
        %v2981 = vunpack.c.h.b16 %v1944
        %v2982 = vunpack.c.l.b16 %v1945
        %v2983 = vunpack.c.h.b16 %v1945
        %v2984 = vunpack.c.l.b16 %v1946
        %v2985 = vunpack.c.h.b16 %v1946
        %v2986 = vunpack.c.l.b16 %v1947
        %v2987 = vunpack.c.h.b16 %v1947
        %v2988 = vunpack.c.l.b16 %v1948
        %v2989 = vunpack.c.h.b16 %v1948
        %v2990 = vunpack.c.l.b16 %v1949
        %v2991 = vunpack.c.h.b16 %v1949
        %v2992 = vunpack.c.l.b16 %v1950
        %v2993 = vunpack.c.h.b16 %v1950
        %v2994 = vunpack.c.l.b16 %v1951
        %v2995 = vunpack.c.h.b16 %v1951
        %v2996 = vunpack.c.l.b16 %v1952
        %v2997 = vunpack.c.h.b16 %v1952
        %v2998 = vunpack.c.l.b16 %v1953
        %v2999 = vunpack.c.h.b16 %v1953
        %v3000 = vunpack.c.l.b16 %v1954
        %v3001 = vunpack.c.h.b16 %v1954
        %v3002 = vunpack.c.l.b16 %v1955
        %v3003 = vunpack.c.h.b16 %v1955
        %v3004 = vunpack.c.l.b16 %v1956
        %v3005 = vunpack.c.h.b16 %v1956
        %v3006 = vunpack.c.l.b16 %v1957
        %v3007 = vunpack.c.h.b16 %v1957
        %v3008 = vunpack.c.l.b16 %v1958
        %v3009 = vunpack.c.h.b16 %v1958
        %v3010 = vunpack.c.l.b16 %v1959
        %v3011 = vunpack.c.h.b16 %v1959
        %v3012 = vunpack.c.l.b16 %v1960
        %v3013 = vunpack.c.h.b16 %v1960
        %v3014 = vunpack.c.l.b16 %v1961
        %v3015 = vunpack.c.h.b16 %v1961
        %v3016 = vunpack.c.l.b16 %v1962
        %v3017 = vunpack.c.h.b16 %v1962
        %v3018 = vunpack.c.l.b16 %v1963
        %v3019 = vunpack.c.h.b16 %v1963
        %v3020 = vunpack.c.l.b16 %v1964
        %v3021 = vunpack.c.h.b16 %v1964
        %v3022 = vunpack.c.l.b16 %v1965
        %v3023 = vunpack.c.h.b16 %v1965
        %v3024 = vunpack.c.l.b16 %v1966
        %v3025 = vunpack.c.h.b16 %v1966
        %v3026 = vunpack.c.l.b16 %v1967
        %v3027 = vunpack.c.h.b16 %v1967
        %v3028 = vunpack.c.l.b16 %v1968
        %v3029 = vunpack.c.h.b16 %v1968
        %v3030 = vunpack.c.l.b16 %v1969
        %v3031 = vunpack.c.h.b16 %v1969
        %v3032 = vunpack.c.l.b16 %v1970
        %v3033 = vunpack.c.h.b16 %v1970
        %v3034 = vunpack.c.l.b16 %v1971
        %v3035 = vunpack.c.h.b16 %v1971
        %v3036 = vunpack.c.l.b16 %v1972
        %v3037 = vunpack.c.h.b16 %v1972
        %v3038 = vunpack.c.l.b16 %v1973
        %v3039 = vunpack.c.h.b16 %v1973
        %v3040 = vunpack.c.l.b16 %v1974
        %v3041 = vunpack.c.h.b16 %v1974
        %v3042 = vunpack.c.l.b16 %v1975
        %v3043 = vunpack.c.h.b16 %v1975
        %v3044 = vunpack.c.l.b16 %v1976
        %v3045 = vunpack.c.h.b16 %v1976
        %v3046 = vunpack.c.l.b16 %v1977
        %v3047 = vunpack.c.h.b16 %v1977
        %v3048 = vunpack.c.l.b16 %v1978
        %v3049 = vunpack.c.h.b16 %v1978
        %v3050 = vunpack.c.l.b16 %v1979
        %v3051 = vunpack.c.h.b16 %v1979
        %v3052 = vunpack.c.l.b16 %v1980
        %v3053 = vunpack.c.h.b16 %v1980
        %v3054 = vunpack.c.l.b16 %v1981
        %v3055 = vunpack.c.h.b16 %v1981
        %v3056 = vunpack.c.l.b16 %v1982
        %v3057 = vunpack.c.h.b16 %v1982
        %v3058 = vunpack.c.l.b16 %v1983
        %v3059 = vunpack.c.h.b16 %v1983
        %v3060 = vunpack.c.l.b16 %v1984
        %v3061 = vunpack.c.h.b16 %v1984
        %v3062 = vunpack.c.l.b16 %v1985
        %v3063 = vunpack.c.h.b16 %v1985
        %v3064 = vunpack.c.l.b16 %v1986
        %v3065 = vunpack.c.h.b16 %v1986
        %v3066 = vunpack.c.l.b16 %v1987
        %v3067 = vunpack.c.h.b16 %v1987
        %v3068 = vunpack.c.l.b16 %v1988
        %v3069 = vunpack.c.h.b16 %v1988
        %v3070 = vunpack.c.l.b16 %v1989
        %v3071 = vunpack.c.h.b16 %v1989
        %v3072 = vunpack.c.l.b16 %v1990
        %v3073 = vunpack.c.h.b16 %v1990
        %v3074 = vunpack.c.l.b16 %v1991
        %v3075 = vunpack.c.h.b16 %v1991
        %v3076 = vunpack.c.l.b16 %v1992
        %v3077 = vunpack.c.h.b16 %v1992
        %v3078 = vunpack.c.l.b16 %v1993
        %v3079 = vunpack.c.h.b16 %v1993
        %v3080 = vunpack.c.l.b16 %v1994
        %v3081 = vunpack.c.h.b16 %v1994
        %v3082 = vunpack.c.l.b16 %v1995
        %v3083 = vunpack.c.h.b16 %v1995
        %v3084 = vunpack.c.l.b16 %v1996
        %v3085 = vunpack.c.h.b16 %v1996
        %v3086 = vunpack.c.l.b16 %v1997
        %v3087 = vunpack.c.h.b16 %v1997
        %v3088 = vunpack.c.l.b16 %v1998
        %v3089 = vunpack.c.h.b16 %v1998
        %v3090 = vunpack.c.l.b16 %v1999
        %v3091 = vunpack.c.h.b16 %v1999
        %v3092 = vunpack.c.l.b16 %v2000
        %v3093 = vunpack.c.h.b16 %v2000
        %v3094 = vunpack.c.l.b16 %v2001
        %v3095 = vunpack.c.h.b16 %v2001
        %v3096 = vunpack.c.l.b16 %v2002
        %v3097 = vunpack.c.h.b16 %v2002
        %v3098 = vunpack.c.l.b16 %v2003
        %v3099 = vunpack.c.h.b16 %v2003
        %v3100 = vunpack.c.l.b16 %v2004
        %v3101 = vunpack.c.h.b16 %v2004
        %v3102 = vunpack.c.l.b16 %v2005
        %v3103 = vunpack.c.h.b16 %v2005
        %v3104 = vunpack.c.l.b16 %v2006
        %v3105 = vunpack.c.h.b16 %v2006
        %v3106 = vunpack.c.l.b16 %v2007
        %v3107 = vunpack.c.h.b16 %v2007
        %v3108 = vunpack.c.l.b16 %v2008
        %v3109 = vunpack.c.h.b16 %v2008
        %v3110 = vunpack.c.l.b16 %v2009
        %v3111 = vunpack.c.h.b16 %v2009
        %v3112 = vunpack.c.l.b16 %v2010
        %v3113 = vunpack.c.h.b16 %v2010
        %v3114 = vunpack.c.l.b16 %v2011
        %v3115 = vunpack.c.h.b16 %v2011
        %v3116 = vunpack.c.l.b16 %v2012
        %v3117 = vunpack.c.h.b16 %v2012
        %v3118 = vunpack.c.l.b16 %v2013
        %v3119 = vunpack.c.h.b16 %v2013
        %v3120 = vunpack.c.l.b16 %v2014
        %v3121 = vunpack.c.h.b16 %v2014
        %v3122 = vunpack.c.l.b16 %v2015
        %v3123 = vunpack.c.h.b16 %v2015
        %v3124 = vunpack.c.l.b16 %v2016
        %v3125 = vunpack.c.h.b16 %v2016
        %v3126 = vunpack.c.l.b16 %v2017
        %v3127 = vunpack.c.h.b16 %v2017
        %v3128 = vunpack.c.l.b16 %v2018
        %v3129 = vunpack.c.h.b16 %v2018
        %v3130 = vunpack.c.l.b16 %v2019
        %v3131 = vunpack.c.h.b16 %v2019
        %v3132 = vunpack.c.l.b16 %v2020
        %v3133 = vunpack.c.h.b16 %v2020
        %v3134 = vunpack.c.l.b16 %v2021
        %v3135 = vunpack.c.h.b16 %v2021
        %v3136 = vunpack.c.l.b16 %v2022
        %v3137 = vunpack.c.h.b16 %v2022
        %v3138 = vunpack.c.l.b16 %v2023
        %v3139 = vunpack.c.h.b16 %v2023
        %v3140 = vunpack.c.l.b16 %v2024
        %v3141 = vunpack.c.h.b16 %v2024
        %v3142 = vunpack.c.l.b16 %v2025
        %v3143 = vunpack.c.h.b16 %v2025
        %v3144 = vunpack.c.l.b16 %v2026
        %v3145 = vunpack.c.h.b16 %v2026
        %v3146 = vunpack.c.l.b16 %v2027
        %v3147 = vunpack.c.h.b16 %v2027
        %v3148 = vunpack.c.l.b16 %v2028
        %v3149 = vunpack.c.h.b16 %v2028
        %v3150 = vunpack.c.l.b16 %v2029
        %v3151 = vunpack.c.h.b16 %v2029
        %v3152 = vunpack.c.l.b16 %v2030
        %v3153 = vunpack.c.h.b16 %v2030
        %v3154 = vunpack.c.l.b16 %v2031
        %v3155 = vunpack.c.h.b16 %v2031
        %v3156 = vunpack.c.l.b16 %v2032
        %v3157 = vunpack.c.h.b16 %v2032
        %v3158 = vunpack.c.l.b16 %v2033
        %v3159 = vunpack.c.h.b16 %v2033
        %v3160 = vunpack.c.l.b16 %v2034
        %v3161 = vunpack.c.h.b16 %v2034
        %v3162 = vunpack.c.l.b16 %v2035
        %v3163 = vunpack.c.h.b16 %v2035
        %v3164 = vunpack.c.l.b16 %v2036
        %v3165 = vunpack.c.h.b16 %v2036
        %v3166 = vunpack.c.l.b16 %v2037
        %v3167 = vunpack.c.h.b16 %v2037
        %v3168 = vunpack.c.l.b16 %v2038
        %v3169 = vunpack.c.h.b16 %v2038
        %v3170 = vunpack.c.l.b16 %v2039
        %v3171 = vunpack.c.h.b16 %v2039
        %v3172 = vunpack.c.l.b16 %v2040
        %v3173 = vunpack.c.h.b16 %v2040
        %v3174 = vunpack.c.l.b16 %v2041
        %v3175 = vunpack.c.h.b16 %v2041
        %v3176 = vunpack.c.l.b16 %v2042
        %v3177 = vunpack.c.h.b16 %v2042
        %v3178 = vunpack.c.l.b16 %v2043
        %v3179 = vunpack.c.h.b16 %v2043
        %v3180 = vunpack.c.l.b16 %v2044
        %v3181 = vunpack.c.h.b16 %v2044
        %v3182 = vunpack.c.l.b16 %v2045
        %v3183 = vunpack.c.h.b16 %v2045
        %v3184 = vunpack.c.l.b16 %v2046
        %v3185 = vunpack.c.h.b16 %v2046
        %v3186 = vunpack.c.l.b16 %v2047
        %v3187 = vunpack.c.h.b16 %v2047
        %v3188 = vunpack.c.l.b16 %v2048
        %v3189 = vunpack.c.h.b16 %v2048
        %v3190 = vunpack.c.l.b16 %v2049
        %v3191 = vunpack.c.h.b16 %v2049
        %v3192 = vunpack.c.l.b16 %v2050
        %v3193 = vunpack.c.h.b16 %v2050
        %v3194 = vunpack.c.l.b16 %v2051
        %v3195 = vunpack.c.h.b16 %v2051
        %v3196 = vunpack.c.l.b16 %v2052
        %v3197 = vunpack.c.h.b16 %v2052
        %v3198 = vunpack.c.l.b16 %v2053
        %v3199 = vunpack.c.h.b16 %v2053
        %v3200 = vunpack.c.l.b16 %v2054
        %v3201 = vunpack.c.h.b16 %v2054
        %v3202 = vunpack.c.l.b16 %v2055
        %v3203 = vunpack.c.h.b16 %v2055
        %v3204 = vunpack.c.l.b16 %v2056
        %v3205 = vunpack.c.h.b16 %v2056
        %v3206 = vunpack.c.l.b16 %v2057
        %v3207 = vunpack.c.h.b16 %v2057
        %v3208 = vunpack.c.l.b16 %v2058
        %v3209 = vunpack.c.h.b16 %v2058
        %v3210 = vunpack.c.l.b16 %v2059
        %v3211 = vunpack.c.h.b16 %v2059
        %v3212 = vunpack.c.l.b16 %v2060
        %v3213 = vunpack.c.h.b16 %v2060
        %v3214 = vunpack.c.l.b16 %v2061
        %v3215 = vunpack.c.h.b16 %v2061
        %v3216 = vunpack.c.l.b16 %v2062
        %v3217 = vunpack.c.h.b16 %v2062
        %v3218 = vunpack.c.l.b16 %v2063
        %v3219 = vunpack.c.h.b16 %v2063
        %v3220 = vunpack.c.l.b16 %v2064
        %v3221 = vunpack.c.h.b16 %v2064
        %v3222 = vunpack.c.l.b16 %v2065
        %v3223 = vunpack.c.h.b16 %v2065
        %v3224 = vunpack.c.l.b16 %v2066
        %v3225 = vunpack.c.h.b16 %v2066
        %v3226 = vunpack.c.l.b16 %v2067
        %v3227 = vunpack.c.h.b16 %v2067
        %v3228 = vunpack.c.l.b16 %v2068
        %v3229 = vunpack.c.h.b16 %v2068
        %v3230 = vunpack.c.l.b16 %v2069
        %v3231 = vunpack.c.h.b16 %v2069
        %v3232 = vunpack.c.l.b16 %v2070
        %v3233 = vunpack.c.h.b16 %v2070
        %v3234 = vunpack.c.l.b16 %v2071
        %v3235 = vunpack.c.h.b16 %v2071
        %v3236 = vunpack.c.l.b16 %v2072
        %v3237 = vunpack.c.h.b16 %v2072
        %v3238 = vunpack.c.l.b16 %v2073
        %v3239 = vunpack.c.h.b16 %v2073
        %v3240 = vunpack.c.l.b16 %v2074
        %v3241 = vunpack.c.h.b16 %v2074
        %v3242 = vunpack.c.l.b16 %v2075
        %v3243 = vunpack.c.h.b16 %v2075
        %v3244 = vunpack.c.l.b16 %v2076
        %v3245 = vunpack.c.h.b16 %v2076
        %v3246 = vunpack.c.l.b16 %v2077
        %v3247 = vunpack.c.h.b16 %v2077
        %v3248 = vunpack.c.l.b16 %v2078
        %v3249 = vunpack.c.h.b16 %v2078
        %v3250 = vunpack.c.l.b16 %v2079
        %v3251 = vunpack.c.h.b16 %v2079
        %v3252 = vunpack.c.l.b16 %v2080
        %v3253 = vunpack.c.h.b16 %v2080
        %v3254 = vunpack.c.l.b16 %v2081
        %v3255 = vunpack.c.h.b16 %v2081
        %v3256 = vunpack.c.l.b16 %v2082
        %v3257 = vunpack.c.h.b16 %v2082
        %v3258 = vunpack.c.l.b16 %v2083
        %v3259 = vunpack.c.h.b16 %v2083
        %v3260 = vunpack.c.l.b16 %v2084
        %v3261 = vunpack.c.h.b16 %v2084
        %v3262 = vunpack.c.l.b16 %v2085
        %v3263 = vunpack.c.h.b16 %v2085
        %v3264 = vunpack.c.l.b16 %v2086
        %v3265 = vunpack.c.h.b16 %v2086
        %v3266 = vunpack.c.l.b16 %v2087
        %v3267 = vunpack.c.h.b16 %v2087
        %v3268 = vunpack.c.l.b16 %v2088
        %v3269 = vunpack.c.h.b16 %v2088
        %v3270 = vunpack.c.l.b16 %v2089
        %v3271 = vunpack.c.h.b16 %v2089
        %v3272 = vunpack.c.l.b16 %v2090
        %v3273 = vunpack.c.h.b16 %v2090
        %v3274 = vunpack.c.l.b16 %v2091
        %v3275 = vunpack.c.h.b16 %v2091
        %v3276 = vunpack.c.l.b16 %v2092
        %v3277 = vunpack.c.h.b16 %v2092
        %v3278 = vunpack.c.l.b16 %v2093
        %v3279 = vunpack.c.h.b16 %v2093
        %v3280 = vunpack.c.l.b16 %v2094
        %v3281 = vunpack.c.h.b16 %v2094
        %v3282 = vunpack.c.l.b16 %v2095
        %v3283 = vunpack.c.h.b16 %v2095
        %v3284 = vunpack.c.l.b16 %v2096
        %v3285 = vunpack.c.h.b16 %v2096
        %v3286 = vunpack.c.l.b16 %v2097
        %v3287 = vunpack.c.h.b16 %v2097
        %v3288 = vunpack.c.l.b16 %v2098
        %v3289 = vunpack.c.h.b16 %v2098
        %v3290 = vunpack.c.l.b16 %v2099
        %v3291 = vunpack.c.h.b16 %v2099
        %v3292 = vunpack.c.l.b16 %v2100
        %v3293 = vunpack.c.h.b16 %v2100
        %v3294 = vunpack.c.l.b16 %v2101
        %v3295 = vunpack.c.h.b16 %v2101
        %v3296 = vunpack.c.l.b16 %v2102
        %v3297 = vunpack.c.h.b16 %v2102
        %v3298 = vunpack.c.l.b16 %v2103
        %v3299 = vunpack.c.h.b16 %v2103
        %v3300 = vunpack.c.l.b16 %v2104
        %v3301 = vunpack.c.h.b16 %v2104
        %v3302 = vunpack.c.l.b16 %v2105
        %v3303 = vunpack.c.h.b16 %v2105
        %v3304 = vunpack.c.l.b16 %v2106
        %v3305 = vunpack.c.h.b16 %v2106
        %v3306 = vunpack.c.l.b16 %v2107
        %v3307 = vunpack.c.h.b16 %v2107
        %v3308 = vunpack.c.l.b16 %v2108
        %v3309 = vunpack.c.h.b16 %v2108
        %v3310 = vunpack.c.l.b16 %v2109
        %v3311 = vunpack.c.h.b16 %v2109
        %v3312 = vunpack.c.l.b16 %v2110
        %v3313 = vunpack.c.h.b16 %v2110
        %v3314 = vunpack.c.l.b16 %v2111
        %v3315 = vunpack.c.h.b16 %v2111
        %v3316 = vunpack.c.l.b16 %v2112
        %v3317 = vunpack.c.h.b16 %v2112
        %v3318 = vunpack.c.l.b16 %v2113
        %v3319 = vunpack.c.h.b16 %v2113
        %v3320 = vunpack.c.l.b16 %v2114
        %v3321 = vunpack.c.h.b16 %v2114
        %v3322 = vunpack.c.l.b16 %v2115
        %v3323 = vunpack.c.h.b16 %v2115
        %v3324 = vunpack.c.l.b16 %v2116
        %v3325 = vunpack.c.h.b16 %v2116
        %v3326 = vunpack.c.l.b16 %v2117
        %v3327 = vunpack.c.h.b16 %v2117
        %v3328 = vunpack.c.l.b16 %v2118
        %v3329 = vunpack.c.h.b16 %v2118
        %v3330 = vunpack.c.l.b16 %v2119
        %v3331 = vunpack.c.h.b16 %v2119
        %v3332 = vunpack.c.l.b16 %v2120
        %v3333 = vunpack.c.h.b16 %v2120
        %v3334 = vunpack.c.l.b16 %v2121
        %v3335 = vunpack.c.h.b16 %v2121
        %v3336 = vunpack.c.l.b16 %v2122
        %v3337 = vunpack.c.h.b16 %v2122
        %v3338 = vunpack.c.l.b16 %v2123
        %v3339 = vunpack.c.h.b16 %v2123
        %v3340 = vunpack.c.l.b16 %v2124
        %v3341 = vunpack.c.h.b16 %v2124
        %v3342 = vunpack.c.l.b16 %v2125
        %v3343 = vunpack.c.h.b16 %v2125
        %v3344 = vunpack.c.l.b16 %v2126
        %v3345 = vunpack.c.h.b16 %v2126
        %v3346 = vunpack.c.l.b16 %v2127
        %v3347 = vunpack.c.h.b16 %v2127
        %v3348 = vunpack.c.l.b16 %v2128
        %v3349 = vunpack.c.h.b16 %v2128
        %v3350 = vunpack.c.l.b16 %v2129
        %v3351 = vunpack.c.h.b16 %v2129
        %v3352 = vunpack.c.l.b16 %v2130
        %v3353 = vunpack.c.h.b16 %v2130
        %v3354 = vunpack.c.l.b16 %v2131
        %v3355 = vunpack.c.h.b16 %v2131
        %v3356 = vunpack.c.l.b16 %v2132
        %v3357 = vunpack.c.h.b16 %v2132
        %v3358 = vunpack.c.l.b16 %v2133
        %v3359 = vunpack.c.h.b16 %v2133
        %v3360 = vunpack.c.l.b16 %v2134
        %v3361 = vunpack.c.h.b16 %v2134
        %v3362 = vunpack.c.l.b16 %v2135
        %v3363 = vunpack.c.h.b16 %v2135
        %v3364 = vunpack.c.l.b16 %v2136
        %v3365 = vunpack.c.h.b16 %v2136
        %v3366 = vunpack.c.l.b16 %v2137
        %v3367 = vunpack.c.h.b16 %v2137
        %v3368 = vunpack.c.l.b16 %v2138
        %v3369 = vunpack.c.h.b16 %v2138
        %v3370 = vunpack.c.l.b16 %v2139
        %v3371 = vunpack.c.h.b16 %v2139
        %v3372 = vunpack.c.l.b16 %v2140
        %v3373 = vunpack.c.h.b16 %v2140
        %v3374 = vunpack.c.l.b16 %v2141
        %v3375 = vunpack.c.h.b16 %v2141
        %v3376 = vunpack.c.l.b16 %v2142
        %v3377 = vunpack.c.h.b16 %v2142
        %v3378 = vunpack.c.l.b16 %v2143
        %v3379 = vunpack.c.h.b16 %v2143
        %v3380 = vunpack.c.l.b16 %v2144
        %v3381 = vunpack.c.h.b16 %v2144
        %v3382 = vunpack.c.l.b16 %v2145
        %v3383 = vunpack.c.h.b16 %v2145
        %v3384 = vunpack.c.l.b16 %v2146
        %v3385 = vunpack.c.h.b16 %v2146
        %v3386 = vunpack.c.l.b16 %v2147
        %v3387 = vunpack.c.h.b16 %v2147
        %v3388 = vunpack.c.l.b16 %v2148
        %v3389 = vunpack.c.h.b16 %v2148
        %v3390 = vunpack.c.l.b16 %v2149
        %v3391 = vunpack.c.h.b16 %v2149
        %v3392 = vunpack.c.l.b16 %v2150
        %v3393 = vunpack.c.h.b16 %v2150
        %v3394 = vunpack.c.l.b16 %v2151
        %v3395 = vunpack.c.h.b16 %v2151
        %v3396 = vunpack.c.l.b16 %v2152
        %v3397 = vunpack.c.h.b16 %v2152
        %v3398 = vunpack.c.l.b16 %v2153
        %v3399 = vunpack.c.h.b16 %v2153
        %v3400 = vunpack.c.l.b16 %v2154
        %v3401 = vunpack.c.h.b16 %v2154
        %v3402 = vunpack.c.l.b16 %v2155
        %v3403 = vunpack.c.h.b16 %v2155
        %v3404 = vunpack.c.l.b16 %v2156
        %v3405 = vunpack.c.h.b16 %v2156
        %v3406 = vunpack.c.l.b16 %v2157
        %v3407 = vunpack.c.h.b16 %v2157
        %v3408 = vunpack.c.l.b16 %v2158
        %v3409 = vunpack.c.h.b16 %v2158
        %v3410 = vunpack.c.l.b16 %v2159
        %v3411 = vunpack.c.h.b16 %v2159
        %v3412 = vunpack.c.l.b16 %v2160
        %v3413 = vunpack.c.h.b16 %v2160
        %v3414 = vunpack.c.l.b16 %v2161
        %v3415 = vunpack.c.h.b16 %v2161
        %v3416 = vunpack.c.l.b16 %v2162
        %v3417 = vunpack.c.h.b16 %v2162
        %v3418 = vunpack.c.l.b16 %v2163
        %v3419 = vunpack.c.h.b16 %v2163
        %v3420 = vunpack.c.l.b16 %v2164
        %v3421 = vunpack.c.h.b16 %v2164
        %v3422 = vunpack.c.l.b16 %v2165
        %v3423 = vunpack.c.h.b16 %v2165
        %v3424 = vunpack.c.l.b16 %v2166
        %v3425 = vunpack.c.h.b16 %v2166
        %v3426 = vunpack.c.l.b16 %v2167
        %v3427 = vunpack.c.h.b16 %v2167
        %v3428 = vunpack.c.l.b16 %v2168
        %v3429 = vunpack.c.h.b16 %v2168
        %v3430 = vunpack.c.l.b16 %v2169
        %v3431 = vunpack.c.h.b16 %v2169
        %v3432 = vunpack.c.l.b16 %v2170
        %v3433 = vunpack.c.h.b16 %v2170
        %v3434 = vunpack.c.l.b16 %v2171
        %v3435 = vunpack.c.h.b16 %v2171
        %v3436 = vunpack.c.l.b16 %v2172
        %v3437 = vunpack.c.h.b16 %v2172
        %v3438 = vunpack.c.l.b16 %v2173
        %v3439 = vunpack.c.h.b16 %v2173
        %v3440 = vunpack.c.l.b16 %v2174
        %v3441 = vunpack.c.h.b16 %v2174
        %v3442 = vunpack.c.l.b16 %v2175
        %v3443 = vunpack.c.h.b16 %v2175
        %v3444 = vunpack.c.l.b16 %v2176
        %v3445 = vunpack.c.h.b16 %v2176
        %v3446 = vunpack.c.l.b16 %v2177
        %v3447 = vunpack.c.h.b16 %v2177
        %v3448 = vunpack.c.l.b16 %v2178
        %v3449 = vunpack.c.h.b16 %v2178
        %v3450 = vunpack.c.l.b16 %v2179
        %v3451 = vunpack.c.h.b16 %v2179
        %v3452 = vunpack.c.l.b16 %v2180
        %v3453 = vunpack.c.h.b16 %v2180
        %v3454 = vunpack.c.l.b16 %v2181
        %v3455 = vunpack.c.h.b16 %v2181
        %v3456 = vunpack.c.l.b16 %v2182
        %v3457 = vunpack.c.h.b16 %v2182
        %v3458 = vunpack.c.l.b16 %v2183
        %v3459 = vunpack.c.h.b16 %v2183
        %v3460 = vunpack.c.l.b16 %v2184
        %v3461 = vunpack.c.h.b16 %v2184
        %v3462 = vunpack.c.l.b16 %v2185
        %v3463 = vunpack.c.h.b16 %v2185
        %v3464 = vunpack.c.l.b16 %v2186
        %v3465 = vunpack.c.h.b16 %v2186
        %v3466 = vunpack.c.l.b16 %v2187
        %v3467 = vunpack.c.h.b16 %v2187
        %v3468 = vunpack.c.l.b16 %v2188
        %v3469 = vunpack.c.h.b16 %v2188
        %v3470 = vunpack.c.l.b16 %v2189
        %v3471 = vunpack.c.h.b16 %v2189
        %v3472 = vunpack.c.l.b16 %v2190
        %v3473 = vunpack.c.h.b16 %v2190
        %v3474 = vunpack.c.l.b16 %v2191
        %v3475 = vunpack.c.h.b16 %v2191
        %v3476 = vunpack.c.l.b16 %v2192
        %v3477 = vunpack.c.h.b16 %v2192
        %v3478 = vunpack.c.l.b16 %v2193
        %v3479 = vunpack.c.h.b16 %v2193
        %v3480 = vunpack.c.l.b16 %v2194
        %v3481 = vunpack.c.h.b16 %v2194
        %v3482 = vunpack.c.l.b16 %v2195
        %v3483 = vunpack.c.h.b16 %v2195
        %v3484 = vunpack.c.l.b16 %v2196
        %v3485 = vunpack.c.h.b16 %v2196
        %v3486 = vunpack.c.l.b16 %v2197
        %v3487 = vunpack.c.h.b16 %v2197
        %v3488 = vunpack.c.l.b16 %v2198
        %v3489 = vunpack.c.h.b16 %v2198
        %v3490 = vunpack.c.l.b16 %v2199
        %v3491 = vunpack.c.h.b16 %v2199
        %v3492 = vunpack.c.l.b16 %v2200
        %v3493 = vunpack.c.h.b16 %v2200
        %v3494 = vunpack.c.l.b16 %v2201
        %v3495 = vunpack.c.h.b16 %v2201
        %v3496 = vunpack.c.l.b16 %v2202
        %v3497 = vunpack.c.h.b16 %v2202
        %v3498 = vunpack.c.l.b16 %v2203
        %v3499 = vunpack.c.h.b16 %v2203
        %v3500 = vunpack.c.l.b16 %v2204
        %v3501 = vunpack.c.h.b16 %v2204
        %v3502 = vunpack.c.l.b16 %v2205
        %v3503 = vunpack.c.h.b16 %v2205
        %v3504 = vunpack.c.l.b16 %v2206
        %v3505 = vunpack.c.h.b16 %v2206
        %v3506 = vunpack.c.l.b16 %v2207
        %v3507 = vunpack.c.h.b16 %v2207
        %v3508 = vunpack.c.l.b16 %v2208
        %v3509 = vunpack.c.h.b16 %v2208
        %v3510 = vunpack.c.l.b16 %v2209
        %v3511 = vunpack.c.h.b16 %v2209
        %v3512 = vunpack.c.l.b16 %v2210
        %v3513 = vunpack.c.h.b16 %v2210
        %v3514 = vunpack.c.l.b16 %v2211
        %v3515 = vunpack.c.h.b16 %v2211
        %v3516 = vunpack.c.l.b16 %v2212
        %v3517 = vunpack.c.h.b16 %v2212
        %v3518 = vunpack.c.l.b16 %v2213
        %v3519 = vunpack.c.h.b16 %v2213
        %v3520 = vunpack.c.l.b16 %v2214
        %v3521 = vunpack.c.h.b16 %v2214
        %v3522 = vunpack.c.l.b16 %v2215
        %v3523 = vunpack.c.h.b16 %v2215
        %v3524 = vunpack.c.l.b16 %v2216
        %v3525 = vunpack.c.h.b16 %v2216
        %v3526 = vunpack.c.l.b16 %v2217
        %v3527 = vunpack.c.h.b16 %v2217
        %v3528 = vunpack.c.l.b16 %v2218
        %v3529 = vunpack.c.h.b16 %v2218
        %v3530 = vunpack.c.l.b16 %v2219
        %v3531 = vunpack.c.h.b16 %v2219
        %v3532 = vunpack.c.l.b16 %v2220
        %v3533 = vunpack.c.h.b16 %v2220
        %v3534 = vunpack.c.l.b16 %v2221
        %v3535 = vunpack.c.h.b16 %v2221
        %v3536 = vunpack.c.l.b16 %v2222
        %v3537 = vunpack.c.h.b16 %v2222
        %v3538 = vunpack.c.l.b16 %v2223
        %v3539 = vunpack.c.h.b16 %v2223
        %v3540 = vunpack.c.l.b16 %v2224
        %v3541 = vunpack.c.h.b16 %v2224
        %v3542 = vunpack.c.l.b16 %v2225
        %v3543 = vunpack.c.h.b16 %v2225
        %v3544 = vunpack.c.l.b16 %v2226
        %v3545 = vunpack.c.h.b16 %v2226
        %v3546 = vunpack.c.l.b16 %v2227
        %v3547 = vunpack.c.h.b16 %v2227
        %v3548 = vunpack.c.l.b16 %v2228
        %v3549 = vunpack.c.h.b16 %v2228
        %v3550 = vunpack.c.l.b16 %v2229
        %v3551 = vunpack.c.h.b16 %v2229
        %v3552 = vunpack.c.l.b16 %v2230
        %v3553 = vunpack.c.h.b16 %v2230
        %v3554 = vunpack.c.l.b16 %v2231
        %v3555 = vunpack.c.h.b16 %v2231
        %v3556 = vunpack.c.l.b16 %v2232
        %v3557 = vunpack.c.h.b16 %v2232
        %v3558 = vunpack.c.l.b16 %v2233
        %v3559 = vunpack.c.h.b16 %v2233
        %v3560 = vunpack.c.l.b16 %v2234
        %v3561 = vunpack.c.h.b16 %v2234
        %v3562 = vunpack.c.l.b16 %v2235
        %v3563 = vunpack.c.h.b16 %v2235
        %v3564 = vunpack.c.l.b16 %v2236
        %v3565 = vunpack.c.h.b16 %v2236
        %v3566 = vunpack.c.l.b16 %v2237
        %v3567 = vunpack.c.h.b16 %v2237
        %v3568 = vunpack.c.l.b16 %v2238
        %v3569 = vunpack.c.h.b16 %v2238
        %v3570 = vunpack.c.l.b16 %v2239
        %v3571 = vunpack.c.h.b16 %v2239
        %v3572 = vunpack.c.l.b16 %v2240
        %v3573 = vunpack.c.h.b16 %v2240
        %v3574 = vunpack.c.l.b16 %v2241
        %v3575 = vunpack.c.h.b16 %v2241
        %v3576 = vunpack.c.l.b16 %v2242
        %v3577 = vunpack.c.h.b16 %v2242
        %v3578 = vunpack.c.l.b16 %v2243
        %v3579 = vunpack.c.h.b16 %v2243
        %v3580 = vunpack.c.l.b16 %v2244
        %v3581 = vunpack.c.h.b16 %v2244
        %v3582 = vunpack.c.l.b16 %v2245
        %v3583 = vunpack.c.h.b16 %v2245
        %v3584 = vunpack.c.l.b16 %v2246
        %v3585 = vunpack.c.h.b16 %v2246
        %v3586 = vunpack.c.l.b16 %v2247
        %v3587 = vunpack.c.h.b16 %v2247
        %v3588 = vunpack.c.l.b16 %v2248
        %v3589 = vunpack.c.h.b16 %v2248
        %v3590 = vunpack.c.l.b16 %v2249
        %v3591 = vunpack.c.h.b16 %v2249
        %v3592 = vunpack.c.l.b16 %v2250
        %v3593 = vunpack.c.h.b16 %v2250
        %v3594 = vunpack.c.l.b16 %v2251
        %v3595 = vunpack.c.h.b16 %v2251
        %v3596 = vunpack.c.l.b16 %v2252
        %v3597 = vunpack.c.h.b16 %v2252
        %v3598 = vunpack.c.l.b16 %v2253
        %v3599 = vunpack.c.h.b16 %v2253
        %v3600 = vunpack.c.l.b16 %v2254
        %v3601 = vunpack.c.h.b16 %v2254
        %v3602 = vunpack.c.l.b16 %v2255
        %v3603 = vunpack.c.h.b16 %v2255
        %v3604 = vunpack.c.l.b16 %v2256
        %v3605 = vunpack.c.h.b16 %v2256
        %v3606 = vunpack.c.l.b16 %v2257
        %v3607 = vunpack.c.h.b16 %v2257
        %v3608 = vunpack.c.l.b16 %v2258
        %v3609 = vunpack.c.h.b16 %v2258
        %v3610 = vunpack.c.l.b16 %v2259
        %v3611 = vunpack.c.h.b16 %v2259
        %v3612 = vunpack.c.l.b16 %v2260
        %v3613 = vunpack.c.h.b16 %v2260
        %v3614 = vunpack.c.l.b16 %v2261
        %v3615 = vunpack.c.h.b16 %v2261
        %v3616 = vunpack.c.l.b16 %v2262
        %v3617 = vunpack.c.h.b16 %v2262
        %v3618 = vunpack.c.l.b16 %v2263
        %v3619 = vunpack.c.h.b16 %v2263
        %v3620 = vunpack.c.l.b16 %v2264
        %v3621 = vunpack.c.h.b16 %v2264
        %v3622 = vunpack.c.l.b16 %v2265
        %v3623 = vunpack.c.h.b16 %v2265
        %v3624 = vunpack.c.l.b16 %v2266
        %v3625 = vunpack.c.h.b16 %v2266
        %v3626 = vunpack.c.l.b16 %v2267
        %v3627 = vunpack.c.h.b16 %v2267
        %v3628 = vunpack.c.l.b16 %v2268
        %v3629 = vunpack.c.h.b16 %v2268
        %v3630 = vunpack.c.l.b16 %v2269
        %v3631 = vunpack.c.h.b16 %v2269
        %v3632 = vunpack.c.l.b16 %v2270
        %v3633 = vunpack.c.h.b16 %v2270
        %v3634 = vunpack.c.l.b16 %v2271
        %v3635 = vunpack.c.h.b16 %v2271
        %v3636 = vunpack.c.l.b16 %v2272
        %v3637 = vunpack.c.h.b16 %v2272
        %v3638 = vunpack.c.l.b16 %v2273
        %v3639 = vunpack.c.h.b16 %v2273
        %v3640 = vunpack.c.l.b16 %v2274
        %v3641 = vunpack.c.h.b16 %v2274
        %v3642 = vunpack.c.l.b16 %v2275
        %v3643 = vunpack.c.h.b16 %v2275
        %v3644 = vunpack.c.l.b16 %v2276
        %v3645 = vunpack.c.h.b16 %v2276
        %v3646 = vunpack.c.l.b16 %v2277
        %v3647 = vunpack.c.h.b16 %v2277
        %v3648 = vunpack.c.l.b16 %v2278
        %v3649 = vunpack.c.h.b16 %v2278
        %v3650 = vunpack.c.l.b16 %v2279
        %v3651 = vunpack.c.h.b16 %v2279
        %v3652 = vunpack.c.l.b16 %v2280
        %v3653 = vunpack.c.h.b16 %v2280
        %v3654 = vunpack.c.l.b16 %v2281
        %v3655 = vunpack.c.h.b16 %v2281
        %v3656 = vunpack.c.l.b16 %v2282
        %v3657 = vunpack.c.h.b16 %v2282
        %v3658 = vunpack.c.l.b16 %v2283
        %v3659 = vunpack.c.h.b16 %v2283
        %v3660 = vunpack.c.l.b16 %v2284
        %v3661 = vunpack.c.h.b16 %v2284
        %v3662 = vunpack.c.l.b16 %v2285
        %v3663 = vunpack.c.h.b16 %v2285
        %v3664 = vunpack.c.l.b16 %v2286
        %v3665 = vunpack.c.h.b16 %v2286
        %v3666 = vunpack.c.l.b16 %v2287
        %v3667 = vunpack.c.h.b16 %v2287
        %v3668 = vunpack.c.l.b16 %v2288
        %v3669 = vunpack.c.h.b16 %v2288
        %v3670 = vunpack.c.l.b16 %v2289
        %v3671 = vunpack.c.h.b16 %v2289
        %v3672 = vunpack.c.l.b16 %v2290
        %v3673 = vunpack.c.h.b16 %v2290
        %v3674 = vunpack.c.l.b16 %v2291
        %v3675 = vunpack.c.h.b16 %v2291
        %v3676 = vunpack.c.l.b16 %v2292
        %v3677 = vunpack.c.h.b16 %v2292
        %v3678 = vunpack.c.l.b16 %v2293
        %v3679 = vunpack.c.h.b16 %v2293
        %v3680 = vunpack.c.l.b16 %v2294
        %v3681 = vunpack.c.h.b16 %v2294
        %v3682 = vunpack.c.l.b16 %v2295
        %v3683 = vunpack.c.h.b16 %v2295
        %v3684 = vunpack.c.l.b16 %v2296
        %v3685 = vunpack.c.h.b16 %v2296
        %v3686 = vunpack.c.l.b16 %v2297
        %v3687 = vunpack.c.h.b16 %v2297
        %v3688 = vunpack.c.l.b16 %v2298
        %v3689 = vunpack.c.h.b16 %v2298
        %v3690 = vunpack.c.l.b16 %v2299
        %v3691 = vunpack.c.h.b16 %v2299
        %v3692 = vunpack.c.l.b16 %v2300
        %v3693 = vunpack.c.h.b16 %v2300
        %v3694 = vunpack.c.l.b16 %v2301
        %v3695 = vunpack.c.h.b16 %v2301
        %v3696 = vunpack.c.l.b16 %v2302
        %v3697 = vunpack.c.h.b16 %v2302
        %v3698 = vunpack.c.l.b16 %v2303
        %v3699 = vunpack.c.h.b16 %v2303
        %v3700 = vunpack.c.l.b16 %v2304
        %v3701 = vunpack.c.h.b16 %v2304
        %v3702 = vunpack.c.l.b16 %v2305
        %v3703 = vunpack.c.h.b16 %v2305
        %v3704 = vunpack.c.l.b16 %v2306
        %v3705 = vunpack.c.h.b16 %v2306
        %v3706 = vunpack.c.l.b16 %v2307
        %v3707 = vunpack.c.h.b16 %v2307
        %v3708 = vunpack.c.l.b16 %v2308
        %v3709 = vunpack.c.h.b16 %v2308
        %v3710 = vunpack.c.l.b16 %v2309
        %v3711 = vunpack.c.h.b16 %v2309
        %v3712 = vunpack.c.l.b16 %v2310
        %v3713 = vunpack.c.h.b16 %v2310
        %v3714 = vunpack.c.l.b16 %v2311
        %v3715 = vunpack.c.h.b16 %v2311
        %v3716 = vunpack.c.l.b16 %v2312
        %v3717 = vunpack.c.h.b16 %v2312
        %v3718 = vunpack.c.l.b16 %v2313
        %v3719 = vunpack.c.h.b16 %v2313
        %v3720 = vunpack.c.l.b16 %v2314
        %v3721 = vunpack.c.h.b16 %v2314
        %v3722 = vunpack.c.l.b16 %v2315
        %v3723 = vunpack.c.h.b16 %v2315
        %v3724 = vunpack.c.l.b16 %v2316
        %v3725 = vunpack.c.h.b16 %v2316
        %v3726 = vunpack.c.l.b16 %v2317
        %v3727 = vunpack.c.h.b16 %v2317
        %v3728 = vunpack.c.l.b16 %v2318
        %v3729 = vunpack.c.h.b16 %v2318
        %v3730 = vunpack.c.l.b16 %v2319
        %v3731 = vunpack.c.h.b16 %v2319
        %v3732 = vunpack.c.l.b16 %v2320
        %v3733 = vunpack.c.h.b16 %v2320
        %v3734 = vunpack.c.l.b16 %v2321
        %v3735 = vunpack.c.h.b16 %v2321
        %v3736 = vunpack.c.l.b16 %v2322
        %v3737 = vunpack.c.h.b16 %v2322
        %v3738 = vunpack.c.l.b16 %v2323
        %v3739 = vunpack.c.h.b16 %v2323
        %v3740 = vunpack.c.l.b16 %v2324
        %v3741 = vunpack.c.h.b16 %v2324
        %v3742 = vunpack.c.l.b16 %v2325
        %v3743 = vunpack.c.h.b16 %v2325
        %v3744 = vunpack.c.l.b16 %v2326
        %v3745 = vunpack.c.h.b16 %v2326
        %v3746 = vunpack.c.l.b16 %v2327
        %v3747 = vunpack.c.h.b16 %v2327
        %v3748 = vunpack.c.l.b16 %v2328
        %v3749 = vunpack.c.h.b16 %v2328
        %v3750 = vunpack.c.l.b16 %v2329
        %v3751 = vunpack.c.h.b16 %v2329
        %v3752 = vunpack.c.l.b16 %v2330
        %v3753 = vunpack.c.h.b16 %v2330
        %v3754 = vunpack.c.l.b16 %v2331
        %v3755 = vunpack.c.h.b16 %v2331
        %v3756 = vunpack.c.l.b16 %v2332
        %v3757 = vunpack.c.h.b16 %v2332
        %v3758 = vunpack.c.l.b16 %v2333
        %v3759 = vunpack.c.h.b16 %v2333
        %v3760 = vunpack.c.l.b16 %v2334
        %v3761 = vunpack.c.h.b16 %v2334
        %v3762 = vunpack.c.l.b16 %v2335
        %v3763 = vunpack.c.h.b16 %v2335
        %v3764 = vunpack.c.l.b16 %v2336
        %v3765 = vunpack.c.h.b16 %v2336
        %v3766 = vunpack.c.l.b16 %v2337
        %v3767 = vunpack.c.h.b16 %v2337
        %v3768 = vunpack.c.l.b16 %v2338
        %v3769 = vunpack.c.h.b16 %v2338
        %v3770 = vunpack.c.l.b16 %v2339
        %v3771 = vunpack.c.h.b16 %v2339
        %v3772 = vunpack.c.l.b16 %v2340
        %v3773 = vunpack.c.h.b16 %v2340
        %v3774 = vunpack.c.l.b16 %v2341
        %v3775 = vunpack.c.h.b16 %v2341
        %v3776 = vunpack.c.l.b16 %v2342
        %v3777 = vunpack.c.h.b16 %v2342
        %v3778 = vunpack.c.l.b16 %v2343
        %v3779 = vunpack.c.h.b16 %v2343
        %v3780 = vunpack.c.l.b16 %v2344
        %v3781 = vunpack.c.h.b16 %v2344
        %v3782 = vunpack.c.l.b16 %v2345
        %v3783 = vunpack.c.h.b16 %v2345
        %v3784 = vunpack.c.l.b16 %v2346
        %v3785 = vunpack.c.h.b16 %v2346
        %v3786 = vunpack.c.l.b16 %v2347
        %v3787 = vunpack.c.h.b16 %v2347
        %v3788 = vunpack.c.l.b16 %v2348
        %v3789 = vunpack.c.h.b16 %v2348
        %v3790 = vunpack.c.l.b16 %v2349
        %v3791 = vunpack.c.h.b16 %v2349
        %v3792 = vunpack.c.l.b16 %v2350
        %v3793 = vunpack.c.h.b16 %v2350
        %v3794 = vunpack.c.l.b16 %v2351
        %v3795 = vunpack.c.h.b16 %v2351
        %v3796 = vunpack.c.l.b16 %v2352
        %v3797 = vunpack.c.h.b16 %v2352
        %v3798 = vunpack.c.l.b16 %v2353
        %v3799 = vunpack.c.h.b16 %v2353
        %v3800 = vunpack.c.l.b16 %v2354
        %v3801 = vunpack.c.h.b16 %v2354
        %v3802 = vunpack.c.l.b16 %v2355
        %v3803 = vunpack.c.h.b16 %v2355
        %v3804 = vunpack.c.l.b16 %v2356
        %v3805 = vunpack.c.h.b16 %v2356
        %v3806 = vunpack.c.l.b16 %v2357
        %v3807 = vunpack.c.h.b16 %v2357
        %v3808 = vunpack.c.l.b16 %v2358
        %v3809 = vunpack.c.h.b16 %v2358
        %v3810 = vunpack.c.l.b16 %v2359
        %v3811 = vunpack.c.h.b16 %v2359
        %v3812 = vunpack.c.l.b16 %v2360
        %v3813 = vunpack.c.h.b16 %v2360
        %v3814 = vunpack.c.l.b16 %v2361
        %v3815 = vunpack.c.h.b16 %v2361
        %v3816 = vunpack.c.l.b16 %v2362
        %v3817 = vunpack.c.h.b16 %v2362
        %v3818 = vunpack.c.l.b16 %v2363
        %v3819 = vunpack.c.h.b16 %v2363
        %v3820 = vunpack.c.l.b16 %v2364
        %v3821 = vunpack.c.h.b16 %v2364
        %v3822 = vunpack.c.l.b16 %v2365
        %v3823 = vunpack.c.h.b16 %v2365
        %v3824 = vunpack.c.l.b16 %v2366
        %v3825 = vunpack.c.h.b16 %v2366
        %v3826 = vunpack.c.l.b16 %v2367
        %v3827 = vunpack.c.h.b16 %v2367
        %v3828 = vunpack.c.l.b16 %v2368
        %v3829 = vunpack.c.h.b16 %v2368
        %v3830 = vunpack.c.l.b16 %v2369
        %v3831 = vunpack.c.h.b16 %v2369
        %v3832 = vunpack.c.l.b16 %v2370
        %v3833 = vunpack.c.h.b16 %v2370
        %v3834 = vunpack.c.l.b16 %v2371
        %v3835 = vunpack.c.h.b16 %v2371
        %v3836 = vunpack.c.l.b16 %v2372
        %v3837 = vunpack.c.h.b16 %v2372
        %v3838 = vunpack.c.l.b16 %v2373
        %v3839 = vunpack.c.h.b16 %v2373
        %v3840 = vunpack.c.l.b16 %v2374
        %v3841 = vunpack.c.h.b16 %v2374
        %v3842 = vunpack.c.l.b16 %v2375
        %v3843 = vunpack.c.h.b16 %v2375
        %v3844 = vunpack.c.l.b16 %v2376
        %v3845 = vunpack.c.h.b16 %v2376
        %v3846 = vunpack.c.l.b16 %v2377
        %v3847 = vunpack.c.h.b16 %v2377
        %v3848 = vunpack.c.l.b16 %v2378
        %v3849 = vunpack.c.h.b16 %v2378
        %v3850 = vunpack.c.l.b16 %v2379
        %v3851 = vunpack.c.h.b16 %v2379
        %v3852 = vunpack.c.l.b16 %v2380
        %v3853 = vunpack.c.h.b16 %v2380
        %v3854 = vunpack.c.l.b16 %v2381
        %v3855 = vunpack.c.h.b16 %v2381
        %v3856 = vunpack.c.l.b16 %v2382
        %v3857 = vunpack.c.h.b16 %v2382
        %v3858 = vunpack.c.l.b16 %v2383
        %v3859 = vunpack.c.h.b16 %v2383
        %v3860 = vunpack.c.l.b16 %v2384
        %v3861 = vunpack.c.h.b16 %v2384
        %v3862 = vunpack.c.l.b16 %v2385
        %v3863 = vunpack.c.h.b16 %v2385
        %v3864 = vunpack.c.l.b16 %v2386
        %v3865 = vunpack.c.h.b16 %v2386
        %v3866 = vunpack.c.l.b16 %v2387
        %v3867 = vunpack.c.h.b16 %v2387
        %v3868 = vunpack.c.l.b16 %v2388
        %v3869 = vunpack.c.h.b16 %v2388
        %v3870 = vunpack.c.l.b16 %v2389
        %v3871 = vunpack.c.h.b16 %v2389
        %v3872 = vunpack.c.l.b16 %v2390
        %v3873 = vunpack.c.h.b16 %v2390
        %v3874 = vunpack.c.l.b16 %v2391
        %v3875 = vunpack.c.h.b16 %v2391
        %v3876 = vunpack.c.l.b16 %v2392
        %v3877 = vunpack.c.h.b16 %v2392
        %v3878 = vunpack.c.l.b16 %v2393
        %v3879 = vunpack.c.h.b16 %v2393
        %v3880 = vunpack.c.l.b16 %v2394
        %v3881 = vunpack.c.h.b16 %v2394
        %v3882 = vunpack.c.l.b16 %v2395
        %v3883 = vunpack.c.h.b16 %v2395
        %v3884 = vunpack.c.l.b16 %v2396
        %v3885 = vunpack.c.h.b16 %v2396
        %v3886 = vunpack.c.l.b16 %v2397
        %v3887 = vunpack.c.h.b16 %v2397
        %v3888 = vunpack.c.l.b16 %v2398
        %v3889 = vunpack.c.h.b16 %v2398
        %v3890 = vunpack.c.l.b16 %v2399
        %v3891 = vunpack.c.h.b16 %v2399
        %v3892 = vunpack.c.l.b16 %v2400
        %v3893 = vunpack.c.h.b16 %v2400
        %v3894 = vunpack.c.l.b16 %v2401
        %v3895 = vunpack.c.h.b16 %v2401
        %v3896 = vunpack.c.l.b16 %v2402
        %v3897 = vunpack.c.h.b16 %v2402
        %v3898 = vunpack.c.l.b16 %v2403
        %v3899 = vunpack.c.h.b16 %v2403
        %v3900 = vunpack.c.l.b16 %v2404
        %v3901 = vunpack.c.h.b16 %v2404
        %v3902 = vunpack.c.l.b16 %v2405
        %v3903 = vunpack.c.h.b16 %v2405
        %v3904 = vunpack.c.l.b16 %v2406
        %v3905 = vunpack.c.h.b16 %v2406
        %v3906 = vunpack.c.l.b16 %v2407
        %v3907 = vunpack.c.h.b16 %v2407
        %v3908 = vunpack.c.l.b16 %v2408
        %v3909 = vunpack.c.h.b16 %v2408
        %v3910 = vunpack.c.l.b16 %v2409
        %v3911 = vunpack.c.h.b16 %v2409
        %v3912 = vunpack.c.l.b16 %v2410
        %v3913 = vunpack.c.h.b16 %v2410
        %v3914 = vunpack.c.l.b16 %v2411
        %v3915 = vunpack.c.h.b16 %v2411
        %v3916 = vunpack.c.l.b16 %v2412
        %v3917 = vunpack.c.h.b16 %v2412
        %v3918 = vunpack.c.l.b16 %v2413
        %v3919 = vunpack.c.h.b16 %v2413
        %v3920 = vunpack.c.l.b16 %v2414
        %v3921 = vunpack.c.h.b16 %v2414
        %v3922 = vunpack.c.l.b16 %v2415
        %v3923 = vunpack.c.h.b16 %v2415
        %v3924 = vunpack.c.l.b16 %v2416
        %v3925 = vunpack.c.h.b16 %v2416
        %v3926 = vunpack.c.l.b16 %v2417
        %v3927 = vunpack.c.h.b16 %v2417
        %v3928 = vunpack.c.l.b16 %v2418
        %v3929 = vunpack.c.h.b16 %v2418
        %v3930 = vunpack.c.l.b16 %v2419
        %v3931 = vunpack.c.h.b16 %v2419
        %v3932 = vunpack.c.l.b16 %v2420
        %v3933 = vunpack.c.h.b16 %v2420
        %v3934 = vunpack.c.l.b16 %v2421
        %v3935 = vunpack.c.h.b16 %v2421
        %v3936 = vunpack.c.l.b16 %v2422
        %v3937 = vunpack.c.h.b16 %v2422
        %v3938 = vunpack.c.l.b16 %v2423
        %v3939 = vunpack.c.h.b16 %v2423
        %v3940 = vunpack.c.l.b16 %v2424
        %v3941 = vunpack.c.h.b16 %v2424
        %v3942 = vunpack.c.l.b16 %v2425
        %v3943 = vunpack.c.h.b16 %v2425
        %v3944 = vunpack.c.l.b16 %v2426
        %v3945 = vunpack.c.h.b16 %v2426
        %v3946 = vunpack.c.l.b16 %v2427
        %v3947 = vunpack.c.h.b16 %v2427
        %v3948 = vunpack.c.l.b16 %v2428
        %v3949 = vunpack.c.h.b16 %v2428
        %v3950 = vunpack.c.l.b16 %v2429
        %v3951 = vunpack.c.h.b16 %v2429
        %v3952 = vunpack.c.l.b16 %v2430
        %v3953 = vunpack.c.h.b16 %v2430
        %v3954 = vunpack.c.l.b16 %v2431
        %v3955 = vunpack.c.h.b16 %v2431
        %v3956 = vunpack.c.l.b16 %v2432
        %v3957 = vunpack.c.h.b16 %v2432
        %v3958 = vunpack.c.l.b16 %v2433
        %v3959 = vunpack.c.h.b16 %v2433
        %v3960 = vunpack.c.l.b16 %v2434
        %v3961 = vunpack.c.h.b16 %v2434
        %v3962 = vunpack.c.l.b16 %v2435
        %v3963 = vunpack.c.h.b16 %v2435
        %v3964 = vunpack.c.l.b16 %v2436
        %v3965 = vunpack.c.h.b16 %v2436
        %v3966 = vunpack.c.l.b16 %v2437
        %v3967 = vunpack.c.h.b16 %v2437
        %v3968 = vunpack.c.l.b16 %v2438
        %v3969 = vunpack.c.h.b16 %v2438
        %v3970 = vunpack.c.l.b16 %v2439
        %v3971 = vunpack.c.h.b16 %v2439
        %v3972 = vunpack.c.l.b16 %v2440
        %v3973 = vunpack.c.h.b16 %v2440
        %v3974 = vunpack.c.l.b16 %v2441
        %v3975 = vunpack.c.h.b16 %v2441
        %v3976 = vunpack.c.l.b16 %v2442
        %v3977 = vunpack.c.h.b16 %v2442
        %v3978 = vunpack.c.l.b16 %v2443
        %v3979 = vunpack.c.h.b16 %v2443
        %v3980 = vunpack.c.l.b16 %v2444
        %v3981 = vunpack.c.h.b16 %v2444
        %v3982 = vunpack.c.l.b16 %v2445
        %v3983 = vunpack.c.h.b16 %v2445
        %v3984 = vunpack.c.l.b16 %v2446
        %v3985 = vunpack.c.h.b16 %v2446
        %v3986 = vunpack.c.l.b16 %v2447
        %v3987 = vunpack.c.h.b16 %v2447
        %v3988 = vunpack.c.l.b16 %v2448
        %v3989 = vunpack.c.h.b16 %v2448
        %v3990 = vunpack.c.l.b16 %v2449
        %v3991 = vunpack.c.h.b16 %v2449
        %v3992 = vunpack.c.l.b16 %v2450
        %v3993 = vunpack.c.h.b16 %v2450
        %v3994 = vunpack.c.l.b16 %v2451
        %v3995 = vunpack.c.h.b16 %v2451
        %v3996 = vunpack.c.l.b16 %v2452
        %v3997 = vunpack.c.h.b16 %v2452
        %v3998 = vunpack.c.l.b16 %v2453
        %v3999 = vunpack.c.h.b16 %v2453
        %v4000 = vpack.c.b16 %v3008, %v2976
        %v4001 = vpack.c.b16 %v3009, %v2977
        %v4002 = vpack.c.b16 %v3010, %v2978
        %v4003 = vpack.c.b16 %v3011, %v2979
        %v4004 = vpack.c.b16 %v3012, %v2980
        %v4005 = vpack.c.b16 %v3013, %v2981
        %v4006 = vpack.c.b16 %v3014, %v2982
        %v4007 = vpack.c.b16 %v3015, %v2983
        %v4008 = vpack.c.b16 %v3016, %v2984
        %v4009 = vpack.c.b16 %v3017, %v2985
        %v4010 = vpack.c.b16 %v3018, %v2986
        %v4011 = vpack.c.b16 %v3019, %v2987
        %v4012 = vpack.c.b16 %v3020, %v2988
        %v4013 = vpack.c.b16 %v3021, %v2989
        %v4014 = vpack.c.b16 %v3022, %v2990
        %v4015 = vpack.c.b16 %v3023, %v2991
        %v4016 = vpack.c.b16 %v3024, %v2992
        %v4017 = vpack.c.b16 %v3025, %v2993
        %v4018 = vpack.c.b16 %v3026, %v2994
        %v4019 = vpack.c.b16 %v3027, %v2995
        %v4020 = vpack.c.b16 %v3028, %v2996
        %v4021 = vpack.c.b16 %v3029, %v2997
        %v4022 = vpack.c.b16 %v3030, %v2998
        %v4023 = vpack.c.b16 %v3031, %v2999
        %v4024 = vpack.c.b16 %v3032, %v3000
        %v4025 = vpack.c.b16 %v3033, %v3001
        %v4026 = vpack.c.b16 %v3034, %v3002
        %v4027 = vpack.c.b16 %v3035, %v3003
        %v4028 = vpack.c.b16 %v3036, %v3004
        %v4029 = vpack.c.b16 %v3037, %v3005
        %v4030 = vpack.c.b16 %v3038, %v3006
        %v4031 = vpack.c.b16 %v3039, %v3007
        %v4032 = vpack.c.b16 %v3072, %v3040
        %v4033 = vpack.c.b16 %v3073, %v3041
        %v4034 = vpack.c.b16 %v3074, %v3042
        %v4035 = vpack.c.b16 %v3075, %v3043
        %v4036 = vpack.c.b16 %v3076, %v3044
        %v4037 = vpack.c.b16 %v3077, %v3045
        %v4038 = vpack.c.b16 %v3078, %v3046
        %v4039 = vpack.c.b16 %v3079, %v3047
        %v4040 = vpack.c.b16 %v3080, %v3048
        %v4041 = vpack.c.b16 %v3081, %v3049
        %v4042 = vpack.c.b16 %v3082, %v3050
        %v4043 = vpack.c.b16 %v3083, %v3051
        %v4044 = vpack.c.b16 %v3084, %v3052
        %v4045 = vpack.c.b16 %v3085, %v3053
        %v4046 = vpack.c.b16 %v3086, %v3054
        %v4047 = vpack.c.b16 %v3087, %v3055
        %v4048 = vpack.c.b16 %v3088, %v3056
        %v4049 = vpack.c.b16 %v3089, %v3057
        %v4050 = vpack.c.b16 %v3090, %v3058
        %v4051 = vpack.c.b16 %v3091, %v3059
        %v4052 = vpack.c.b16 %v3092, %v3060
        %v4053 = vpack.c.b16 %v3093, %v3061
        %v4054 = vpack.c.b16 %v3094, %v3062
        %v4055 = vpack.c.b16 %v3095, %v3063
        %v4056 = vpack.c.b16 %v3096, %v3064
        %v4057 = vpack.c.b16 %v3097, %v3065
        %v4058 = vpack.c.b16 %v3098, %v3066
        %v4059 = vpack.c.b16 %v3099, %v3067
        %v4060 = vpack.c.b16 %v3100, %v3068
        %v4061 = vpack.c.b16 %v3101, %v3069
        %v4062 = vpack.c.b16 %v3102, %v3070
        %v4063 = vpack.c.b16 %v3103, %v3071
        %v4064 = vpack.c.b16 %v3136, %v3104
        %v4065 = vpack.c.b16 %v3137, %v3105
        %v4066 = vpack.c.b16 %v3138, %v3106
        %v4067 = vpack.c.b16 %v3139, %v3107
        %v4068 = vpack.c.b16 %v3140, %v3108
        %v4069 = vpack.c.b16 %v3141, %v3109
        %v4070 = vpack.c.b16 %v3142, %v3110
        %v4071 = vpack.c.b16 %v3143, %v3111
        %v4072 = vpack.c.b16 %v3144, %v3112
        %v4073 = vpack.c.b16 %v3145, %v3113
        %v4074 = vpack.c.b16 %v3146, %v3114
        %v4075 = vpack.c.b16 %v3147, %v3115
        %v4076 = vpack.c.b16 %v3148, %v3116
        %v4077 = vpack.c.b16 %v3149, %v3117
        %v4078 = vpack.c.b16 %v3150, %v3118
        %v4079 = vpack.c.b16 %v3151, %v3119
        %v4080 = vpack.c.b16 %v3152, %v3120
        %v4081 = vpack.c.b16 %v3153, %v3121
        %v4082 = vpack.c.b16 %v3154, %v3122
        %v4083 = vpack.c.b16 %v3155, %v3123
        %v4084 = vpack.c.b16 %v3156, %v3124
        %v4085 = vpack.c.b16 %v3157, %v3125
        %v4086 = vpack.c.b16 %v3158, %v3126
        %v4087 = vpack.c.b16 %v3159, %v3127
        %v4088 = vpack.c.b16 %v3160, %v3128
        %v4089 = vpack.c.b16 %v3161, %v3129
        %v4090 = vpack.c.b16 %v3162, %v3130
        %v4091 = vpack.c.b16 %v3163, %v3131
        %v4092 = vpack.c.b16 %v3164, %v3132
        %v4093 = vpack.c.b16 %v3165, %v3133
        %v4094 = vpack.c.b16 %v3166, %v3134
        %v4095 = vpack.c.b16 %v3167, %v3135
        %v4096 = vpack.c.b16 %v3200, %v3168
        %v4097 = vpack.c.b16 %v3201, %v3169
        %v4098 = vpack.c.b16 %v3202, %v3170
        %v4099 = vpack.c.b16 %v3203, %v3171
        %v4100 = vpack.c.b16 %v3204, %v3172
        %v4101 = vpack.c.b16 %v3205, %v3173
        %v4102 = vpack.c.b16 %v3206, %v3174
        %v4103 = vpack.c.b16 %v3207, %v3175
        %v4104 = vpack.c.b16 %v3208, %v3176
        %v4105 = vpack.c.b16 %v3209, %v3177
        %v4106 = vpack.c.b16 %v3210, %v3178
        %v4107 = vpack.c.b16 %v3211, %v3179
        %v4108 = vpack.c.b16 %v3212, %v3180
        %v4109 = vpack.c.b16 %v3213, %v3181
        %v4110 = vpack.c.b16 %v3214, %v3182
        %v4111 = vpack.c.b16 %v3215, %v3183
        %v4112 = vpack.c.b16 %v3216, %v3184
        %v4113 = vpack.c.b16 %v3217, %v3185
        %v4114 = vpack.c.b16 %v3218, %v3186
        %v4115 = vpack.c.b16 %v3219, %v3187
        %v4116 = vpack.c.b16 %v3220, %v3188
        %v4117 = vpack.c.b16 %v3221, %v3189
        %v4118 = vpack.c.b16 %v3222, %v3190
        %v4119 = vpack.c.b16 %v3223, %v3191
        %v4120 = vpack.c.b16 %v3224, %v3192
        %v4121 = vpack.c.b16 %v3225, %v3193
        %v4122 = vpack.c.b16 %v3226, %v3194
        %v4123 = vpack.c.b16 %v3227, %v3195
        %v4124 = vpack.c.b16 %v3228, %v3196
        %v4125 = vpack.c.b16 %v3229, %v3197
        %v4126 = vpack.c.b16 %v3230, %v3198
        %v4127 = vpack.c.b16 %v3231, %v3199
        %v4128 = vpack.c.b16 %v3264, %v3232
        %v4129 = vpack.c.b16 %v3265, %v3233
        %v4130 = vpack.c.b16 %v3266, %v3234
        %v4131 = vpack.c.b16 %v3267, %v3235
        %v4132 = vpack.c.b16 %v3268, %v3236
        %v4133 = vpack.c.b16 %v3269, %v3237
        %v4134 = vpack.c.b16 %v3270, %v3238
        %v4135 = vpack.c.b16 %v3271, %v3239
        %v4136 = vpack.c.b16 %v3272, %v3240
        %v4137 = vpack.c.b16 %v3273, %v3241
        %v4138 = vpack.c.b16 %v3274, %v3242
        %v4139 = vpack.c.b16 %v3275, %v3243
        %v4140 = vpack.c.b16 %v3276, %v3244
        %v4141 = vpack.c.b16 %v3277, %v3245
        %v4142 = vpack.c.b16 %v3278, %v3246
        %v4143 = vpack.c.b16 %v3279, %v3247
        %v4144 = vpack.c.b16 %v3280, %v3248
        %v4145 = vpack.c.b16 %v3281, %v3249
        %v4146 = vpack.c.b16 %v3282, %v3250
        %v4147 = vpack.c.b16 %v3283, %v3251
        %v4148 = vpack.c.b16 %v3284, %v3252
        %v4149 = vpack.c.b16 %v3285, %v3253
        %v4150 = vpack.c.b16 %v3286, %v3254
        %v4151 = vpack.c.b16 %v3287, %v3255
        %v4152 = vpack.c.b16 %v3288, %v3256
        %v4153 = vpack.c.b16 %v3289, %v3257
        %v4154 = vpack.c.b16 %v3290, %v3258
        %v4155 = vpack.c.b16 %v3291, %v3259
        %v4156 = vpack.c.b16 %v3292, %v3260
        %v4157 = vpack.c.b16 %v3293, %v3261
        %v4158 = vpack.c.b16 %v3294, %v3262
        %v4159 = vpack.c.b16 %v3295, %v3263
        %v4160 = vpack.c.b16 %v3328, %v3296
        %v4161 = vpack.c.b16 %v3329, %v3297
        %v4162 = vpack.c.b16 %v3330, %v3298
        %v4163 = vpack.c.b16 %v3331, %v3299
        %v4164 = vpack.c.b16 %v3332, %v3300
        %v4165 = vpack.c.b16 %v3333, %v3301
        %v4166 = vpack.c.b16 %v3334, %v3302
        %v4167 = vpack.c.b16 %v3335, %v3303
        %v4168 = vpack.c.b16 %v3336, %v3304
        %v4169 = vpack.c.b16 %v3337, %v3305
        %v4170 = vpack.c.b16 %v3338, %v3306
        %v4171 = vpack.c.b16 %v3339, %v3307
        %v4172 = vpack.c.b16 %v3340, %v3308
        %v4173 = vpack.c.b16 %v3341, %v3309
        %v4174 = vpack.c.b16 %v3342, %v3310
        %v4175 = vpack.c.b16 %v3343, %v3311
        %v4176 = vpack.c.b16 %v3344, %v3312
        %v4177 = vpack.c.b16 %v3345, %v3313
        %v4178 = vpack.c.b16 %v3346, %v3314
        %v4179 = vpack.c.b16 %v3347, %v3315
        %v4180 = vpack.c.b16 %v3348, %v3316
        %v4181 = vpack.c.b16 %v3349, %v3317
        %v4182 = vpack.c.b16 %v3350, %v3318
        %v4183 = vpack.c.b16 %v3351, %v3319
        %v4184 = vpack.c.b16 %v3352, %v3320
        %v4185 = vpack.c.b16 %v3353, %v3321
        %v4186 = vpack.c.b16 %v3354, %v3322
        %v4187 = vpack.c.b16 %v3355, %v3323
        %v4188 = vpack.c.b16 %v3356, %v3324
        %v4189 = vpack.c.b16 %v3357, %v3325
        %v4190 = vpack.c.b16 %v3358, %v3326
        %v4191 = vpack.c.b16 %v3359, %v3327
        %v4192 = vpack.c.b16 %v3392, %v3360
        %v4193 = vpack.c.b16 %v3393, %v3361
        %v4194 = vpack.c.b16 %v3394, %v3362
        %v4195 = vpack.c.b16 %v3395, %v3363
        %v4196 = vpack.c.b16 %v3396, %v3364
        %v4197 = vpack.c.b16 %v3397, %v3365
        %v4198 = vpack.c.b16 %v3398, %v3366
        %v4199 = vpack.c.b16 %v3399, %v3367
        %v4200 = vpack.c.b16 %v3400, %v3368
        %v4201 = vpack.c.b16 %v3401, %v3369
        %v4202 = vpack.c.b16 %v3402, %v3370
        %v4203 = vpack.c.b16 %v3403, %v3371
        %v4204 = vpack.c.b16 %v3404, %v3372
        %v4205 = vpack.c.b16 %v3405, %v3373
        %v4206 = vpack.c.b16 %v3406, %v3374
        %v4207 = vpack.c.b16 %v3407, %v3375
        %v4208 = vpack.c.b16 %v3408, %v3376
        %v4209 = vpack.c.b16 %v3409, %v3377
        %v4210 = vpack.c.b16 %v3410, %v3378
        %v4211 = vpack.c.b16 %v3411, %v3379
        %v4212 = vpack.c.b16 %v3412, %v3380
        %v4213 = vpack.c.b16 %v3413, %v3381
        %v4214 = vpack.c.b16 %v3414, %v3382
        %v4215 = vpack.c.b16 %v3415, %v3383
        %v4216 = vpack.c.b16 %v3416, %v3384
        %v4217 = vpack.c.b16 %v3417, %v3385
        %v4218 = vpack.c.b16 %v3418, %v3386
        %v4219 = vpack.c.b16 %v3419, %v3387
        %v4220 = vpack.c.b16 %v3420, %v3388
        %v4221 = vpack.c.b16 %v3421, %v3389
        %v4222 = vpack.c.b16 %v3422, %v3390
        %v4223 = vpack.c.b16 %v3423, %v3391
        %v4224 = vpack.c.b16 %v3456, %v3424
        %v4225 = vpack.c.b16 %v3457, %v3425
        %v4226 = vpack.c.b16 %v3458, %v3426
        %v4227 = vpack.c.b16 %v3459, %v3427
        %v4228 = vpack.c.b16 %v3460, %v3428
        %v4229 = vpack.c.b16 %v3461, %v3429
        %v4230 = vpack.c.b16 %v3462, %v3430
        %v4231 = vpack.c.b16 %v3463, %v3431
        %v4232 = vpack.c.b16 %v3464, %v3432
        %v4233 = vpack.c.b16 %v3465, %v3433
        %v4234 = vpack.c.b16 %v3466, %v3434
        %v4235 = vpack.c.b16 %v3467, %v3435
        %v4236 = vpack.c.b16 %v3468, %v3436
        %v4237 = vpack.c.b16 %v3469, %v3437
        %v4238 = vpack.c.b16 %v3470, %v3438
        %v4239 = vpack.c.b16 %v3471, %v3439
        %v4240 = vpack.c.b16 %v3472, %v3440
        %v4241 = vpack.c.b16 %v3473, %v3441
        %v4242 = vpack.c.b16 %v3474, %v3442
        %v4243 = vpack.c.b16 %v3475, %v3443
        %v4244 = vpack.c.b16 %v3476, %v3444
        %v4245 = vpack.c.b16 %v3477, %v3445
        %v4246 = vpack.c.b16 %v3478, %v3446
        %v4247 = vpack.c.b16 %v3479, %v3447
        %v4248 = vpack.c.b16 %v3480, %v3448
        %v4249 = vpack.c.b16 %v3481, %v3449
        %v4250 = vpack.c.b16 %v3482, %v3450
        %v4251 = vpack.c.b16 %v3483, %v3451
        %v4252 = vpack.c.b16 %v3484, %v3452
        %v4253 = vpack.c.b16 %v3485, %v3453
        %v4254 = vpack.c.b16 %v3486, %v3454
        %v4255 = vpack.c.b16 %v3487, %v3455
        %v4256 = vpack.c.b16 %v3520, %v3488
        %v4257 = vpack.c.b16 %v3521, %v3489
        %v4258 = vpack.c.b16 %v3522, %v3490
        %v4259 = vpack.c.b16 %v3523, %v3491
        %v4260 = vpack.c.b16 %v3524, %v3492
        %v4261 = vpack.c.b16 %v3525, %v3493
        %v4262 = vpack.c.b16 %v3526, %v3494
        %v4263 = vpack.c.b16 %v3527, %v3495
        %v4264 = vpack.c.b16 %v3528, %v3496
        %v4265 = vpack.c.b16 %v3529, %v3497
        %v4266 = vpack.c.b16 %v3530, %v3498
        %v4267 = vpack.c.b16 %v3531, %v3499
        %v4268 = vpack.c.b16 %v3532, %v3500
        %v4269 = vpack.c.b16 %v3533, %v3501
        %v4270 = vpack.c.b16 %v3534, %v3502
        %v4271 = vpack.c.b16 %v3535, %v3503
        %v4272 = vpack.c.b16 %v3536, %v3504
        %v4273 = vpack.c.b16 %v3537, %v3505
        %v4274 = vpack.c.b16 %v3538, %v3506
        %v4275 = vpack.c.b16 %v3539, %v3507
        %v4276 = vpack.c.b16 %v3540, %v3508
        %v4277 = vpack.c.b16 %v3541, %v3509
        %v4278 = vpack.c.b16 %v3542, %v3510
        %v4279 = vpack.c.b16 %v3543, %v3511
        %v4280 = vpack.c.b16 %v3544, %v3512
        %v4281 = vpack.c.b16 %v3545, %v3513
        %v4282 = vpack.c.b16 %v3546, %v3514
        %v4283 = vpack.c.b16 %v3547, %v3515
        %v4284 = vpack.c.b16 %v3548, %v3516
        %v4285 = vpack.c.b16 %v3549, %v3517
        %v4286 = vpack.c.b16 %v3550, %v3518
        %v4287 = vpack.c.b16 %v3551, %v3519
        %v4288 = vpack.c.b16 %v3584, %v3552
        %v4289 = vpack.c.b16 %v3585, %v3553
        %v4290 = vpack.c.b16 %v3586, %v3554
        %v4291 = vpack.c.b16 %v3587, %v3555
        %v4292 = vpack.c.b16 %v3588, %v3556
        %v4293 = vpack.c.b16 %v3589, %v3557
        %v4294 = vpack.c.b16 %v3590, %v3558
        %v4295 = vpack.c.b16 %v3591, %v3559
        %v4296 = vpack.c.b16 %v3592, %v3560
        %v4297 = vpack.c.b16 %v3593, %v3561
        %v4298 = vpack.c.b16 %v3594, %v3562
        %v4299 = vpack.c.b16 %v3595, %v3563
        %v4300 = vpack.c.b16 %v3596, %v3564
        %v4301 = vpack.c.b16 %v3597, %v3565
        %v4302 = vpack.c.b16 %v3598, %v3566
        %v4303 = vpack.c.b16 %v3599, %v3567
        %v4304 = vpack.c.b16 %v3600, %v3568
        %v4305 = vpack.c.b16 %v3601, %v3569
        %v4306 = vpack.c.b16 %v3602, %v3570
        %v4307 = vpack.c.b16 %v3603, %v3571
        %v4308 = vpack.c.b16 %v3604, %v3572
        %v4309 = vpack.c.b16 %v3605, %v3573
        %v4310 = vpack.c.b16 %v3606, %v3574
        %v4311 = vpack.c.b16 %v3607, %v3575
        %v4312 = vpack.c.b16 %v3608, %v3576
        %v4313 = vpack.c.b16 %v3609, %v3577
        %v4314 = vpack.c.b16 %v3610, %v3578
        %v4315 = vpack.c.b16 %v3611, %v3579
        %v4316 = vpack.c.b16 %v3612, %v3580
        %v4317 = vpack.c.b16 %v3613, %v3581
        %v4318 = vpack.c.b16 %v3614, %v3582
        %v4319 = vpack.c.b16 %v3615, %v3583
        %v4320 = vpack.c.b16 %v3648, %v3616
        %v4321 = vpack.c.b16 %v3649, %v3617
        %v4322 = vpack.c.b16 %v3650, %v3618
        %v4323 = vpack.c.b16 %v3651, %v3619
        %v4324 = vpack.c.b16 %v3652, %v3620
        %v4325 = vpack.c.b16 %v3653, %v3621
        %v4326 = vpack.c.b16 %v3654, %v3622
        %v4327 = vpack.c.b16 %v3655, %v3623
        %v4328 = vpack.c.b16 %v3656, %v3624
        %v4329 = vpack.c.b16 %v3657, %v3625
        %v4330 = vpack.c.b16 %v3658, %v3626
        %v4331 = vpack.c.b16 %v3659, %v3627
        %v4332 = vpack.c.b16 %v3660, %v3628
        %v4333 = vpack.c.b16 %v3661, %v3629
        %v4334 = vpack.c.b16 %v3662, %v3630
        %v4335 = vpack.c.b16 %v3663, %v3631
        %v4336 = vpack.c.b16 %v3664, %v3632
        %v4337 = vpack.c.b16 %v3665, %v3633
        %v4338 = vpack.c.b16 %v3666, %v3634
        %v4339 = vpack.c.b16 %v3667, %v3635
        %v4340 = vpack.c.b16 %v3668, %v3636
        %v4341 = vpack.c.b16 %v3669, %v3637
        %v4342 = vpack.c.b16 %v3670, %v3638
        %v4343 = vpack.c.b16 %v3671, %v3639
        %v4344 = vpack.c.b16 %v3672, %v3640
        %v4345 = vpack.c.b16 %v3673, %v3641
        %v4346 = vpack.c.b16 %v3674, %v3642
        %v4347 = vpack.c.b16 %v3675, %v3643
        %v4348 = vpack.c.b16 %v3676, %v3644
        %v4349 = vpack.c.b16 %v3677, %v3645
        %v4350 = vpack.c.b16 %v3678, %v3646
        %v4351 = vpack.c.b16 %v3679, %v3647
        %v4352 = vpack.c.b16 %v3712, %v3680
        %v4353 = vpack.c.b16 %v3713, %v3681
        %v4354 = vpack.c.b16 %v3714, %v3682
        %v4355 = vpack.c.b16 %v3715, %v3683
        %v4356 = vpack.c.b16 %v3716, %v3684
        %v4357 = vpack.c.b16 %v3717, %v3685
        %v4358 = vpack.c.b16 %v3718, %v3686
        %v4359 = vpack.c.b16 %v3719, %v3687
        %v4360 = vpack.c.b16 %v3720, %v3688
        %v4361 = vpack.c.b16 %v3721, %v3689
        %v4362 = vpack.c.b16 %v3722, %v3690
        %v4363 = vpack.c.b16 %v3723, %v3691
        %v4364 = vpack.c.b16 %v3724, %v3692
        %v4365 = vpack.c.b16 %v3725, %v3693
        %v4366 = vpack.c.b16 %v3726, %v3694
        %v4367 = vpack.c.b16 %v3727, %v3695
        %v4368 = vpack.c.b16 %v3728, %v3696
        %v4369 = vpack.c.b16 %v3729, %v3697
        %v4370 = vpack.c.b16 %v3730, %v3698
        %v4371 = vpack.c.b16 %v3731, %v3699
        %v4372 = vpack.c.b16 %v3732, %v3700
        %v4373 = vpack.c.b16 %v3733, %v3701
        %v4374 = vpack.c.b16 %v3734, %v3702
        %v4375 = vpack.c.b16 %v3735, %v3703
        %v4376 = vpack.c.b16 %v3736, %v3704
        %v4377 = vpack.c.b16 %v3737, %v3705
        %v4378 = vpack.c.b16 %v3738, %v3706
        %v4379 = vpack.c.b16 %v3739, %v3707
        %v4380 = vpack.c.b16 %v3740, %v3708
        %v4381 = vpack.c.b16 %v3741, %v3709
        %v4382 = vpack.c.b16 %v3742, %v3710
        %v4383 = vpack.c.b16 %v3743, %v3711
        %v4384 = vpack.c.b16 %v3776, %v3744
        %v4385 = vpack.c.b16 %v3777, %v3745
        %v4386 = vpack.c.b16 %v3778, %v3746
        %v4387 = vpack.c.b16 %v3779, %v3747
        %v4388 = vpack.c.b16 %v3780, %v3748
        %v4389 = vpack.c.b16 %v3781, %v3749
        %v4390 = vpack.c.b16 %v3782, %v3750
        %v4391 = vpack.c.b16 %v3783, %v3751
        %v4392 = vpack.c.b16 %v3784, %v3752
        %v4393 = vpack.c.b16 %v3785, %v3753
        %v4394 = vpack.c.b16 %v3786, %v3754
        %v4395 = vpack.c.b16 %v3787, %v3755
        %v4396 = vpack.c.b16 %v3788, %v3756
        %v4397 = vpack.c.b16 %v3789, %v3757
        %v4398 = vpack.c.b16 %v3790, %v3758
        %v4399 = vpack.c.b16 %v3791, %v3759
        %v4400 = vpack.c.b16 %v3792, %v3760
        %v4401 = vpack.c.b16 %v3793, %v3761
        %v4402 = vpack.c.b16 %v3794, %v3762
        %v4403 = vpack.c.b16 %v3795, %v3763
        %v4404 = vpack.c.b16 %v3796, %v3764
        %v4405 = vpack.c.b16 %v3797, %v3765
        %v4406 = vpack.c.b16 %v3798, %v3766
        %v4407 = vpack.c.b16 %v3799, %v3767
        %v4408 = vpack.c.b16 %v3800, %v3768
        %v4409 = vpack.c.b16 %v3801, %v3769
        %v4410 = vpack.c.b16 %v3802, %v3770
        %v4411 = vpack.c.b16 %v3803, %v3771
        %v4412 = vpack.c.b16 %v3804, %v3772
        %v4413 = vpack.c.b16 %v3805, %v3773
        %v4414 = vpack.c.b16 %v3806, %v3774
        %v4415 = vpack.c.b16 %v3807, %v3775
        %v4416 = vpack.c.b16 %v3840, %v3808
        %v4417 = vpack.c.b16 %v3841, %v3809
        %v4418 = vpack.c.b16 %v3842, %v3810
        %v4419 = vpack.c.b16 %v3843, %v3811
        %v4420 = vpack.c.b16 %v3844, %v3812
        %v4421 = vpack.c.b16 %v3845, %v3813
        %v4422 = vpack.c.b16 %v3846, %v3814
        %v4423 = vpack.c.b16 %v3847, %v3815
        %v4424 = vpack.c.b16 %v3848, %v3816
        %v4425 = vpack.c.b16 %v3849, %v3817
        %v4426 = vpack.c.b16 %v3850, %v3818
        %v4427 = vpack.c.b16 %v3851, %v3819
        %v4428 = vpack.c.b16 %v3852, %v3820
        %v4429 = vpack.c.b16 %v3853, %v3821
        %v4430 = vpack.c.b16 %v3854, %v3822
        %v4431 = vpack.c.b16 %v3855, %v3823
        %v4432 = vpack.c.b16 %v3856, %v3824
        %v4433 = vpack.c.b16 %v3857, %v3825
        %v4434 = vpack.c.b16 %v3858, %v3826
        %v4435 = vpack.c.b16 %v3859, %v3827
        %v4436 = vpack.c.b16 %v3860, %v3828
        %v4437 = vpack.c.b16 %v3861, %v3829
        %v4438 = vpack.c.b16 %v3862, %v3830
        %v4439 = vpack.c.b16 %v3863, %v3831
        %v4440 = vpack.c.b16 %v3864, %v3832
        %v4441 = vpack.c.b16 %v3865, %v3833
        %v4442 = vpack.c.b16 %v3866, %v3834
        %v4443 = vpack.c.b16 %v3867, %v3835
        %v4444 = vpack.c.b16 %v3868, %v3836
        %v4445 = vpack.c.b16 %v3869, %v3837
        %v4446 = vpack.c.b16 %v3870, %v3838
        %v4447 = vpack.c.b16 %v3871, %v3839
        %v4448 = vpack.c.b16 %v3904, %v3872
        %v4449 = vpack.c.b16 %v3905, %v3873
        %v4450 = vpack.c.b16 %v3906, %v3874
        %v4451 = vpack.c.b16 %v3907, %v3875
        %v4452 = vpack.c.b16 %v3908, %v3876
        %v4453 = vpack.c.b16 %v3909, %v3877
        %v4454 = vpack.c.b16 %v3910, %v3878
        %v4455 = vpack.c.b16 %v3911, %v3879
        %v4456 = vpack.c.b16 %v3912, %v3880
        %v4457 = vpack.c.b16 %v3913, %v3881
        %v4458 = vpack.c.b16 %v3914, %v3882
        %v4459 = vpack.c.b16 %v3915, %v3883
        %v4460 = vpack.c.b16 %v3916, %v3884
        %v4461 = vpack.c.b16 %v3917, %v3885
        %v4462 = vpack.c.b16 %v3918, %v3886
        %v4463 = vpack.c.b16 %v3919, %v3887
        %v4464 = vpack.c.b16 %v3920, %v3888
        %v4465 = vpack.c.b16 %v3921, %v3889
        %v4466 = vpack.c.b16 %v3922, %v3890
        %v4467 = vpack.c.b16 %v3923, %v3891
        %v4468 = vpack.c.b16 %v3924, %v3892
        %v4469 = vpack.c.b16 %v3925, %v3893
        %v4470 = vpack.c.b16 %v3926, %v3894
        %v4471 = vpack.c.b16 %v3927, %v3895
        %v4472 = vpack.c.b16 %v3928, %v3896
        %v4473 = vpack.c.b16 %v3929, %v3897
        %v4474 = vpack.c.b16 %v3930, %v3898
        %v4475 = vpack.c.b16 %v3931, %v3899
        %v4476 = vpack.c.b16 %v3932, %v3900
        %v4477 = vpack.c.b16 %v3933, %v3901
        %v4478 = vpack.c.b16 %v3934, %v3902
        %v4479 = vpack.c.b16 %v3935, %v3903
        %v4480 = vpack.c.b16 %v3968, %v3936
        %v4481 = vpack.c.b16 %v3969, %v3937
        %v4482 = vpack.c.b16 %v3970, %v3938
        %v4483 = vpack.c.b16 %v3971, %v3939
        %v4484 = vpack.c.b16 %v3972, %v3940
        %v4485 = vpack.c.b16 %v3973, %v3941
        %v4486 = vpack.c.b16 %v3974, %v3942
        %v4487 = vpack.c.b16 %v3975, %v3943
        %v4488 = vpack.c.b16 %v3976, %v3944
        %v4489 = vpack.c.b16 %v3977, %v3945
        %v4490 = vpack.c.b16 %v3978, %v3946
        %v4491 = vpack.c.b16 %v3979, %v3947
        %v4492 = vpack.c.b16 %v3980, %v3948
        %v4493 = vpack.c.b16 %v3981, %v3949
        %v4494 = vpack.c.b16 %v3982, %v3950
        %v4495 = vpack.c.b16 %v3983, %v3951
        %v4496 = vpack.c.b16 %v3984, %v3952
        %v4497 = vpack.c.b16 %v3985, %v3953
        %v4498 = vpack.c.b16 %v3986, %v3954
        %v4499 = vpack.c.b16 %v3987, %v3955
        %v4500 = vpack.c.b16 %v3988, %v3956
        %v4501 = vpack.c.b16 %v3989, %v3957
        %v4502 = vpack.c.b16 %v3990, %v3958
        %v4503 = vpack.c.b16 %v3991, %v3959
        %v4504 = vpack.c.b16 %v3992, %v3960
        %v4505 = vpack.c.b16 %v3993, %v3961
        %v4506 = vpack.c.b16 %v3994, %v3962
        %v4507 = vpack.c.b16 %v3995, %v3963
        %v4508 = vpack.c.b16 %v3996, %v3964
        %v4509 = vpack.c.b16 %v3997, %v3965
        %v4510 = vpack.c.b16 %v3998, %v3966
        %v4511 = vpack.c.b16 %v3999, %v3967
        %5024 = vmatpush.bf16.msra.mxu0 %v4224
        %5025 = vmatpush.bf16.msra.mxu0 %v4192
        %5026 = vmatpush.bf16.msra.mxu0 %v4160
        %5027 = vmatpush.bf16.msra.mxu0 %v4128
        %5028 = vmatpush.bf16.msra.mxu0 %v4096
        %5029 = vmatpush.bf16.msra.mxu0 %v4064
        %5030 = vmatpush.bf16.msra.mxu0 %v4032
        %5031 = vmatpush.bf16.msra.mxu0 %v4000
        %5032 = vmatmul.bf16.gmra.mxu0 %v2460
        %v5033 = vpop.f32.mrf.mxu0
        %v5034 = vadd.f32 0.0, %v5033
        %v5035 = vpop.f32.mrf.mxu0
        %v5036 = vadd.f32 0.0, %v5035
        %5037 = vdwg.mxu0
        %5038 = vmatpush.bf16.msra.mxu0 %v4480
        %5039 = vmatpush.bf16.msra.mxu0 %v4448
        %5040 = vmatpush.bf16.msra.mxu0 %v4416
        %5041 = vmatpush.bf16.msra.mxu0 %v4384
        %5042 = vmatpush.bf16.msra.mxu0 %v4352
        %5043 = vmatpush.bf16.msra.mxu0 %v4320
        %5044 = vmatpush.bf16.msra.mxu0 %v4288
        %5045 = vmatpush.bf16.msra.mxu0 %v4256
        %5046 = vmatmul.bf16.gmra.mxu0 %v2461
        %v5047 = vpop.f32.mrf.mxu0
        %v5048 = vadd.f32 %v5034, %v5047
        %v5049 = vpop.f32.mrf.mxu0
        %v5050 = vadd.f32 %v5036, %v5049
        %5051 = vdwg.mxu0
        %5052 = vmatpush.bf16.msra.mxu0 %v4225
        %5053 = vmatpush.bf16.msra.mxu0 %v4193
        %5054 = vmatpush.bf16.msra.mxu0 %v4161
        %5055 = vmatpush.bf16.msra.mxu0 %v4129
        %5056 = vmatpush.bf16.msra.mxu0 %v4097
        %5057 = vmatpush.bf16.msra.mxu0 %v4065
        %5058 = vmatpush.bf16.msra.mxu0 %v4033
        %5059 = vmatpush.bf16.msra.mxu0 %v4001
        %5060 = vmatmul.bf16.gmra.mxu0 %v2460
        %v5061 = vpop.f32.mrf.mxu0
        %v5062 = vadd.f32 0.0, %v5061
        %v5063 = vpop.f32.mrf.mxu0
        %v5064 = vadd.f32 0.0, %v5063
        %5065 = vdwg.mxu0
        %5066 = vmatpush.bf16.msra.mxu0 %v4481
        %5067 = vmatpush.bf16.msra.mxu0 %v4449
        %5068 = vmatpush.bf16.msra.mxu0 %v4417
        %5069 = vmatpush.bf16.msra.mxu0 %v4385
        %5070 = vmatpush.bf16.msra.mxu0 %v4353
        %5071 = vmatpush.bf16.msra.mxu0 %v4321
        %5072 = vmatpush.bf16.msra.mxu0 %v4289
        %5073 = vmatpush.bf16.msra.mxu0 %v4257
        %5074 = vmatmul.bf16.gmra.mxu0 %v2461
        %v5075 = vpop.f32.mrf.mxu0
        %v5076 = vadd.f32 %v5062, %v5075
        %v5077 = vpop.f32.mrf.mxu0
        %v5078 = vadd.f32 %v5064, %v5077
        %5079 = vdwg.mxu0
        %5080 = vmatpush.bf16.msra.mxu0 %v4226
        %5081 = vmatpush.bf16.msra.mxu0 %v4194
        %5082 = vmatpush.bf16.msra.mxu0 %v4162
        %5083 = vmatpush.bf16.msra.mxu0 %v4130
        %5084 = vmatpush.bf16.msra.mxu0 %v4098
        %5085 = vmatpush.bf16.msra.mxu0 %v4066
        %5086 = vmatpush.bf16.msra.mxu0 %v4034
        %5087 = vmatpush.bf16.msra.mxu0 %v4002
        %5088 = vmatmul.bf16.gmra.mxu0 %v2460
        %v5089 = vpop.f32.mrf.mxu0
        %v5090 = vadd.f32 0.0, %v5089
        %v5091 = vpop.f32.mrf.mxu0
        %v5092 = vadd.f32 0.0, %v5091
        %5093 = vdwg.mxu0
        %5094 = vmatpush.bf16.msra.mxu0 %v4482
        %5095 = vmatpush.bf16.msra.mxu0 %v4450
        %5096 = vmatpush.bf16.msra.mxu0 %v4418
        %5097 = vmatpush.bf16.msra.mxu0 %v4386
        %5098 = vmatpush.bf16.msra.mxu0 %v4354
        %5099 = vmatpush.bf16.msra.mxu0 %v4322
        %5100 = vmatpush.bf16.msra.mxu0 %v4290
        %5101 = vmatpush.bf16.msra.mxu0 %v4258
        %5102 = vmatmul.bf16.gmra.mxu0 %v2461
        %v5103 = vpop.f32.mrf.mxu0
        %v5104 = vadd.f32 %v5090, %v5103
        %v5105 = vpop.f32.mrf.mxu0
        %v5106 = vadd.f32 %v5092, %v5105
        %5107 = vdwg.mxu0
        %5108 = vmatpush.bf16.msra.mxu0 %v4227
        %5109 = vmatpush.bf16.msra.mxu0 %v4195
        %5110 = vmatpush.bf16.msra.mxu0 %v4163
        %5111 = vmatpush.bf16.msra.mxu0 %v4131
        %5112 = vmatpush.bf16.msra.mxu0 %v4099
        %5113 = vmatpush.bf16.msra.mxu0 %v4067
        %5114 = vmatpush.bf16.msra.mxu0 %v4035
        %5115 = vmatpush.bf16.msra.mxu0 %v4003
        %5116 = vmatmul.bf16.gmra.mxu0 %v2460
        %v5117 = vpop.f32.mrf.mxu0
        %v5118 = vadd.f32 0.0, %v5117
        %v5119 = vpop.f32.mrf.mxu0
        %v5120 = vadd.f32 0.0, %v5119
        %5121 = vdwg.mxu0
        %5122 = vmatpush.bf16.msra.mxu0 %v4483
        %5123 = vmatpush.bf16.msra.mxu0 %v4451
        %5124 = vmatpush.bf16.msra.mxu0 %v4419
        %5125 = vmatpush.bf16.msra.mxu0 %v4387
        %5126 = vmatpush.bf16.msra.mxu0 %v4355
        %5127 = vmatpush.bf16.msra.mxu0 %v4323
        %5128 = vmatpush.bf16.msra.mxu0 %v4291
        %5129 = vmatpush.bf16.msra.mxu0 %v4259
        %5130 = vmatmul.bf16.gmra.mxu0 %v2461
        %v5131 = vpop.f32.mrf.mxu0
        %v5132 = vadd.f32 %v5118, %v5131
        %v5133 = vpop.f32.mrf.mxu0
        %v5134 = vadd.f32 %v5120, %v5133
        %5135 = vdwg.mxu0
        %5136 = vmatpush.bf16.msra.mxu0 %v4228
        %5137 = vmatpush.bf16.msra.mxu0 %v4196
        %5138 = vmatpush.bf16.msra.mxu0 %v4164
        %5139 = vmatpush.bf16.msra.mxu0 %v4132
        %5140 = vmatpush.bf16.msra.mxu0 %v4100
        %5141 = vmatpush.bf16.msra.mxu0 %v4068
        %5142 = vmatpush.bf16.msra.mxu0 %v4036
        %5143 = vmatpush.bf16.msra.mxu0 %v4004
        %5144 = vmatmul.bf16.gmra.mxu0 %v2460
        %v5145 = vpop.f32.mrf.mxu0
        %v5146 = vadd.f32 0.0, %v5145
        %v5147 = vpop.f32.mrf.mxu0
        %v5148 = vadd.f32 0.0, %v5147
        %5149 = vdwg.mxu0
        %5150 = vmatpush.bf16.msra.mxu0 %v4484
        %5151 = vmatpush.bf16.msra.mxu0 %v4452
        %5152 = vmatpush.bf16.msra.mxu0 %v4420
        %5153 = vmatpush.bf16.msra.mxu0 %v4388
        %5154 = vmatpush.bf16.msra.mxu0 %v4356
        %5155 = vmatpush.bf16.msra.mxu0 %v4324
        %5156 = vmatpush.bf16.msra.mxu0 %v4292
        %5157 = vmatpush.bf16.msra.mxu0 %v4260
        %5158 = vmatmul.bf16.gmra.mxu0 %v2461
        %v5159 = vpop.f32.mrf.mxu0
        %v5160 = vadd.f32 %v5146, %v5159
        %v5161 = vpop.f32.mrf.mxu0
        %v5162 = vadd.f32 %v5148, %v5161
        %5163 = vdwg.mxu0
        %5164 = vmatpush.bf16.msra.mxu0 %v4229
        %5165 = vmatpush.bf16.msra.mxu0 %v4197
        %5166 = vmatpush.bf16.msra.mxu0 %v4165
        %5167 = vmatpush.bf16.msra.mxu0 %v4133
        %5168 = vmatpush.bf16.msra.mxu0 %v4101
        %5169 = vmatpush.bf16.msra.mxu0 %v4069
        %5170 = vmatpush.bf16.msra.mxu0 %v4037
        %5171 = vmatpush.bf16.msra.mxu0 %v4005
        %5172 = vmatmul.bf16.gmra.mxu0 %v2460
        %v5173 = vpop.f32.mrf.mxu0
        %v5174 = vadd.f32 0.0, %v5173
        %v5175 = vpop.f32.mrf.mxu0
        %v5176 = vadd.f32 0.0, %v5175
        %5177 = vdwg.mxu0
        %5178 = vmatpush.bf16.msra.mxu0 %v4485
        %5179 = vmatpush.bf16.msra.mxu0 %v4453
        %5180 = vmatpush.bf16.msra.mxu0 %v4421
        %5181 = vmatpush.bf16.msra.mxu0 %v4389
        %5182 = vmatpush.bf16.msra.mxu0 %v4357
        %5183 = vmatpush.bf16.msra.mxu0 %v4325
        %5184 = vmatpush.bf16.msra.mxu0 %v4293
        %5185 = vmatpush.bf16.msra.mxu0 %v4261
        %5186 = vmatmul.bf16.gmra.mxu0 %v2461
        %v5187 = vpop.f32.mrf.mxu0
        %v5188 = vadd.f32 %v5174, %v5187
        %v5189 = vpop.f32.mrf.mxu0
        %v5190 = vadd.f32 %v5176, %v5189
        %5191 = vdwg.mxu0
        %5192 = vmatpush.bf16.msra.mxu0 %v4230
        %5193 = vmatpush.bf16.msra.mxu0 %v4198
        %5194 = vmatpush.bf16.msra.mxu0 %v4166
        %5195 = vmatpush.bf16.msra.mxu0 %v4134
        %5196 = vmatpush.bf16.msra.mxu0 %v4102
        %5197 = vmatpush.bf16.msra.mxu0 %v4070
        %5198 = vmatpush.bf16.msra.mxu0 %v4038
        %5199 = vmatpush.bf16.msra.mxu0 %v4006
        %5200 = vmatmul.bf16.gmra.mxu0 %v2460
        %v5201 = vpop.f32.mrf.mxu0
        %v5202 = vadd.f32 0.0, %v5201
        %v5203 = vpop.f32.mrf.mxu0
        %v5204 = vadd.f32 0.0, %v5203
        %5205 = vdwg.mxu0
        %5206 = vmatpush.bf16.msra.mxu0 %v4486
        %5207 = vmatpush.bf16.msra.mxu0 %v4454
        %5208 = vmatpush.bf16.msra.mxu0 %v4422
        %5209 = vmatpush.bf16.msra.mxu0 %v4390
        %5210 = vmatpush.bf16.msra.mxu0 %v4358
        %5211 = vmatpush.bf16.msra.mxu0 %v4326
        %5212 = vmatpush.bf16.msra.mxu0 %v4294
        %5213 = vmatpush.bf16.msra.mxu0 %v4262
        %5214 = vmatmul.bf16.gmra.mxu0 %v2461
        %v5215 = vpop.f32.mrf.mxu0
        %v5216 = vadd.f32 %v5202, %v5215
        %v5217 = vpop.f32.mrf.mxu0
        %v5218 = vadd.f32 %v5204, %v5217
        %5219 = vdwg.mxu0
        %5220 = vmatpush.bf16.msra.mxu0 %v4231
        %5221 = vmatpush.bf16.msra.mxu0 %v4199
        %5222 = vmatpush.bf16.msra.mxu0 %v4167
        %5223 = vmatpush.bf16.msra.mxu0 %v4135
        %5224 = vmatpush.bf16.msra.mxu0 %v4103
        %5225 = vmatpush.bf16.msra.mxu0 %v4071
        %5226 = vmatpush.bf16.msra.mxu0 %v4039
        %5227 = vmatpush.bf16.msra.mxu0 %v4007
        %5228 = vmatmul.bf16.gmra.mxu0 %v2460
        %v5229 = vpop.f32.mrf.mxu0
        %v5230 = vadd.f32 0.0, %v5229
        %v5231 = vpop.f32.mrf.mxu0
        %v5232 = vadd.f32 0.0, %v5231
        %5233 = vdwg.mxu0
        %5234 = vmatpush.bf16.msra.mxu0 %v4487
        %5235 = vmatpush.bf16.msra.mxu0 %v4455
        %5236 = vmatpush.bf16.msra.mxu0 %v4423
        %5237 = vmatpush.bf16.msra.mxu0 %v4391
        %5238 = vmatpush.bf16.msra.mxu0 %v4359
        %5239 = vmatpush.bf16.msra.mxu0 %v4327
        %5240 = vmatpush.bf16.msra.mxu0 %v4295
        %5241 = vmatpush.bf16.msra.mxu0 %v4263
        %5242 = vmatmul.bf16.gmra.mxu0 %v2461
        %v5243 = vpop.f32.mrf.mxu0
        %v5244 = vadd.f32 %v5230, %v5243
        %v5245 = vpop.f32.mrf.mxu0
        %v5246 = vadd.f32 %v5232, %v5245
        %5247 = vdwg.mxu0
        %5248 = vmatpush.bf16.msra.mxu0 %v4232
        %5249 = vmatpush.bf16.msra.mxu0 %v4200
        %5250 = vmatpush.bf16.msra.mxu0 %v4168
        %5251 = vmatpush.bf16.msra.mxu0 %v4136
        %5252 = vmatpush.bf16.msra.mxu0 %v4104
        %5253 = vmatpush.bf16.msra.mxu0 %v4072
        %5254 = vmatpush.bf16.msra.mxu0 %v4040
        %5255 = vmatpush.bf16.msra.mxu0 %v4008
        %5256 = vmatmul.bf16.gmra.mxu0 %v2460
        %v5257 = vpop.f32.mrf.mxu0
        %v5258 = vadd.f32 0.0, %v5257
        %v5259 = vpop.f32.mrf.mxu0
        %v5260 = vadd.f32 0.0, %v5259
        %5261 = vdwg.mxu0
        %5262 = vmatpush.bf16.msra.mxu0 %v4488
        %5263 = vmatpush.bf16.msra.mxu0 %v4456
        %5264 = vmatpush.bf16.msra.mxu0 %v4424
        %5265 = vmatpush.bf16.msra.mxu0 %v4392
        %5266 = vmatpush.bf16.msra.mxu0 %v4360
        %5267 = vmatpush.bf16.msra.mxu0 %v4328
        %5268 = vmatpush.bf16.msra.mxu0 %v4296
        %5269 = vmatpush.bf16.msra.mxu0 %v4264
        %5270 = vmatmul.bf16.gmra.mxu0 %v2461
        %v5271 = vpop.f32.mrf.mxu0
        %v5272 = vadd.f32 %v5258, %v5271
        %v5273 = vpop.f32.mrf.mxu0
        %v5274 = vadd.f32 %v5260, %v5273
        %5275 = vdwg.mxu0
        %5276 = vmatpush.bf16.msra.mxu0 %v4233
        %5277 = vmatpush.bf16.msra.mxu0 %v4201
        %5278 = vmatpush.bf16.msra.mxu0 %v4169
        %5279 = vmatpush.bf16.msra.mxu0 %v4137
        %5280 = vmatpush.bf16.msra.mxu0 %v4105
        %5281 = vmatpush.bf16.msra.mxu0 %v4073
        %5282 = vmatpush.bf16.msra.mxu0 %v4041
        %5283 = vmatpush.bf16.msra.mxu0 %v4009
        %5284 = vmatmul.bf16.gmra.mxu0 %v2460
        %v5285 = vpop.f32.mrf.mxu0
        %v5286 = vadd.f32 0.0, %v5285
        %v5287 = vpop.f32.mrf.mxu0
        %v5288 = vadd.f32 0.0, %v5287
        %5289 = vdwg.mxu0
        %5290 = vmatpush.bf16.msra.mxu0 %v4489
        %5291 = vmatpush.bf16.msra.mxu0 %v4457
        %5292 = vmatpush.bf16.msra.mxu0 %v4425
        %5293 = vmatpush.bf16.msra.mxu0 %v4393
        %5294 = vmatpush.bf16.msra.mxu0 %v4361
        %5295 = vmatpush.bf16.msra.mxu0 %v4329
        %5296 = vmatpush.bf16.msra.mxu0 %v4297
        %5297 = vmatpush.bf16.msra.mxu0 %v4265
        %5298 = vmatmul.bf16.gmra.mxu0 %v2461
        %v5299 = vpop.f32.mrf.mxu0
        %v5300 = vadd.f32 %v5286, %v5299
        %v5301 = vpop.f32.mrf.mxu0
        %v5302 = vadd.f32 %v5288, %v5301
        %5303 = vdwg.mxu0
        %5304 = vmatpush.bf16.msra.mxu0 %v4234
        %5305 = vmatpush.bf16.msra.mxu0 %v4202
        %5306 = vmatpush.bf16.msra.mxu0 %v4170
        %5307 = vmatpush.bf16.msra.mxu0 %v4138
        %5308 = vmatpush.bf16.msra.mxu0 %v4106
        %5309 = vmatpush.bf16.msra.mxu0 %v4074
        %5310 = vmatpush.bf16.msra.mxu0 %v4042
        %5311 = vmatpush.bf16.msra.mxu0 %v4010
        %5312 = vmatmul.bf16.gmra.mxu0 %v2460
        %v5313 = vpop.f32.mrf.mxu0
        %v5314 = vadd.f32 0.0, %v5313
        %v5315 = vpop.f32.mrf.mxu0
        %v5316 = vadd.f32 0.0, %v5315
        %5317 = vdwg.mxu0
        %5318 = vmatpush.bf16.msra.mxu0 %v4490
        %5319 = vmatpush.bf16.msra.mxu0 %v4458
        %5320 = vmatpush.bf16.msra.mxu0 %v4426
        %5321 = vmatpush.bf16.msra.mxu0 %v4394
        %5322 = vmatpush.bf16.msra.mxu0 %v4362
        %5323 = vmatpush.bf16.msra.mxu0 %v4330
        %5324 = vmatpush.bf16.msra.mxu0 %v4298
        %5325 = vmatpush.bf16.msra.mxu0 %v4266
        %5326 = vmatmul.bf16.gmra.mxu0 %v2461
        %v5327 = vpop.f32.mrf.mxu0
        %v5328 = vadd.f32 %v5314, %v5327
        %v5329 = vpop.f32.mrf.mxu0
        %v5330 = vadd.f32 %v5316, %v5329
        %5331 = vdwg.mxu0
        %5332 = vmatpush.bf16.msra.mxu0 %v4235
        %5333 = vmatpush.bf16.msra.mxu0 %v4203
        %5334 = vmatpush.bf16.msra.mxu0 %v4171
        %5335 = vmatpush.bf16.msra.mxu0 %v4139
        %5336 = vmatpush.bf16.msra.mxu0 %v4107
        %5337 = vmatpush.bf16.msra.mxu0 %v4075
        %5338 = vmatpush.bf16.msra.mxu0 %v4043
        %5339 = vmatpush.bf16.msra.mxu0 %v4011
        %5340 = vmatmul.bf16.gmra.mxu0 %v2460
        %v5341 = vpop.f32.mrf.mxu0
        %v5342 = vadd.f32 0.0, %v5341
        %v5343 = vpop.f32.mrf.mxu0
        %v5344 = vadd.f32 0.0, %v5343
        %5345 = vdwg.mxu0
        %5346 = vmatpush.bf16.msra.mxu0 %v4491
        %5347 = vmatpush.bf16.msra.mxu0 %v4459
        %5348 = vmatpush.bf16.msra.mxu0 %v4427
        %5349 = vmatpush.bf16.msra.mxu0 %v4395
        %5350 = vmatpush.bf16.msra.mxu0 %v4363
        %5351 = vmatpush.bf16.msra.mxu0 %v4331
        %5352 = vmatpush.bf16.msra.mxu0 %v4299
        %5353 = vmatpush.bf16.msra.mxu0 %v4267
        %5354 = vmatmul.bf16.gmra.mxu0 %v2461
        %v5355 = vpop.f32.mrf.mxu0
        %v5356 = vadd.f32 %v5342, %v5355
        %v5357 = vpop.f32.mrf.mxu0
        %v5358 = vadd.f32 %v5344, %v5357
        %5359 = vdwg.mxu0
        %5360 = vmatpush.bf16.msra.mxu0 %v4236
        %5361 = vmatpush.bf16.msra.mxu0 %v4204
        %5362 = vmatpush.bf16.msra.mxu0 %v4172
        %5363 = vmatpush.bf16.msra.mxu0 %v4140
        %5364 = vmatpush.bf16.msra.mxu0 %v4108
        %5365 = vmatpush.bf16.msra.mxu0 %v4076
        %5366 = vmatpush.bf16.msra.mxu0 %v4044
        %5367 = vmatpush.bf16.msra.mxu0 %v4012
        %5368 = vmatmul.bf16.gmra.mxu0 %v2460
        %v5369 = vpop.f32.mrf.mxu0
        %v5370 = vadd.f32 0.0, %v5369
        %v5371 = vpop.f32.mrf.mxu0
        %v5372 = vadd.f32 0.0, %v5371
        %5373 = vdwg.mxu0
        %5374 = vmatpush.bf16.msra.mxu0 %v4492
        %5375 = vmatpush.bf16.msra.mxu0 %v4460
        %5376 = vmatpush.bf16.msra.mxu0 %v4428
        %5377 = vmatpush.bf16.msra.mxu0 %v4396
        %5378 = vmatpush.bf16.msra.mxu0 %v4364
        %5379 = vmatpush.bf16.msra.mxu0 %v4332
        %5380 = vmatpush.bf16.msra.mxu0 %v4300
        %5381 = vmatpush.bf16.msra.mxu0 %v4268
        %5382 = vmatmul.bf16.gmra.mxu0 %v2461
        %v5383 = vpop.f32.mrf.mxu0
        %v5384 = vadd.f32 %v5370, %v5383
        %v5385 = vpop.f32.mrf.mxu0
        %v5386 = vadd.f32 %v5372, %v5385
        %5387 = vdwg.mxu0
        %5388 = vmatpush.bf16.msra.mxu0 %v4237
        %5389 = vmatpush.bf16.msra.mxu0 %v4205
        %5390 = vmatpush.bf16.msra.mxu0 %v4173
        %5391 = vmatpush.bf16.msra.mxu0 %v4141
        %5392 = vmatpush.bf16.msra.mxu0 %v4109
        %5393 = vmatpush.bf16.msra.mxu0 %v4077
        %5394 = vmatpush.bf16.msra.mxu0 %v4045
        %5395 = vmatpush.bf16.msra.mxu0 %v4013
        %5396 = vmatmul.bf16.gmra.mxu0 %v2460
        %v5397 = vpop.f32.mrf.mxu0
        %v5398 = vadd.f32 0.0, %v5397
        %v5399 = vpop.f32.mrf.mxu0
        %v5400 = vadd.f32 0.0, %v5399
        %5401 = vdwg.mxu0
        %5402 = vmatpush.bf16.msra.mxu0 %v4493
        %5403 = vmatpush.bf16.msra.mxu0 %v4461
        %5404 = vmatpush.bf16.msra.mxu0 %v4429
        %5405 = vmatpush.bf16.msra.mxu0 %v4397
        %5406 = vmatpush.bf16.msra.mxu0 %v4365
        %5407 = vmatpush.bf16.msra.mxu0 %v4333
        %5408 = vmatpush.bf16.msra.mxu0 %v4301
        %5409 = vmatpush.bf16.msra.mxu0 %v4269
        %5410 = vmatmul.bf16.gmra.mxu0 %v2461
        %v5411 = vpop.f32.mrf.mxu0
        %v5412 = vadd.f32 %v5398, %v5411
        %v5413 = vpop.f32.mrf.mxu0
        %v5414 = vadd.f32 %v5400, %v5413
        %5415 = vdwg.mxu0
        %5416 = vmatpush.bf16.msra.mxu0 %v4238
        %5417 = vmatpush.bf16.msra.mxu0 %v4206
        %5418 = vmatpush.bf16.msra.mxu0 %v4174
        %5419 = vmatpush.bf16.msra.mxu0 %v4142
        %5420 = vmatpush.bf16.msra.mxu0 %v4110
        %5421 = vmatpush.bf16.msra.mxu0 %v4078
        %5422 = vmatpush.bf16.msra.mxu0 %v4046
        %5423 = vmatpush.bf16.msra.mxu0 %v4014
        %5424 = vmatmul.bf16.gmra.mxu0 %v2460
        %v5425 = vpop.f32.mrf.mxu0
        %v5426 = vadd.f32 0.0, %v5425
        %v5427 = vpop.f32.mrf.mxu0
        %v5428 = vadd.f32 0.0, %v5427
        %5429 = vdwg.mxu0
        %5430 = vmatpush.bf16.msra.mxu0 %v4494
        %5431 = vmatpush.bf16.msra.mxu0 %v4462
        %5432 = vmatpush.bf16.msra.mxu0 %v4430
        %5433 = vmatpush.bf16.msra.mxu0 %v4398
        %5434 = vmatpush.bf16.msra.mxu0 %v4366
        %5435 = vmatpush.bf16.msra.mxu0 %v4334
        %5436 = vmatpush.bf16.msra.mxu0 %v4302
        %5437 = vmatpush.bf16.msra.mxu0 %v4270
        %5438 = vmatmul.bf16.gmra.mxu0 %v2461
        %v5439 = vpop.f32.mrf.mxu0
        %v5440 = vadd.f32 %v5426, %v5439
        %v5441 = vpop.f32.mrf.mxu0
        %v5442 = vadd.f32 %v5428, %v5441
        %5443 = vdwg.mxu0
        %5444 = vmatpush.bf16.msra.mxu0 %v4239
        %5445 = vmatpush.bf16.msra.mxu0 %v4207
        %5446 = vmatpush.bf16.msra.mxu0 %v4175
        %5447 = vmatpush.bf16.msra.mxu0 %v4143
        %5448 = vmatpush.bf16.msra.mxu0 %v4111
        %5449 = vmatpush.bf16.msra.mxu0 %v4079
        %5450 = vmatpush.bf16.msra.mxu0 %v4047
        %5451 = vmatpush.bf16.msra.mxu0 %v4015
        %5452 = vmatmul.bf16.gmra.mxu0 %v2460
        %v5453 = vpop.f32.mrf.mxu0
        %v5454 = vadd.f32 0.0, %v5453
        %v5455 = vpop.f32.mrf.mxu0
        %v5456 = vadd.f32 0.0, %v5455
        %5457 = vdwg.mxu0
        %5458 = vmatpush.bf16.msra.mxu0 %v4495
        %5459 = vmatpush.bf16.msra.mxu0 %v4463
        %5460 = vmatpush.bf16.msra.mxu0 %v4431
        %5461 = vmatpush.bf16.msra.mxu0 %v4399
        %5462 = vmatpush.bf16.msra.mxu0 %v4367
        %5463 = vmatpush.bf16.msra.mxu0 %v4335
        %5464 = vmatpush.bf16.msra.mxu0 %v4303
        %5465 = vmatpush.bf16.msra.mxu0 %v4271
        %5466 = vmatmul.bf16.gmra.mxu0 %v2461
        %v5467 = vpop.f32.mrf.mxu0
        %v5468 = vadd.f32 %v5454, %v5467
        %v5469 = vpop.f32.mrf.mxu0
        %v5470 = vadd.f32 %v5456, %v5469
        %5471 = vdwg.mxu0
        %5472 = vmatpush.bf16.msra.mxu0 %v4240
        %5473 = vmatpush.bf16.msra.mxu0 %v4208
        %5474 = vmatpush.bf16.msra.mxu0 %v4176
        %5475 = vmatpush.bf16.msra.mxu0 %v4144
        %5476 = vmatpush.bf16.msra.mxu0 %v4112
        %5477 = vmatpush.bf16.msra.mxu0 %v4080
        %5478 = vmatpush.bf16.msra.mxu0 %v4048
        %5479 = vmatpush.bf16.msra.mxu0 %v4016
        %5480 = vmatmul.bf16.gmra.mxu0 %v2460
        %v5481 = vpop.f32.mrf.mxu0
        %v5482 = vadd.f32 0.0, %v5481
        %v5483 = vpop.f32.mrf.mxu0
        %v5484 = vadd.f32 0.0, %v5483
        %5485 = vdwg.mxu0
        %5486 = vmatpush.bf16.msra.mxu0 %v4496
        %5487 = vmatpush.bf16.msra.mxu0 %v4464
        %5488 = vmatpush.bf16.msra.mxu0 %v4432
        %5489 = vmatpush.bf16.msra.mxu0 %v4400
        %5490 = vmatpush.bf16.msra.mxu0 %v4368
        %5491 = vmatpush.bf16.msra.mxu0 %v4336
        %5492 = vmatpush.bf16.msra.mxu0 %v4304
        %5493 = vmatpush.bf16.msra.mxu0 %v4272
        %5494 = vmatmul.bf16.gmra.mxu0 %v2461
        %v5495 = vpop.f32.mrf.mxu0
        %v5496 = vadd.f32 %v5482, %v5495
        %v5497 = vpop.f32.mrf.mxu0
        %v5498 = vadd.f32 %v5484, %v5497
        %5499 = vdwg.mxu0
        %5500 = vmatpush.bf16.msra.mxu0 %v4241
        %5501 = vmatpush.bf16.msra.mxu0 %v4209
        %5502 = vmatpush.bf16.msra.mxu0 %v4177
        %5503 = vmatpush.bf16.msra.mxu0 %v4145
        %5504 = vmatpush.bf16.msra.mxu0 %v4113
        %5505 = vmatpush.bf16.msra.mxu0 %v4081
        %5506 = vmatpush.bf16.msra.mxu0 %v4049
        %5507 = vmatpush.bf16.msra.mxu0 %v4017
        %5508 = vmatmul.bf16.gmra.mxu0 %v2460
        %v5509 = vpop.f32.mrf.mxu0
        %v5510 = vadd.f32 0.0, %v5509
        %v5511 = vpop.f32.mrf.mxu0
        %v5512 = vadd.f32 0.0, %v5511
        %5513 = vdwg.mxu0
        %5514 = vmatpush.bf16.msra.mxu0 %v4497
        %5515 = vmatpush.bf16.msra.mxu0 %v4465
        %5516 = vmatpush.bf16.msra.mxu0 %v4433
        %5517 = vmatpush.bf16.msra.mxu0 %v4401
        %5518 = vmatpush.bf16.msra.mxu0 %v4369
        %5519 = vmatpush.bf16.msra.mxu0 %v4337
        %5520 = vmatpush.bf16.msra.mxu0 %v4305
        %5521 = vmatpush.bf16.msra.mxu0 %v4273
        %5522 = vmatmul.bf16.gmra.mxu0 %v2461
        %v5523 = vpop.f32.mrf.mxu0
        %v5524 = vadd.f32 %v5510, %v5523
        %v5525 = vpop.f32.mrf.mxu0
        %v5526 = vadd.f32 %v5512, %v5525
        %5527 = vdwg.mxu0
        %5528 = vmatpush.bf16.msra.mxu0 %v4242
        %5529 = vmatpush.bf16.msra.mxu0 %v4210
        %5530 = vmatpush.bf16.msra.mxu0 %v4178
        %5531 = vmatpush.bf16.msra.mxu0 %v4146
        %5532 = vmatpush.bf16.msra.mxu0 %v4114
        %5533 = vmatpush.bf16.msra.mxu0 %v4082
        %5534 = vmatpush.bf16.msra.mxu0 %v4050
        %5535 = vmatpush.bf16.msra.mxu0 %v4018
        %5536 = vmatmul.bf16.gmra.mxu0 %v2460
        %v5537 = vpop.f32.mrf.mxu0
        %v5538 = vadd.f32 0.0, %v5537
        %v5539 = vpop.f32.mrf.mxu0
        %v5540 = vadd.f32 0.0, %v5539
        %5541 = vdwg.mxu0
        %5542 = vmatpush.bf16.msra.mxu0 %v4498
        %5543 = vmatpush.bf16.msra.mxu0 %v4466
        %5544 = vmatpush.bf16.msra.mxu0 %v4434
        %5545 = vmatpush.bf16.msra.mxu0 %v4402
        %5546 = vmatpush.bf16.msra.mxu0 %v4370
        %5547 = vmatpush.bf16.msra.mxu0 %v4338
        %5548 = vmatpush.bf16.msra.mxu0 %v4306
        %5549 = vmatpush.bf16.msra.mxu0 %v4274
        %5550 = vmatmul.bf16.gmra.mxu0 %v2461
        %v5551 = vpop.f32.mrf.mxu0
        %v5552 = vadd.f32 %v5538, %v5551
        %v5553 = vpop.f32.mrf.mxu0
        %v5554 = vadd.f32 %v5540, %v5553
        %5555 = vdwg.mxu0
        %5556 = vmatpush.bf16.msra.mxu0 %v4243
        %5557 = vmatpush.bf16.msra.mxu0 %v4211
        %5558 = vmatpush.bf16.msra.mxu0 %v4179
        %5559 = vmatpush.bf16.msra.mxu0 %v4147
        %5560 = vmatpush.bf16.msra.mxu0 %v4115
        %5561 = vmatpush.bf16.msra.mxu0 %v4083
        %5562 = vmatpush.bf16.msra.mxu0 %v4051
        %5563 = vmatpush.bf16.msra.mxu0 %v4019
        %5564 = vmatmul.bf16.gmra.mxu0 %v2460
        %v5565 = vpop.f32.mrf.mxu0
        %v5566 = vadd.f32 0.0, %v5565
        %v5567 = vpop.f32.mrf.mxu0
        %v5568 = vadd.f32 0.0, %v5567
        %5569 = vdwg.mxu0
        %5570 = vmatpush.bf16.msra.mxu0 %v4499
        %5571 = vmatpush.bf16.msra.mxu0 %v4467
        %5572 = vmatpush.bf16.msra.mxu0 %v4435
        %5573 = vmatpush.bf16.msra.mxu0 %v4403
        %5574 = vmatpush.bf16.msra.mxu0 %v4371
        %5575 = vmatpush.bf16.msra.mxu0 %v4339
        %5576 = vmatpush.bf16.msra.mxu0 %v4307
        %5577 = vmatpush.bf16.msra.mxu0 %v4275
        %5578 = vmatmul.bf16.gmra.mxu0 %v2461
        %v5579 = vpop.f32.mrf.mxu0
        %v5580 = vadd.f32 %v5566, %v5579
        %v5581 = vpop.f32.mrf.mxu0
        %v5582 = vadd.f32 %v5568, %v5581
        %5583 = vdwg.mxu0
        %5584 = vmatpush.bf16.msra.mxu0 %v4244
        %5585 = vmatpush.bf16.msra.mxu0 %v4212
        %5586 = vmatpush.bf16.msra.mxu0 %v4180
        %5587 = vmatpush.bf16.msra.mxu0 %v4148
        %5588 = vmatpush.bf16.msra.mxu0 %v4116
        %5589 = vmatpush.bf16.msra.mxu0 %v4084
        %5590 = vmatpush.bf16.msra.mxu0 %v4052
        %5591 = vmatpush.bf16.msra.mxu0 %v4020
        %5592 = vmatmul.bf16.gmra.mxu0 %v2460
        %v5593 = vpop.f32.mrf.mxu0
        %v5594 = vadd.f32 0.0, %v5593
        %v5595 = vpop.f32.mrf.mxu0
        %v5596 = vadd.f32 0.0, %v5595
        %5597 = vdwg.mxu0
        %5598 = vmatpush.bf16.msra.mxu0 %v4500
        %5599 = vmatpush.bf16.msra.mxu0 %v4468
        %5600 = vmatpush.bf16.msra.mxu0 %v4436
        %5601 = vmatpush.bf16.msra.mxu0 %v4404
        %5602 = vmatpush.bf16.msra.mxu0 %v4372
        %5603 = vmatpush.bf16.msra.mxu0 %v4340
        %5604 = vmatpush.bf16.msra.mxu0 %v4308
        %5605 = vmatpush.bf16.msra.mxu0 %v4276
        %5606 = vmatmul.bf16.gmra.mxu0 %v2461
        %v5607 = vpop.f32.mrf.mxu0
        %v5608 = vadd.f32 %v5594, %v5607
        %v5609 = vpop.f32.mrf.mxu0
        %v5610 = vadd.f32 %v5596, %v5609
        %5611 = vdwg.mxu0
        %5612 = vmatpush.bf16.msra.mxu0 %v4245
        %5613 = vmatpush.bf16.msra.mxu0 %v4213
        %5614 = vmatpush.bf16.msra.mxu0 %v4181
        %5615 = vmatpush.bf16.msra.mxu0 %v4149
        %5616 = vmatpush.bf16.msra.mxu0 %v4117
        %5617 = vmatpush.bf16.msra.mxu0 %v4085
        %5618 = vmatpush.bf16.msra.mxu0 %v4053
        %5619 = vmatpush.bf16.msra.mxu0 %v4021
        %5620 = vmatmul.bf16.gmra.mxu0 %v2460
        %v5621 = vpop.f32.mrf.mxu0
        %v5622 = vadd.f32 0.0, %v5621
        %v5623 = vpop.f32.mrf.mxu0
        %v5624 = vadd.f32 0.0, %v5623
        %5625 = vdwg.mxu0
        %5626 = vmatpush.bf16.msra.mxu0 %v4501
        %5627 = vmatpush.bf16.msra.mxu0 %v4469
        %5628 = vmatpush.bf16.msra.mxu0 %v4437
        %5629 = vmatpush.bf16.msra.mxu0 %v4405
        %5630 = vmatpush.bf16.msra.mxu0 %v4373
        %5631 = vmatpush.bf16.msra.mxu0 %v4341
        %5632 = vmatpush.bf16.msra.mxu0 %v4309
        %5633 = vmatpush.bf16.msra.mxu0 %v4277
        %5634 = vmatmul.bf16.gmra.mxu0 %v2461
        %v5635 = vpop.f32.mrf.mxu0
        %v5636 = vadd.f32 %v5622, %v5635
        %v5637 = vpop.f32.mrf.mxu0
        %v5638 = vadd.f32 %v5624, %v5637
        %5639 = vdwg.mxu0
        %5640 = vmatpush.bf16.msra.mxu0 %v4246
        %5641 = vmatpush.bf16.msra.mxu0 %v4214
        %5642 = vmatpush.bf16.msra.mxu0 %v4182
        %5643 = vmatpush.bf16.msra.mxu0 %v4150
        %5644 = vmatpush.bf16.msra.mxu0 %v4118
        %5645 = vmatpush.bf16.msra.mxu0 %v4086
        %5646 = vmatpush.bf16.msra.mxu0 %v4054
        %5647 = vmatpush.bf16.msra.mxu0 %v4022
        %5648 = vmatmul.bf16.gmra.mxu0 %v2460
        %v5649 = vpop.f32.mrf.mxu0
        %v5650 = vadd.f32 0.0, %v5649
        %v5651 = vpop.f32.mrf.mxu0
        %v5652 = vadd.f32 0.0, %v5651
        %5653 = vdwg.mxu0
        %5654 = vmatpush.bf16.msra.mxu0 %v4502
        %5655 = vmatpush.bf16.msra.mxu0 %v4470
        %5656 = vmatpush.bf16.msra.mxu0 %v4438
        %5657 = vmatpush.bf16.msra.mxu0 %v4406
        %5658 = vmatpush.bf16.msra.mxu0 %v4374
        %5659 = vmatpush.bf16.msra.mxu0 %v4342
        %5660 = vmatpush.bf16.msra.mxu0 %v4310
        %5661 = vmatpush.bf16.msra.mxu0 %v4278
        %5662 = vmatmul.bf16.gmra.mxu0 %v2461
        %v5663 = vpop.f32.mrf.mxu0
        %v5664 = vadd.f32 %v5650, %v5663
        %v5665 = vpop.f32.mrf.mxu0
        %v5666 = vadd.f32 %v5652, %v5665
        %5667 = vdwg.mxu0
        %5668 = vmatpush.bf16.msra.mxu0 %v4247
        %5669 = vmatpush.bf16.msra.mxu0 %v4215
        %5670 = vmatpush.bf16.msra.mxu0 %v4183
        %5671 = vmatpush.bf16.msra.mxu0 %v4151
        %5672 = vmatpush.bf16.msra.mxu0 %v4119
        %5673 = vmatpush.bf16.msra.mxu0 %v4087
        %5674 = vmatpush.bf16.msra.mxu0 %v4055
        %5675 = vmatpush.bf16.msra.mxu0 %v4023
        %5676 = vmatmul.bf16.gmra.mxu0 %v2460
        %v5677 = vpop.f32.mrf.mxu0
        %v5678 = vadd.f32 0.0, %v5677
        %v5679 = vpop.f32.mrf.mxu0
        %v5680 = vadd.f32 0.0, %v5679
        %5681 = vdwg.mxu0
        %5682 = vmatpush.bf16.msra.mxu0 %v4503
        %5683 = vmatpush.bf16.msra.mxu0 %v4471
        %5684 = vmatpush.bf16.msra.mxu0 %v4439
        %5685 = vmatpush.bf16.msra.mxu0 %v4407
        %5686 = vmatpush.bf16.msra.mxu0 %v4375
        %5687 = vmatpush.bf16.msra.mxu0 %v4343
        %5688 = vmatpush.bf16.msra.mxu0 %v4311
        %5689 = vmatpush.bf16.msra.mxu0 %v4279
        %5690 = vmatmul.bf16.gmra.mxu0 %v2461
        %v5691 = vpop.f32.mrf.mxu0
        %v5692 = vadd.f32 %v5678, %v5691
        %v5693 = vpop.f32.mrf.mxu0
        %v5694 = vadd.f32 %v5680, %v5693
        %5695 = vdwg.mxu0
        %5696 = vmatpush.bf16.msra.mxu0 %v4248
        %5697 = vmatpush.bf16.msra.mxu0 %v4216
        %5698 = vmatpush.bf16.msra.mxu0 %v4184
        %5699 = vmatpush.bf16.msra.mxu0 %v4152
        %5700 = vmatpush.bf16.msra.mxu0 %v4120
        %5701 = vmatpush.bf16.msra.mxu0 %v4088
        %5702 = vmatpush.bf16.msra.mxu0 %v4056
        %5703 = vmatpush.bf16.msra.mxu0 %v4024
        %5704 = vmatmul.bf16.gmra.mxu0 %v2460
        %v5705 = vpop.f32.mrf.mxu0
        %v5706 = vadd.f32 0.0, %v5705
        %v5707 = vpop.f32.mrf.mxu0
        %v5708 = vadd.f32 0.0, %v5707
        %5709 = vdwg.mxu0
        %5710 = vmatpush.bf16.msra.mxu0 %v4504
        %5711 = vmatpush.bf16.msra.mxu0 %v4472
        %5712 = vmatpush.bf16.msra.mxu0 %v4440
        %5713 = vmatpush.bf16.msra.mxu0 %v4408
        %5714 = vmatpush.bf16.msra.mxu0 %v4376
        %5715 = vmatpush.bf16.msra.mxu0 %v4344
        %5716 = vmatpush.bf16.msra.mxu0 %v4312
        %5717 = vmatpush.bf16.msra.mxu0 %v4280
        %5718 = vmatmul.bf16.gmra.mxu0 %v2461
        %v5719 = vpop.f32.mrf.mxu0
        %v5720 = vadd.f32 %v5706, %v5719
        %v5721 = vpop.f32.mrf.mxu0
        %v5722 = vadd.f32 %v5708, %v5721
        %5723 = vdwg.mxu0
        %5724 = vmatpush.bf16.msra.mxu0 %v4249
        %5725 = vmatpush.bf16.msra.mxu0 %v4217
        %5726 = vmatpush.bf16.msra.mxu0 %v4185
        %5727 = vmatpush.bf16.msra.mxu0 %v4153
        %5728 = vmatpush.bf16.msra.mxu0 %v4121
        %5729 = vmatpush.bf16.msra.mxu0 %v4089
        %5730 = vmatpush.bf16.msra.mxu0 %v4057
        %5731 = vmatpush.bf16.msra.mxu0 %v4025
        %5732 = vmatmul.bf16.gmra.mxu0 %v2460
        %v5733 = vpop.f32.mrf.mxu0
        %v5734 = vadd.f32 0.0, %v5733
        %v5735 = vpop.f32.mrf.mxu0
        %v5736 = vadd.f32 0.0, %v5735
        %5737 = vdwg.mxu0
        %5738 = vmatpush.bf16.msra.mxu0 %v4505
        %5739 = vmatpush.bf16.msra.mxu0 %v4473
        %5740 = vmatpush.bf16.msra.mxu0 %v4441
        %5741 = vmatpush.bf16.msra.mxu0 %v4409
        %5742 = vmatpush.bf16.msra.mxu0 %v4377
        %5743 = vmatpush.bf16.msra.mxu0 %v4345
        %5744 = vmatpush.bf16.msra.mxu0 %v4313
        %5745 = vmatpush.bf16.msra.mxu0 %v4281
        %5746 = vmatmul.bf16.gmra.mxu0 %v2461
        %v5747 = vpop.f32.mrf.mxu0
        %v5748 = vadd.f32 %v5734, %v5747
        %v5749 = vpop.f32.mrf.mxu0
        %v5750 = vadd.f32 %v5736, %v5749
        %5751 = vdwg.mxu0
        %5752 = vmatpush.bf16.msra.mxu0 %v4250
        %5753 = vmatpush.bf16.msra.mxu0 %v4218
        %5754 = vmatpush.bf16.msra.mxu0 %v4186
        %5755 = vmatpush.bf16.msra.mxu0 %v4154
        %5756 = vmatpush.bf16.msra.mxu0 %v4122
        %5757 = vmatpush.bf16.msra.mxu0 %v4090
        %5758 = vmatpush.bf16.msra.mxu0 %v4058
        %5759 = vmatpush.bf16.msra.mxu0 %v4026
        %5760 = vmatmul.bf16.gmra.mxu0 %v2460
        %v5761 = vpop.f32.mrf.mxu0
        %v5762 = vadd.f32 0.0, %v5761
        %v5763 = vpop.f32.mrf.mxu0
        %v5764 = vadd.f32 0.0, %v5763
        %5765 = vdwg.mxu0
        %5766 = vmatpush.bf16.msra.mxu0 %v4506
        %5767 = vmatpush.bf16.msra.mxu0 %v4474
        %5768 = vmatpush.bf16.msra.mxu0 %v4442
        %5769 = vmatpush.bf16.msra.mxu0 %v4410
        %5770 = vmatpush.bf16.msra.mxu0 %v4378
        %5771 = vmatpush.bf16.msra.mxu0 %v4346
        %5772 = vmatpush.bf16.msra.mxu0 %v4314
        %5773 = vmatpush.bf16.msra.mxu0 %v4282
        %5774 = vmatmul.bf16.gmra.mxu0 %v2461
        %v5775 = vpop.f32.mrf.mxu0
        %v5776 = vadd.f32 %v5762, %v5775
        %v5777 = vpop.f32.mrf.mxu0
        %v5778 = vadd.f32 %v5764, %v5777
        %5779 = vdwg.mxu0
        %5780 = vmatpush.bf16.msra.mxu0 %v4251
        %5781 = vmatpush.bf16.msra.mxu0 %v4219
        %5782 = vmatpush.bf16.msra.mxu0 %v4187
        %5783 = vmatpush.bf16.msra.mxu0 %v4155
        %5784 = vmatpush.bf16.msra.mxu0 %v4123
        %5785 = vmatpush.bf16.msra.mxu0 %v4091
        %5786 = vmatpush.bf16.msra.mxu0 %v4059
        %5787 = vmatpush.bf16.msra.mxu0 %v4027
        %5788 = vmatmul.bf16.gmra.mxu0 %v2460
        %v5789 = vpop.f32.mrf.mxu0
        %v5790 = vadd.f32 0.0, %v5789
        %v5791 = vpop.f32.mrf.mxu0
        %v5792 = vadd.f32 0.0, %v5791
        %5793 = vdwg.mxu0
        %5794 = vmatpush.bf16.msra.mxu0 %v4507
        %5795 = vmatpush.bf16.msra.mxu0 %v4475
        %5796 = vmatpush.bf16.msra.mxu0 %v4443
        %5797 = vmatpush.bf16.msra.mxu0 %v4411
        %5798 = vmatpush.bf16.msra.mxu0 %v4379
        %5799 = vmatpush.bf16.msra.mxu0 %v4347
        %5800 = vmatpush.bf16.msra.mxu0 %v4315
        %5801 = vmatpush.bf16.msra.mxu0 %v4283
        %5802 = vmatmul.bf16.gmra.mxu0 %v2461
        %v5803 = vpop.f32.mrf.mxu0
        %v5804 = vadd.f32 %v5790, %v5803
        %v5805 = vpop.f32.mrf.mxu0
        %v5806 = vadd.f32 %v5792, %v5805
        %5807 = vdwg.mxu0
        %5808 = vmatpush.bf16.msra.mxu0 %v4252
        %5809 = vmatpush.bf16.msra.mxu0 %v4220
        %5810 = vmatpush.bf16.msra.mxu0 %v4188
        %5811 = vmatpush.bf16.msra.mxu0 %v4156
        %5812 = vmatpush.bf16.msra.mxu0 %v4124
        %5813 = vmatpush.bf16.msra.mxu0 %v4092
        %5814 = vmatpush.bf16.msra.mxu0 %v4060
        %5815 = vmatpush.bf16.msra.mxu0 %v4028
        %5816 = vmatmul.bf16.gmra.mxu0 %v2460
        %v5817 = vpop.f32.mrf.mxu0
        %v5818 = vadd.f32 0.0, %v5817
        %v5819 = vpop.f32.mrf.mxu0
        %v5820 = vadd.f32 0.0, %v5819
        %5821 = vdwg.mxu0
        %5822 = vmatpush.bf16.msra.mxu0 %v4508
        %5823 = vmatpush.bf16.msra.mxu0 %v4476
        %5824 = vmatpush.bf16.msra.mxu0 %v4444
        %5825 = vmatpush.bf16.msra.mxu0 %v4412
        %5826 = vmatpush.bf16.msra.mxu0 %v4380
        %5827 = vmatpush.bf16.msra.mxu0 %v4348
        %5828 = vmatpush.bf16.msra.mxu0 %v4316
        %5829 = vmatpush.bf16.msra.mxu0 %v4284
        %5830 = vmatmul.bf16.gmra.mxu0 %v2461
        %v5831 = vpop.f32.mrf.mxu0
        %v5832 = vadd.f32 %v5818, %v5831
        %v5833 = vpop.f32.mrf.mxu0
        %v5834 = vadd.f32 %v5820, %v5833
        %5835 = vdwg.mxu0
        %5836 = vmatpush.bf16.msra.mxu0 %v4253
        %5837 = vmatpush.bf16.msra.mxu0 %v4221
        %5838 = vmatpush.bf16.msra.mxu0 %v4189
        %5839 = vmatpush.bf16.msra.mxu0 %v4157
        %5840 = vmatpush.bf16.msra.mxu0 %v4125
        %5841 = vmatpush.bf16.msra.mxu0 %v4093
        %5842 = vmatpush.bf16.msra.mxu0 %v4061
        %5843 = vmatpush.bf16.msra.mxu0 %v4029
        %5844 = vmatmul.bf16.gmra.mxu0 %v2460
        %v5845 = vpop.f32.mrf.mxu0
        %v5846 = vadd.f32 0.0, %v5845
        %v5847 = vpop.f32.mrf.mxu0
        %v5848 = vadd.f32 0.0, %v5847
        %5849 = vdwg.mxu0
        %5850 = vmatpush.bf16.msra.mxu0 %v4509
        %5851 = vmatpush.bf16.msra.mxu0 %v4477
        %5852 = vmatpush.bf16.msra.mxu0 %v4445
        %5853 = vmatpush.bf16.msra.mxu0 %v4413
        %5854 = vmatpush.bf16.msra.mxu0 %v4381
        %5855 = vmatpush.bf16.msra.mxu0 %v4349
        %5856 = vmatpush.bf16.msra.mxu0 %v4317
        %5857 = vmatpush.bf16.msra.mxu0 %v4285
        %5858 = vmatmul.bf16.gmra.mxu0 %v2461
        %v5859 = vpop.f32.mrf.mxu0
        %v5860 = vadd.f32 %v5846, %v5859
        %v5861 = vpop.f32.mrf.mxu0
        %v5862 = vadd.f32 %v5848, %v5861
        %5863 = vdwg.mxu0
        %5864 = vmatpush.bf16.msra.mxu0 %v4254
        %5865 = vmatpush.bf16.msra.mxu0 %v4222
        %5866 = vmatpush.bf16.msra.mxu0 %v4190
        %5867 = vmatpush.bf16.msra.mxu0 %v4158
        %5868 = vmatpush.bf16.msra.mxu0 %v4126
        %5869 = vmatpush.bf16.msra.mxu0 %v4094
        %5870 = vmatpush.bf16.msra.mxu0 %v4062
        %5871 = vmatpush.bf16.msra.mxu0 %v4030
        %5872 = vmatmul.bf16.gmra.mxu0 %v2460
        %v5873 = vpop.f32.mrf.mxu0
        %v5874 = vadd.f32 0.0, %v5873
        %v5875 = vpop.f32.mrf.mxu0
        %v5876 = vadd.f32 0.0, %v5875
        %5877 = vdwg.mxu0
        %5878 = vmatpush.bf16.msra.mxu0 %v4510
        %5879 = vmatpush.bf16.msra.mxu0 %v4478
        %5880 = vmatpush.bf16.msra.mxu0 %v4446
        %5881 = vmatpush.bf16.msra.mxu0 %v4414
        %5882 = vmatpush.bf16.msra.mxu0 %v4382
        %5883 = vmatpush.bf16.msra.mxu0 %v4350
        %5884 = vmatpush.bf16.msra.mxu0 %v4318
        %5885 = vmatpush.bf16.msra.mxu0 %v4286
        %5886 = vmatmul.bf16.gmra.mxu0 %v2461
        %v5887 = vpop.f32.mrf.mxu0
        %v5888 = vadd.f32 %v5874, %v5887
        %v5889 = vpop.f32.mrf.mxu0
        %v5890 = vadd.f32 %v5876, %v5889
        %5891 = vdwg.mxu0
        %5892 = vmatpush.bf16.msra.mxu0 %v4255
        %5893 = vmatpush.bf16.msra.mxu0 %v4223
        %5894 = vmatpush.bf16.msra.mxu0 %v4191
        %5895 = vmatpush.bf16.msra.mxu0 %v4159
        %5896 = vmatpush.bf16.msra.mxu0 %v4127
        %5897 = vmatpush.bf16.msra.mxu0 %v4095
        %5898 = vmatpush.bf16.msra.mxu0 %v4063
        %5899 = vmatpush.bf16.msra.mxu0 %v4031
        %5900 = vmatmul.bf16.gmra.mxu0 %v2460
        %v5901 = vpop.f32.mrf.mxu0
        %v5902 = vadd.f32 0.0, %v5901
        %v5903 = vpop.f32.mrf.mxu0
        %v5904 = vadd.f32 0.0, %v5903
        %5905 = vdwg.mxu0
        %5906 = vmatpush.bf16.msra.mxu0 %v4511
        %5907 = vmatpush.bf16.msra.mxu0 %v4479
        %5908 = vmatpush.bf16.msra.mxu0 %v4447
        %5909 = vmatpush.bf16.msra.mxu0 %v4415
        %5910 = vmatpush.bf16.msra.mxu0 %v4383
        %5911 = vmatpush.bf16.msra.mxu0 %v4351
        %5912 = vmatpush.bf16.msra.mxu0 %v4319
        %5913 = vmatpush.bf16.msra.mxu0 %v4287
        %5914 = vmatmul.bf16.gmra.mxu0 %v2461
        %v5915 = vpop.f32.mrf.mxu0
        %v5916 = vadd.f32 %v5902, %v5915
        %v5917 = vpop.f32.mrf.mxu0
        %v5918 = vadd.f32 %v5904, %v5917
        %5919 = vdwg.mxu0
        %5920 = vst [vmem:[%s351] sm:$0xff] %v5048
        %5921 = vst [vmem:[%s351 + $0x8] sm:$0xff] %v5076
        %5922 = vst [vmem:[%s351 + $0x10] sm:$0xff] %v5104
        %5923 = vst [vmem:[%s351 + $0x18] sm:$0xff] %v5132
        %5924 = vst [vmem:[%s351 + $0x20] sm:$0xff] %v5160
        %5925 = vst [vmem:[%s351 + $0x28] sm:$0xff] %v5188
        %5926 = vst [vmem:[%s351 + $0x30] sm:$0xff] %v5216
        %5927 = vst [vmem:[%s351 + $0x38] sm:$0xff] %v5244
        %5928 = vst [vmem:[%s351 + $0x40] sm:$0xff] %v5272
        %5929 = vst [vmem:[%s351 + $0x48] sm:$0xff] %v5300
        %5930 = vst [vmem:[%s351 + $0x50] sm:$0xff] %v5328
        %5931 = vst [vmem:[%s351 + $0x58] sm:$0xff] %v5356
        %5932 = vst [vmem:[%s351 + $0x60] sm:$0xff] %v5384
        %5933 = vst [vmem:[%s351 + $0x68] sm:$0xff] %v5412
        %5934 = vst [vmem:[%s351 + $0x70] sm:$0xff] %v5440
        %5935 = vst [vmem:[%s351 + $0x78] sm:$0xff] %v5468
        %5936 = vst [vmem:[%s351 + $0x80] sm:$0xff] %v5496
        %5937 = vst [vmem:[%s351 + $0x88] sm:$0xff] %v5524
        %5938 = vst [vmem:[%s351 + $0x90] sm:$0xff] %v5552
        %5939 = vst [vmem:[%s351 + $0x98] sm:$0xff] %v5580
        %5940 = vst [vmem:[%s351 + $0xa0] sm:$0xff] %v5608
        %5941 = vst [vmem:[%s351 + $0xa8] sm:$0xff] %v5636
        %5942 = vst [vmem:[%s351 + $0xb0] sm:$0xff] %v5664
        %5943 = vst [vmem:[%s351 + $0xb8] sm:$0xff] %v5692
        %5944 = vst [vmem:[%s351 + $0xc0] sm:$0xff] %v5720
        %5945 = vst [vmem:[%s351 + $0xc8] sm:$0xff] %v5748
        %5946 = vst [vmem:[%s351 + $0xd0] sm:$0xff] %v5776
        %5947 = vst [vmem:[%s351 + $0xd8] sm:$0xff] %v5804
        %5948 = vst [vmem:[%s351 + $0xe0] sm:$0xff] %v5832
        %5949 = vst [vmem:[%s351 + $0xe8] sm:$0xff] %v5860
        %5950 = vst [vmem:[%s351 + $0xf0] sm:$0xff] %v5888
        %5951 = vst [vmem:[%s351 + $0xf8] sm:$0xff] %v5916
        %5952 = vst [vmem:[%s351 + $0x100] sm:$0xff] %v5050
        %5953 = vst [vmem:[%s351 + $0x108] sm:$0xff] %v5078
        %5954 = vst [vmem:[%s351 + $0x110] sm:$0xff] %v5106
        %5955 = vst [vmem:[%s351 + $0x118] sm:$0xff] %v5134
        %5956 = vst [vmem:[%s351 + $0x120] sm:$0xff] %v5162
        %5957 = vst [vmem:[%s351 + $0x128] sm:$0xff] %v5190
        %5958 = vst [vmem:[%s351 + $0x130] sm:$0xff] %v5218
        %5959 = vst [vmem:[%s351 + $0x138] sm:$0xff] %v5246
        %5960 = vst [vmem:[%s351 + $0x140] sm:$0xff] %v5274
        %5961 = vst [vmem:[%s351 + $0x148] sm:$0xff] %v5302
        %5962 = vst [vmem:[%s351 + $0x150] sm:$0xff] %v5330
        %5963 = vst [vmem:[%s351 + $0x158] sm:$0xff] %v5358
        %5964 = vst [vmem:[%s351 + $0x160] sm:$0xff] %v5386
        %5965 = vst [vmem:[%s351 + $0x168] sm:$0xff] %v5414
        %5966 = vst [vmem:[%s351 + $0x170] sm:$0xff] %v5442
        %5967 = vst [vmem:[%s351 + $0x178] sm:$0xff] %v5470
        %5968 = vst [vmem:[%s351 + $0x180] sm:$0xff] %v5498
        %5969 = vst [vmem:[%s351 + $0x188] sm:$0xff] %v5526
        %5970 = vst [vmem:[%s351 + $0x190] sm:$0xff] %v5554
        %5971 = vst [vmem:[%s351 + $0x198] sm:$0xff] %v5582
        %5972 = vst [vmem:[%s351 + $0x1a0] sm:$0xff] %v5610
        %5973 = vst [vmem:[%s351 + $0x1a8] sm:$0xff] %v5638
        %5974 = vst [vmem:[%s351 + $0x1b0] sm:$0xff] %v5666
        %5975 = vst [vmem:[%s351 + $0x1b8] sm:$0xff] %v5694
        %5976 = vst [vmem:[%s351 + $0x1c0] sm:$0xff] %v5722
        %5977 = vst [vmem:[%s351 + $0x1c8] sm:$0xff] %v5750
        %5978 = vst [vmem:[%s351 + $0x1d0] sm:$0xff] %v5778
        %5979 = vst [vmem:[%s351 + $0x1d8] sm:$0xff] %v5806
        %5980 = vst [vmem:[%s351 + $0x1e0] sm:$0xff] %v5834
        %5981 = vst [vmem:[%s351 + $0x1e8] sm:$0xff] %v5862
        %5982 = vst [vmem:[%s351 + $0x1f0] sm:$0xff] %v5890
        %5983 = vst [vmem:[%s351 + $0x1f8] sm:$0xff] %v5918
        %s5984 = smul.u32 2, %s25
        %s5985 = smul.u32 32, %s26
        %p5986 = scmp.lt.s32.totalorder %s5984, 3
        %s5987 = scalar_select %p5986, %s5984, 3
        %p5988 = scmp.lt.s32.totalorder %s5985, 31
        %s5989 = scalar_select %p5988, %s5985, 31
        %s5990 = smul.addr %s5987, 32
        %s5991 = sadd.s32 %s5989, %s5990
        %s5992 = smul.addr %s5991, 8
        %s5993 = scalar_lea.vmem %s5, %s5992
        // Predicated region
        $region61: #{base_head.1} parent=39 // pred_check
          %p5994 = pneg %p173
        $region62: #{base_head.1} parent=39 // pred_check_branch
          %5996 = sbr.rel (%p5994) target = $region64
        $region63: #{base_head.1} parent=39 // pred_region
          %s5997 = smul.u32 2, %s25
          %s5998 = smul.u32 32, %s26
        $region64: #{base_head.1} parent=39 // pred_fallthru
          _
      $region40: #{base_head.1} parent=5 // pred_fallthru
        _
      %p5999 = scmp.le.s32.totalorder 2, %s16
      // Predicated region
      $region65: #{base_head.1} parent=5 // pred_check
        %p6000 = pneg %p5999
      $region66: #{base_head.1} parent=5 // pred_check_branch
        %6002 = sbr.rel (%p6000) target = $region68
      $region67: #{base_head.1} parent=5 // pred_region
        %s6003 = ssub.s32 %s16, 2
        // Predicated region
        $region69: #{base_head.1} parent=67 // pred_check
          %p6004 = pneg %p179
        $region70: #{base_head.1} parent=67 // pred_check_branch
          %6006 = sbr.rel (%p6004) target = $region72
        $region71: #{base_head.1} parent=67 // pred_region
          %s6007 = smul.u32 2, %s27
          %s6008 = smul.u32 32, %s28
          %p6009 = scmp.lt.s32.totalorder %s6007, 3
          %s6010 = scalar_select %p6009, %s6007, 3
          %p6011 = scmp.lt.s32.totalorder %s6008, 31
          %s6012 = scalar_select %p6011, %s6008, 31
          %s6013 = smul.addr %s6010, 32
          %s6014 = sadd.s32 %s6012, %s6013
          %s6015 = smul.addr %s6014, 8
          %s6016 = scalar_lea.vmem %s5, %s6015
        $region72: #{base_head.1} parent=67 // pred_fallthru
          _
      $region68: #{base_head.1} parent=5 // pred_fallthru
        _
    $region6: #{base_head.1} parent=1 // loop_footer
      %s20 = sadd.s32 1, %s16
    $region7: #{base_head.1} parent=1 // loop_footer_branch
      %15 = sbr.rel target = $region3
    $region8: #{base_head.1} parent=1 // loop_exit
      _
    %6017 = vsyncpa [#allocation4], 1
    %s6018 = scalar_lea.sflag [#allocation4], 1
    %6019 = vsyncpa %s6018, 1
    %6020 = vsyncpa [#allocation6], 1
    %s6021 = scalar_lea.sflag [#allocation6], 1
    %6022 = vsyncpa %s6021, 1
    %6023 = vsyncpa [#allocation9], 1

</llo_original>
